<compile_context>
chip_gen: v7x
topology: tpu7x:2x2x1
jax: 0.10.0
libtpu: 0.0.40
codegen_flags: <defaults>
</compile_context>

<pallas_src>
import functools
import numpy as np
import jax
import jax.numpy as jnp
from jax.experimental import pallas as pl
from jax.experimental.pallas import tpu as pltpu

SELU_ALPHA = 1.6732632423543772848170429916717
SELU_SCALE = 1.0507009873554804934193349852946


def _selu(z):
  # evaluate exp only on the non-positive branch to avoid overflow in where()
  return SELU_SCALE * jnp.where(
      z > 0.0, z, SELU_ALPHA * (jnp.exp(jnp.minimum(z, 0.0)) - 1.0))


# ----------------------------------------------------------------------------
# Pallas kernel
# ----------------------------------------------------------------------------
def dcrsm_kernel(x_ref,                       # (T, Bt, Hi*Wi) time-major frames
                 m1_ref, c1b_ref,             # conv1+pool1 as matmul: (Hi*Wi, 4*n1p), (1, 4*n1p)
                 m2_ref, c2b_ref,             # conv2+pool2 as matmul: (n1p, 4*n2p), (1, 4*n2p)
                 wlin_ref, blin_ref,          # CNN head Linear: (n2p, H), (1, H)
                 wall_ref, uall_ref,          # fused LSTM weights: (H, 4H) each, [i|f|g|o]
                 whead_ref, bhead_ref,        # fused DSM heads: (H, kp), (1, kp) [shapeg|scaleg|gate*1/temp|0pad]
                 post_ref,                    # (1, kp)  [shape_param | scale_param | 0pad] added after SELU
                 out_ref,                     # (T, Bt, kp)  [shape | scale | gate | pad]
                 *, T, Bt, H, k):
  n1p = m1_ref.shape[1] // 4        # 128-aligned pool-block widths
  n2p = m2_ref.shape[1] // 4
  kp = whead_ref.shape[1]
  rows = T * Bt

  # ---------------- CNN embedding (per frame, row-order independent) --------
  x = x_ref[...].reshape(rows, x_ref.shape[2])
  x = jnp.where(jnp.isnan(x), jnp.zeros_like(x), x)      # x[isnan(x)] = 0, ONCE
  y1 = jnp.dot(x, m1_ref[...], preferred_element_type=jnp.float32) + c1b_ref[...]
  y1 = jnp.clip(y1, 0.0, 6.0)                            # ReLU6
  # MaxPool2d(2,2) = max over the four 128-aligned window-position blocks.
  # Padded columns inside each block are exactly 0 (zero M1 cols + zero bias
  # + ReLU6), and the matching M2 rows are zero, so this is exact.
  p1 = jnp.maximum(jnp.maximum(y1[:, 0 * n1p:1 * n1p], y1[:, 1 * n1p:2 * n1p]),
                   jnp.maximum(y1[:, 2 * n1p:3 * n1p], y1[:, 3 * n1p:4 * n1p]))

  y2 = jnp.dot(p1, m2_ref[...], preferred_element_type=jnp.float32) + c2b_ref[...]
  y2 = jnp.clip(y2, 0.0, 6.0)                            # ReLU6
  p2 = jnp.maximum(jnp.maximum(y2[:, 0 * n2p:1 * n2p], y2[:, 1 * n2p:2 * n2p]),
                   jnp.maximum(y2[:, 2 * n2p:3 * n2p], y2[:, 3 * n2p:4 * n2p]))
  # Flatten + ReLU6 (no-op: p2 already in [0,6]), then Linear + ReLU6.
  feat = jnp.clip(
      jnp.dot(p2, wlin_ref[...], preferred_element_type=jnp.float32)
      + blin_ref[...], 0.0, 6.0)                         # (rows, H)

  # ---------------- LSTM: input projection hoisted out of the recurrence ----
  xp = jnp.dot(feat, wall_ref[...], preferred_element_type=jnp.float32)  # (rows, 4H)
  uall = uall_ref[...]
  # lane mask for the tanh gate (lanes [2H, 3H)); hoisted out of the loop.
  gl = jax.lax.broadcasted_iota(jnp.int32, (Bt, 4 * H), 1)
  is_g = jnp.logical_and(gl >= 2 * H, gl < 3 * H)
  h = jnp.zeros((Bt, H), jnp.float32)
  c = jnp.zeros((Bt, H), jnp.float32)
  hs = []
  for t in range(T):   # static unroll: T small/static; one fused (.,4H) matmul per step
    pre = xp[t * Bt:(t + 1) * Bt, :] + jnp.dot(
        h, uall, preferred_element_type=jnp.float32)     # (Bt, 4H)
    # one full-width tanh: sigmoid(z) = 0.5 + 0.5*tanh(0.5*z) on i|f|o lanes,
    # tanh(z) on the g lanes.
    th = jnp.tanh(jnp.where(is_g, pre, 0.5 * pre))
    act = jnp.where(is_g, th, 0.5 * th + 0.5)            # [sig(i)|sig(f)|tanh(g)|sig(o)]
    i_g = act[:, 0 * H:1 * H]
    f_g = act[:, 1 * H:2 * H]
    g_g = act[:, 2 * H:3 * H]
    o_g = act[:, 3 * H:4 * H]
    c = f_g * c + i_g * g_g
    h = o_g * jnp.tanh(c)
    hs.append(jnp.clip(h, 0.0, 6.0))                     # ReLU6(xrep)
  xr = jnp.concatenate(hs, axis=0)                       # (rows, H), time-major

  # ---------------- DSM heads: one bulk matmul + one lane-dense store -------
  z = jnp.dot(xr, whead_ref[...], preferred_element_type=jnp.float32) + bhead_ref[...]
  ss = _selu(z) + post_ref[...]                          # SELU(shapeg|scaleg) + (shape|scale)
  lane = jax.lax.broadcasted_iota(jnp.int32, (rows, kp), 1)
  out = jnp.where(lane < 2 * k, ss, z)                   # gate cols already have 1/temp folded in
  out_ref[...] = out.reshape(T, Bt, kp)                  # full-width unmasked store


# ----------------------------------------------------------------------------
# Wrapper
# ----------------------------------------------------------------------------
def _full_spec(a):
  nd = a.ndim
  return pl.BlockSpec(a.shape, lambda i, _nd=nd: (0,) * _nd)


def dcrsm_forward(x, kparams, k, bt=8):
  """Returns (shape, scale, gate) for ALL B*T rows in PyTorch (b-major) order."""
  B, T, HI, WI = x.shape
  H = kparams["wall"].shape[0]
  kp = kparams["whead"].shape[1]
  n1p = kparams["m1"].shape[1] // 4
  n2p = kparams["m2"].shape[1] // 4

  # Time-major frames + batch padded to a full sublane group / tile multiple:
  # the recurrence then reads contiguous, 8-row-aligned (Bt, .) blocks.
  b_pad = ((B + bt - 1) // bt) * bt
  x_tm = jnp.transpose(x, (1, 0, 2, 3)).reshape(T, B, HI * WI).astype(jnp.float32)
  if b_pad > B:
    x_tm = jnp.pad(x_tm, ((0, 0), (0, b_pad - B), (0, 0)))
  grid = (b_pad // bt,)

  names = ("m1", "c1b", "m2", "c2b", "wlin", "blin",
           "wall", "uall", "whead", "bhead", "post")
  weight_specs = [_full_spec(kparams[n]) for n in names]  # constant index_maps -> VMEM-resident

  rows_total = T * b_pad
  flops = 2 * rows_total * (HI * WI * 4 * n1p + n1p * 4 * n2p + n2p * H
                            + 2 * H * 4 * H + H * kp)
  transc = rows_total * (5 * H + kp)
  bytes_acc = 4 * (x_tm.size + sum(int(kparams[n].size) for n in names)
                   + rows_total * kp)

  out = pl.pallas_call(
      functools.partial(dcrsm_kernel, T=T, Bt=bt, H=H, k=k),
      out_shape=jax.ShapeDtypeStruct((T, b_pad, kp), jnp.float32),
      grid=grid,
      in_specs=[pl.BlockSpec((T, bt, HI * WI), lambda i: (0, i, 0))] + weight_specs,
      out_specs=pl.BlockSpec((T, bt, kp), lambda i: (0, i, 0)),
      compiler_params=pltpu.CompilerParams(dimension_semantics=("parallel",)),
      cost_estimate=pl.CostEstimate(flops=flops, transcendentals=transc,
                                    bytes_accessed=bytes_acc),
  )(x_tm, *[kparams[n] for n in names])

  # back to PyTorch row order (b*T + t), drop batch padding + lane padding
  out = out[:, :B, :].transpose(1, 0, 2).reshape(B * T, kp)
  return out[:, :k], out[:, k:2 * k], out[:, 2 * k:3 * k]


# ----------------------------------------------------------------------------
# Host-side parameter preparation
# ----------------------------------------------------------------------------
def _conv_pool_matmuls(w1, b1, w2, b2, HI, WI, lane=128):
  """Unroll (Conv2d 3x3 -> ReLU6 -> MaxPool2) x2 into dense matmul matrices.

  Column block p (of 4, each 128-aligned) of each matrix holds the conv output
  at 2x2-pool window position p, flattened channel-major (co, i2, j2) exactly
  like torch's Flatten, so MaxPool = elementwise max of the four blocks.
  M2's rows are padded to n1p (zero rows) so the pooled activations can stay
  lane-dense (padded y1/y2 columns are exactly 0: zero cols + zero bias + ReLU6).
  """
  w1 = np.asarray(w1, np.float32); b1 = np.asarray(b1, np.float32)
  w2 = np.asarray(w2, np.float32); b2 = np.asarray(b2, np.float32)
  C1, _, K1, _ = w1.shape
  C2, _, K2, _ = w2.shape
  H1, W1 = HI - K1 + 1, WI - K1 + 1
  P1h, P1w = H1 // 2, W1 // 2
  H2, W2 = P1h - K2 + 1, P1w - K2 + 1
  P2h, P2w = H2 // 2, W2 // 2
  n1, n2 = C1 * P1h * P1w, C2 * P2h * P2w
  n1p = ((n1 + lane - 1) // lane) * lane
  n2p = ((n2 + lane - 1) // lane) * lane

  M1 = np.zeros((HI * WI, 4 * n1p), np.float32)
  c1b = np.zeros((1, 4 * n1p), np.float32)
  M2 = np.zeros((n1p, 4 * n2p), np.float32)          # rows zero-padded to n1p
  c2b = np.zeros((1, 4 * n2p), np.float32)
  for pi in (0, 1):
    for pj in (0, 1):
      p = pi * 2 + pj
      for co in range(C1):
        for i2 in range(P1h):
          for j2 in range(P1w):
            col = p * n1p + co * (P1h * P1w) + i2 * P1w + j2
            r, c = 2 * i2 + pi, 2 * j2 + pj
            c1b[0, col] = b1[co]
            for di in range(K1):
              for dj in range(K1):
                M1[(r + di) * WI + (c + dj), col] += w1[co, 0, di, dj]
      for co in range(C2):
        for i2 in range(P2h):
          for j2 in range(P2w):
            col = p * n2p + co * (P2h * P2w) + i2 * P2w + j2
            r, c = 2 * i2 + pi, 2 * j2 + pj
            c2b[0, col] = b2[co]
            for ci in range(C1):
              for di in range(K2):
                for dj in range(K2):
                  M2[ci * (P1h * P1w) + (r + di) * P1w + (c + dj), col] += \
                      w2[co, ci, di, dj]
  return M1, c1b, M2, c2b, n2, n2p


def prepare_kernel_params(raw, HI, WI, temp):
  """One-time host-side fusing / padding of the raw PyTorch-style weights."""
  M1, c1b, M2, c2b, n2, n2p = _conv_pool_matmuls(raw["w1"], raw["b1"],
                                                 raw["w2"], raw["b2"], HI, WI)
  H = raw["whh"].shape[-1]
  k = raw["wsg"].shape[-1]
  kp = ((3 * k + 127) // 128) * 128

  # CNN head Linear: rows padded to the lane-dense pooled width n2p.
  wlin = np.zeros((n2p, H), np.float32)
  wlin[:n2, :] = np.asarray(raw["wlin"], np.float32)
  blin = np.asarray(raw["blin"], np.float32).reshape(1, H)

  wall = np.concatenate([np.asarray(raw["wih"][g], np.float32) for g in range(4)], axis=1)
  uall = np.concatenate([np.asarray(raw["whh"][g], np.float32) for g in range(4)], axis=1)

  # Fused, 128-lane-padded DSM heads; 1/temp folded into the (bias-free) gate.
  whead = np.zeros((H, kp), np.float32)
  whead[:, 0 * k:1 * k] = np.asarray(raw["wsg"], np.float32)
  whead[:, 1 * k:2 * k] = np.asarray(raw["wscg"], np.float32)
  whead[:, 2 * k:3 * k] = np.asarray(raw["wg"], np.float32) * (1.0 / float(temp))
  bhead = np.zeros((1, kp), np.float32)
  bhead[0, 0 * k:1 * k] = np.asarray(raw["bsg"], np.float32)
  bhead[0, 1 * k:2 * k] = np.asarray(raw["bscg"], np.float32)
  post = np.zeros((1, kp), np.float32)
  post[0, 0 * k:1 * k] = np.asarray(raw["shape_p"], np.float32)
  post[0, 1 * k:2 * k] = np.asarray(raw["scale_p"], np.float32)

  # TODO(synk): on v6e/v7x, storing m1/m2/wlin as bf16 (f32 accumulation) is
  # the main MXU-throughput lever, but it risks the rtol=1e-3 budget; kept f32.
  return dict(m1=jnp.asarray(M1), c1b=jnp.asarray(c1b),
              m2=jnp.asarray(M2), c2b=jnp.asarray(c2b),
              wlin=jnp.asarray(wlin), blin=jnp.asarray(blin),
              wall=jnp.asarray(wall), uall=jnp.asarray(uall),
              whead=jnp.asarray(whead), bhead=jnp.asarray(bhead),
              post=jnp.asarray(post))


def init_raw_params(HI, WI, H, k, key):
  """Deterministic synthetic parameters (PyTorch-style uniform init scales)."""
  ks = jax.random.split(key, 13)
  u = lambda kk, shp, s: jax.random.uniform(kk, shp, jnp.float32, -s, s)
  p1h, p1w = (HI - 2) // 2, (WI - 2) // 2
  p2h, p2w = (p1h - 2) // 2, (p1w - 2) // 2
  flat = 16 * p2h * p2w
  s1, s2 = 1.0 / np.sqrt(9.0), 1.0 / np.sqrt(6 * 9.0)
  sl, sh = 1.0 / np.sqrt(flat), 1.0 / np.sqrt(H)
  return dict(
      w1=u(ks[0], (6, 1, 3, 3), s1), b1=u(ks[1], (6,), s1),
      w2=u(ks[2], (16, 6, 3, 3), s2), b2=u(ks[3], (16,), s2),
      wlin=u(ks[4], (flat, H), sl), blin=u(ks[5], (H,), sl),
      wih=u(ks[6], (4, H, H), sh), whh=u(ks[7], (4, H, H), sh),   # gate order i,f,g,o
      wsg=u(ks[8], (H, k), sh), bsg=u(ks[9], (k,), sh),
      wscg=u(ks[10], (H, k), sh), bscg=u(ks[11], (k,), sh),
      wg=u(ks[12], (H, k), sh),
      shape_p=-jnp.ones((k,), jnp.float32),    # Weibull: -torch.ones(k)
      scale_p=-jnp.ones((k,), jnp.float32),
  )


# ----------------------------------------------------------------------------
# Pure-JAX reference (mirrors the PyTorch forward, no masking)
# ----------------------------------------------------------------------------
def _conv2d_ref(x, w, b):               # x: (N, C, Hi, Wi), w: (Co, C, K, K)
  N, C, Hi, Wi = x.shape
  Co, _, K, _ = w.shape
  Ho, Wo = Hi - K + 1, Wi - K + 1
  cols = []
  for ci in range(C):
    for di in range(K):
      for dj in range(K):
        cols.append(x[:, ci, di:di + Ho, dj:dj + Wo])
  patches = jnp.stack(cols, axis=-1).reshape(N * Ho * Wo, C * K * K)
  out = patches @ w.reshape(Co, C * K * K).T + b
  return out.reshape(N, Ho, Wo, Co).transpose(0, 3, 1, 2)


def _maxpool2_ref(x):                   # (N, C, H, W) -> (N, C, H//2, W//2)
  N, C, Hh, Ww = x.shape
  x = x[:, :, :(Hh // 2) * 2, :(Ww // 2) * 2]
  return x.reshape(N, C, Hh // 2, 2, Ww // 2, 2).max(axis=(3, 5))


def ref_forward(x, raw, temp):
  B, T, HI, WI = x.shape
  H = raw["whh"].shape[-1]
  xc = jnp.nan_to_num(x, nan=0.0).reshape(B * T, 1, HI, WI)
  y = _conv2d_ref(xc, raw["w1"], raw["b1"]); y = jnp.clip(y, 0.0, 6.0); y = _maxpool2_ref(y)
  y = _conv2d_ref(y, raw["w2"], raw["b2"]); y = jnp.clip(y, 0.0, 6.0); y = _maxpool2_ref(y)
  y = jnp.clip(y.reshape(B * T, -1), 0.0, 6.0)                     # Flatten + ReLU6
  feat = jnp.clip(y @ raw["wlin"] + raw["blin"], 0.0, 6.0).reshape(B, T, H)

  wi, wf, wg_, wo = raw["wih"]
  ui, uf, ug_, uo = raw["whh"]
  sig = lambda z: 1.0 / (1.0 + jnp.exp(-z))
  h = jnp.zeros((B, H), jnp.float32)
  c = jnp.zeros((B, H), jnp.float32)
  hs = []
  for t in range(T):
    xt = feat[:, t, :]
    i = sig(xt @ wi + h @ ui)
    f = sig(xt @ wf + h @ uf)
    g = jnp.tanh(xt @ wg_ + h @ ug_)
    o = sig(xt @ wo + h @ uo)
    c = f * c + i * g
    h = o * jnp.tanh(c)
    hs.append(h)
  xrep = jnp.clip(jnp.stack(hs, axis=1).reshape(B * T, H), 0.0, 6.0)
  return (_selu(xrep @ raw["wsg"] + raw["bsg"]) + raw["shape_p"],
          _selu(xrep @ raw["wscg"] + raw["bscg"]) + raw["scale_p"],
          (xrep @ raw["wg"]) / temp)


# ----------------------------------------------------------------------------
if __name__ == "__main__":
  B, T, HI, WI, H, K = 2, 8, 16, 16, 32, 4
  TEMP = 1000.0

  key = jax.random.PRNGKey(0)
  kx, kprm = jax.random.split(key)
  x = jax.random.normal(kx, (B, T, HI, WI), jnp.float32)
  # pad the last two timesteps of the second sequence with NaNs (ragged input)
  x = x.at[1, T - 2:, :, :].set(jnp.nan)

  raw = init_raw_params(HI, WI, H, K, kprm)
  kparams = prepare_kernel_params(raw, HI, WI, TEMP)

  shape_o, scale_o, gate_o = jax.block_until_ready(dcrsm_forward(x, kparams, K))

  # TODO(synk): xrep[inputmask] is a dynamic-shape boolean gather; kept in host
  # glue since Pallas/XLA kernels require static output shapes.
  mask = ~np.isnan(np.asarray(x)[:, :, 0, 0]).reshape(-1)
  shape_o = np.asarray(shape_o)[mask]
  scale_o = np.asarray(scale_o)[mask]
  gate_o = np.asarray(gate_o)[mask]

  with jax.default_matmul_precision("highest"):
    r_shape, r_scale, r_gate = ref_forward(x, raw, TEMP)
  r_shape = np.asarray(r_shape)[mask]
  r_scale = np.asarray(r_scale)[mask]
  r_gate = np.asarray(r_gate)[mask]

  assert shape_o.shape == (int(mask.sum()), K)
  np.testing.assert_allclose(shape_o, r_shape, rtol=1e-3, atol=2e-4)
  np.testing.assert_allclose(scale_o, r_scale, rtol=1e-3, atol=2e-4)
  np.testing.assert_allclose(gate_o, r_gate, rtol=1e-3, atol=1e-6)

  print("KERNEL_OK")
</pallas_src>

<mosaic_0001>
module attributes {stable_mosaic.version = 11 : i64} {
  func.func @dcrsm_kernel(%arg0: i32, %arg1: memref<8x8x256xf32, #tpu.memory_space<vmem>>, %arg2: memref<256x1536xf32, #tpu.memory_space<vmem>>, %arg3: memref<1x1536xf32, #tpu.memory_space<vmem>>, %arg4: memref<384x512xf32, #tpu.memory_space<vmem>>, %arg5: memref<1x512xf32, #tpu.memory_space<vmem>>, %arg6: memref<128x32xf32, #tpu.memory_space<vmem>>, %arg7: memref<1x32xf32, #tpu.memory_space<vmem>>, %arg8: memref<32x128xf32, #tpu.memory_space<vmem>>, %arg9: memref<32x128xf32, #tpu.memory_space<vmem>>, %arg10: memref<32x128xf32, #tpu.memory_space<vmem>>, %arg11: memref<1x128xf32, #tpu.memory_space<vmem>>, %arg12: memref<1x128xf32, #tpu.memory_space<vmem>>, %arg13: memref<8x8x128xf32, #tpu.memory_space<vmem>>) attributes {dimension_semantics = [#tpu.dimension_semantics<parallel>], iteration_bounds = array<i64: 1>, scalar_prefetch = 0 : i64, scratch_operands = 0 : i64, tpu.core_type = #tpu.core_type<tc>, window_params = [{transform_indices = @transform_0, window_bounds = array<i64: 8, 8, 256>}, {pipeline_mode = #tpu.pipeline_mode<synchronous>, transform_indices = @transform_1, window_bounds = array<i64: 256, 1536>}, {pipeline_mode = #tpu.pipeline_mode<synchronous>, transform_indices = @transform_2, window_bounds = array<i64: 1, 1536>}, {pipeline_mode = #tpu.pipeline_mode<synchronous>, transform_indices = @transform_3, window_bounds = array<i64: 384, 512>}, {pipeline_mode = #tpu.pipeline_mode<synchronous>, transform_indices = @transform_4, window_bounds = array<i64: 1, 512>}, {pipeline_mode = #tpu.pipeline_mode<synchronous>, transform_indices = @transform_5, window_bounds = array<i64: 128, 32>}, {pipeline_mode = #tpu.pipeline_mode<synchronous>, transform_indices = @transform_6, window_bounds = array<i64: 1, 32>}, {pipeline_mode = #tpu.pipeline_mode<synchronous>, transform_indices = @transform_7, window_bounds = array<i64: 32, 128>}, {pipeline_mode = #tpu.pipeline_mode<synchronous>, transform_indices = @transform_8, window_bounds = array<i64: 32, 128>}, {pipeline_mode = #tpu.pipeline_mode<synchronous>, transform_indices = @transform_9, window_bounds = array<i64: 32, 128>}, {pipeline_mode = #tpu.pipeline_mode<synchronous>, transform_indices = @transform_10, window_bounds = array<i64: 1, 128>}, {pipeline_mode = #tpu.pipeline_mode<synchronous>, transform_indices = @transform_11, window_bounds = array<i64: 1, 128>}, {transform_indices = @transform_12, window_bounds = array<i64: 8, 8, 128>}]} {
    %c0 = arith.constant 0 : index
    %c0_0 = arith.constant 0 : index
    %c0_1 = arith.constant 0 : index
    %0 = vector.load %arg1[%c0, %c0_0, %c0_1] : memref<8x8x256xf32, #tpu.memory_space<vmem>>, vector<8x8x256xf32>
    %1 = vector.shape_cast %0 : vector<8x8x256xf32> to vector<64x256xf32>
    %2 = arith.cmpf one, %1, %1 : vector<64x256xf32>
    %cst = arith.constant 0.000000e+00 : f32
    %3 = vector.broadcast %cst : f32 to vector<64x256xf32>
    %4 = arith.select %2, %3, %1 : vector<64x256xi1>, vector<64x256xf32>
    %c0_2 = arith.constant 0 : index
    %c0_3 = arith.constant 0 : index
    %5 = vector.load %arg2[%c0_2, %c0_3] : memref<256x1536xf32, #tpu.memory_space<vmem>>, vector<256x1536xf32>
    %cst_4 = arith.constant dense<0.000000e+00> : vector<64x1536xf32>
    %6 = tpu.matmul %4, %5, %cst_4 {dimension_numbers = #tpu.dot_dimension_numbers<[1], [0], [0], [1], [0, 0, 1, 1], [], []>} : vector<64x256xf32>, vector<256x1536xf32>, vector<64x1536xf32> -> vector<64x1536xf32>
    %c0_5 = arith.constant 0 : index
    %c0_6 = arith.constant 0 : index
    %7 = vector.load %arg3[%c0_5, %c0_6] : memref<1x1536xf32, #tpu.memory_space<vmem>>, vector<1x1536xf32>
    %8 = vector.broadcast %7 : vector<1x1536xf32> to vector<64x1536xf32>
    %9 = arith.addf %6, %8 : vector<64x1536xf32>
    %cst_7 = arith.constant 0.000000e+00 : f32
    %cst_8 = arith.constant 6.000000e+00 : f32
    %10 = vector.broadcast %cst_7 : f32 to vector<64x1536xf32>
    %11 = arith.maximumf %10, %9 : vector<64x1536xf32>
    %12 = vector.broadcast %cst_8 : f32 to vector<64x1536xf32>
    %13 = arith.minimumf %12, %11 : vector<64x1536xf32>
    %14 = vector.extract_strided_slice %13 {offsets = [0, 0], sizes = [64, 384], strides = [1, 1]} : vector<64x1536xf32> to vector<64x384xf32>
    %15 = vector.extract_strided_slice %13 {offsets = [0, 384], sizes = [64, 384], strides = [1, 1]} : vector<64x1536xf32> to vector<64x384xf32>
    %16 = arith.maximumf %14, %15 : vector<64x384xf32>
    %17 = vector.extract_strided_slice %13 {offsets = [0, 768], sizes = [64, 384], strides = [1, 1]} : vector<64x1536xf32> to vector<64x384xf32>
    %18 = vector.extract_strided_slice %13 {offsets = [0, 1152], sizes = [64, 384], strides = [1, 1]} : vector<64x1536xf32> to vector<64x384xf32>
    %19 = arith.maximumf %17, %18 : vector<64x384xf32>
    %20 = arith.maximumf %16, %19 : vector<64x384xf32>
    %c0_9 = arith.constant 0 : index
    %c0_10 = arith.constant 0 : index
    %21 = vector.load %arg4[%c0_9, %c0_10] : memref<384x512xf32, #tpu.memory_space<vmem>>, vector<384x512xf32>
    %cst_11 = arith.constant dense<0.000000e+00> : vector<64x512xf32>
    %22 = tpu.matmul %20, %21, %cst_11 {dimension_numbers = #tpu.dot_dimension_numbers<[1], [0], [0], [1], [0, 0, 1, 1], [], []>} : vector<64x384xf32>, vector<384x512xf32>, vector<64x512xf32> -> vector<64x512xf32>
    %c0_12 = arith.constant 0 : index
    %c0_13 = arith.constant 0 : index
    %23 = vector.load %arg5[%c0_12, %c0_13] : memref<1x512xf32, #tpu.memory_space<vmem>>, vector<1x512xf32>
    %24 = vector.broadcast %23 : vector<1x512xf32> to vector<64x512xf32>
    %25 = arith.addf %22, %24 : vector<64x512xf32>
    %cst_14 = arith.constant 0.000000e+00 : f32
    %cst_15 = arith.constant 6.000000e+00 : f32
    %26 = vector.broadcast %cst_14 : f32 to vector<64x512xf32>
    %27 = arith.maximumf %26, %25 : vector<64x512xf32>
    %28 = vector.broadcast %cst_15 : f32 to vector<64x512xf32>
    %29 = arith.minimumf %28, %27 : vector<64x512xf32>
    %30 = vector.extract_strided_slice %29 {offsets = [0, 0], sizes = [64, 128], strides = [1, 1]} : vector<64x512xf32> to vector<64x128xf32>
    %31 = vector.extract_strided_slice %29 {offsets = [0, 128], sizes = [64, 128], strides = [1, 1]} : vector<64x512xf32> to vector<64x128xf32>
    %32 = arith.maximumf %30, %31 : vector<64x128xf32>
    %33 = vector.extract_strided_slice %29 {offsets = [0, 256], sizes = [64, 128], strides = [1, 1]} : vector<64x512xf32> to vector<64x128xf32>
    %34 = vector.extract_strided_slice %29 {offsets = [0, 384], sizes = [64, 128], strides = [1, 1]} : vector<64x512xf32> to vector<64x128xf32>
    %35 = arith.maximumf %33, %34 : vector<64x128xf32>
    %36 = arith.maximumf %32, %35 : vector<64x128xf32>
    %c0_16 = arith.constant 0 : index
    %c0_17 = arith.constant 0 : index
    %37 = vector.load %arg6[%c0_16, %c0_17] : memref<128x32xf32, #tpu.memory_space<vmem>>, vector<128x32xf32>
    %cst_18 = arith.constant dense<0.000000e+00> : vector<64x32xf32>
    %38 = tpu.matmul %36, %37, %cst_18 {dimension_numbers = #tpu.dot_dimension_numbers<[1], [0], [0], [1], [0, 0, 1, 1], [], []>} : vector<64x128xf32>, vector<128x32xf32>, vector<64x32xf32> -> vector<64x32xf32>
    %c0_19 = arith.constant 0 : index
    %c0_20 = arith.constant 0 : index
    %39 = vector.load %arg7[%c0_19, %c0_20] : memref<1x32xf32, #tpu.memory_space<vmem>>, vector<1x32xf32>
    %40 = vector.broadcast %39 : vector<1x32xf32> to vector<64x32xf32>
    %41 = arith.addf %38, %40 : vector<64x32xf32>
    %cst_21 = arith.constant 0.000000e+00 : f32
    %cst_22 = arith.constant 6.000000e+00 : f32
    %42 = vector.broadcast %cst_21 : f32 to vector<64x32xf32>
    %43 = arith.maximumf %42, %41 : vector<64x32xf32>
    %44 = vector.broadcast %cst_22 : f32 to vector<64x32xf32>
    %45 = arith.minimumf %44, %43 : vector<64x32xf32>
    %c0_23 = arith.constant 0 : index
    %c0_24 = arith.constant 0 : index
    %46 = vector.load %arg8[%c0_23, %c0_24] : memref<32x128xf32, #tpu.memory_space<vmem>>, vector<32x128xf32>
    %cst_25 = arith.constant dense<0.000000e+00> : vector<64x128xf32>
    %47 = tpu.matmul %45, %46, %cst_25 {dimension_numbers = #tpu.dot_dimension_numbers<[1], [0], [0], [1], [0, 0, 1, 1], [], []>} : vector<64x32xf32>, vector<32x128xf32>, vector<64x128xf32> -> vector<64x128xf32>
    %c0_26 = arith.constant 0 : index
    %c0_27 = arith.constant 0 : index
    %48 = vector.load %arg9[%c0_26, %c0_27] : memref<32x128xf32, #tpu.memory_space<vmem>>, vector<32x128xf32>
    %49 = tpu.iota {dimensions = array<i32: 1>} : vector<8x128xi32>
    %c64_i32 = arith.constant 64 : i32
    %50 = vector.broadcast %c64_i32 : i32 to vector<8x128xi32>
    %51 = arith.cmpi sge, %49, %50 : vector<8x128xi32>
    %c96_i32 = arith.constant 96 : i32
    %52 = vector.broadcast %c96_i32 : i32 to vector<8x128xi32>
    %53 = arith.cmpi slt, %49, %52 : vector<8x128xi32>
    %54 = arith.andi %51, %53 : vector<8x128xi1>
    %cst_28 = arith.constant 0.000000e+00 : f32
    %55 = vector.broadcast %cst_28 : f32 to vector<8x32xf32>
    %cst_29 = arith.constant 0.000000e+00 : f32
    %56 = vector.broadcast %cst_29 : f32 to vector<8x32xf32>
    %57 = vector.extract_strided_slice %47 {offsets = [0, 0], sizes = [8, 128], strides = [1, 1]} : vector<64x128xf32> to vector<8x128xf32>
    %cst_30 = arith.constant dense<0.000000e+00> : vector<8x128xf32>
    %58 = tpu.matmul %55, %48, %cst_30 {dimension_numbers = #tpu.dot_dimension_numbers<[1], [0], [0], [1], [0, 0, 1, 1], [], []>} : vector<8x32xf32>, vector<32x128xf32>, vector<8x128xf32> -> vector<8x128xf32>
    %59 = arith.addf %57, %58 : vector<8x128xf32>
    %cst_31 = arith.constant 5.000000e-01 : f32
    %60 = vector.broadcast %cst_31 : f32 to vector<8x128xf32>
    %61 = arith.mulf %60, %59 : vector<8x128xf32>
    %62 = arith.select %54, %59, %61 : vector<8x128xi1>, vector<8x128xf32>
    %63 = math.tanh %62 : vector<8x128xf32>
    %cst_32 = arith.constant 5.000000e-01 : f32
    %64 = vector.broadcast %cst_32 : f32 to vector<8x128xf32>
    %65 = arith.mulf %64, %63 : vector<8x128xf32>
    %cst_33 = arith.constant 5.000000e-01 : f32
    %66 = vector.broadcast %cst_33 : f32 to vector<8x128xf32>
    %67 = arith.addf %65, %66 : vector<8x128xf32>
    %68 = arith.select %54, %63, %67 : vector<8x128xi1>, vector<8x128xf32>
    %69 = vector.extract_strided_slice %68 {offsets = [0, 0], sizes = [8, 32], strides = [1, 1]} : vector<8x128xf32> to vector<8x32xf32>
    %70 = vector.extract_strided_slice %68 {offsets = [0, 32], sizes = [8, 32], strides = [1, 1]} : vector<8x128xf32> to vector<8x32xf32>
    %71 = vector.extract_strided_slice %68 {offsets = [0, 64], sizes = [8, 32], strides = [1, 1]} : vector<8x128xf32> to vector<8x32xf32>
    %72 = vector.extract_strided_slice %68 {offsets = [0, 96], sizes = [8, 32], strides = [1, 1]} : vector<8x128xf32> to vector<8x32xf32>
    %73 = arith.mulf %70, %56 : vector<8x32xf32>
    %74 = arith.mulf %69, %71 : vector<8x32xf32>
    %75 = arith.addf %73, %74 : vector<8x32xf32>
    %76 = math.tanh %75 : vector<8x32xf32>
    %77 = arith.mulf %72, %76 : vector<8x32xf32>
    %cst_34 = arith.constant 0.000000e+00 : f32
    %cst_35 = arith.constant 6.000000e+00 : f32
    %78 = vector.broadcast %cst_34 : f32 to vector<8x32xf32>
    %79 = arith.maximumf %78, %77 : vector<8x32xf32>
    %80 = vector.broadcast %cst_35 : f32 to vector<8x32xf32>
    %81 = arith.minimumf %80, %79 : vector<8x32xf32>
    %82 = vector.extract_strided_slice %47 {offsets = [8, 0], sizes = [8, 128], strides = [1, 1]} : vector<64x128xf32> to vector<8x128xf32>
    %cst_36 = arith.constant dense<0.000000e+00> : vector<8x128xf32>
    %83 = tpu.matmul %77, %48, %cst_36 {dimension_numbers = #tpu.dot_dimension_numbers<[1], [0], [0], [1], [0, 0, 1, 1], [], []>} : vector<8x32xf32>, vector<32x128xf32>, vector<8x128xf32> -> vector<8x128xf32>
    %84 = arith.addf %82, %83 : vector<8x128xf32>
    %cst_37 = arith.constant 5.000000e-01 : f32
    %85 = vector.broadcast %cst_37 : f32 to vector<8x128xf32>
    %86 = arith.mulf %85, %84 : vector<8x128xf32>
    %87 = arith.select %54, %84, %86 : vector<8x128xi1>, vector<8x128xf32>
    %88 = math.tanh %87 : vector<8x128xf32>
    %cst_38 = arith.constant 5.000000e-01 : f32
    %89 = vector.broadcast %cst_38 : f32 to vector<8x128xf32>
    %90 = arith.mulf %89, %88 : vector<8x128xf32>
    %cst_39 = arith.constant 5.000000e-01 : f32
    %91 = vector.broadcast %cst_39 : f32 to vector<8x128xf32>
    %92 = arith.addf %90, %91 : vector<8x128xf32>
    %93 = arith.select %54, %88, %92 : vector<8x128xi1>, vector<8x128xf32>
    %94 = vector.extract_strided_slice %93 {offsets = [0, 0], sizes = [8, 32], strides = [1, 1]} : vector<8x128xf32> to vector<8x32xf32>
    %95 = vector.extract_strided_slice %93 {offsets = [0, 32], sizes = [8, 32], strides = [1, 1]} : vector<8x128xf32> to vector<8x32xf32>
    %96 = vector.extract_strided_slice %93 {offsets = [0, 64], sizes = [8, 32], strides = [1, 1]} : vector<8x128xf32> to vector<8x32xf32>
    %97 = vector.extract_strided_slice %93 {offsets = [0, 96], sizes = [8, 32], strides = [1, 1]} : vector<8x128xf32> to vector<8x32xf32>
    %98 = arith.mulf %95, %75 : vector<8x32xf32>
    %99 = arith.mulf %94, %96 : vector<8x32xf32>
    %100 = arith.addf %98, %99 : vector<8x32xf32>
    %101 = math.tanh %100 : vector<8x32xf32>
    %102 = arith.mulf %97, %101 : vector<8x32xf32>
    %cst_40 = arith.constant 0.000000e+00 : f32
    %cst_41 = arith.constant 6.000000e+00 : f32
    %103 = vector.broadcast %cst_40 : f32 to vector<8x32xf32>
    %104 = arith.maximumf %103, %102 : vector<8x32xf32>
    %105 = vector.broadcast %cst_41 : f32 to vector<8x32xf32>
    %106 = arith.minimumf %105, %104 : vector<8x32xf32>
    %107 = vector.extract_strided_slice %47 {offsets = [16, 0], sizes = [8, 128], strides = [1, 1]} : vector<64x128xf32> to vector<8x128xf32>
    %cst_42 = arith.constant dense<0.000000e+00> : vector<8x128xf32>
    %108 = tpu.matmul %102, %48, %cst_42 {dimension_numbers = #tpu.dot_dimension_numbers<[1], [0], [0], [1], [0, 0, 1, 1], [], []>} : vector<8x32xf32>, vector<32x128xf32>, vector<8x128xf32> -> vector<8x128xf32>
    %109 = arith.addf %107, %108 : vector<8x128xf32>
    %cst_43 = arith.constant 5.000000e-01 : f32
    %110 = vector.broadcast %cst_43 : f32 to vector<8x128xf32>
    %111 = arith.mulf %110, %109 : vector<8x128xf32>
    %112 = arith.select %54, %109, %111 : vector<8x128xi1>, vector<8x128xf32>
    %113 = math.tanh %112 : vector<8x128xf32>
    %cst_44 = arith.constant 5.000000e-01 : f32
    %114 = vector.broadcast %cst_44 : f32 to vector<8x128xf32>
    %115 = arith.mulf %114, %113 : vector<8x128xf32>
    %cst_45 = arith.constant 5.000000e-01 : f32
    %116 = vector.broadcast %cst_45 : f32 to vector<8x128xf32>
    %117 = arith.addf %115, %116 : vector<8x128xf32>
    %118 = arith.select %54, %113, %117 : vector<8x128xi1>, vector<8x128xf32>
    %119 = vector.extract_strided_slice %118 {offsets = [0, 0], sizes = [8, 32], strides = [1, 1]} : vector<8x128xf32> to vector<8x32xf32>
    %120 = vector.extract_strided_slice %118 {offsets = [0, 32], sizes = [8, 32], strides = [1, 1]} : vector<8x128xf32> to vector<8x32xf32>
    %121 = vector.extract_strided_slice %118 {offsets = [0, 64], sizes = [8, 32], strides = [1, 1]} : vector<8x128xf32> to vector<8x32xf32>
    %122 = vector.extract_strided_slice %118 {offsets = [0, 96], sizes = [8, 32], strides = [1, 1]} : vector<8x128xf32> to vector<8x32xf32>
    %123 = arith.mulf %120, %100 : vector<8x32xf32>
    %124 = arith.mulf %119, %121 : vector<8x32xf32>
    %125 = arith.addf %123, %124 : vector<8x32xf32>
    %126 = math.tanh %125 : vector<8x32xf32>
    %127 = arith.mulf %122, %126 : vector<8x32xf32>
    %cst_46 = arith.constant 0.000000e+00 : f32
    %cst_47 = arith.constant 6.000000e+00 : f32
    %128 = vector.broadcast %cst_46 : f32 to vector<8x32xf32>
    %129 = arith.maximumf %128, %127 : vector<8x32xf32>
    %130 = vector.broadcast %cst_47 : f32 to vector<8x32xf32>
    %131 = arith.minimumf %130, %129 : vector<8x32xf32>
    %132 = vector.extract_strided_slice %47 {offsets = [24, 0], sizes = [8, 128], strides = [1, 1]} : vector<64x128xf32> to vector<8x128xf32>
    %cst_48 = arith.constant dense<0.000000e+00> : vector<8x128xf32>
    %133 = tpu.matmul %127, %48, %cst_48 {dimension_numbers = #tpu.dot_dimension_numbers<[1], [0], [0], [1], [0, 0, 1, 1], [], []>} : vector<8x32xf32>, vector<32x128xf32>, vector<8x128xf32> -> vector<8x128xf32>
    %134 = arith.addf %132, %133 : vector<8x128xf32>
    %cst_49 = arith.constant 5.000000e-01 : f32
    %135 = vector.broadcast %cst_49 : f32 to vector<8x128xf32>
    %136 = arith.mulf %135, %134 : vector<8x128xf32>
    %137 = arith.select %54, %134, %136 : vector<8x128xi1>, vector<8x128xf32>
    %138 = math.tanh %137 : vector<8x128xf32>
    %cst_50 = arith.constant 5.000000e-01 : f32
    %139 = vector.broadcast %cst_50 : f32 to vector<8x128xf32>
    %140 = arith.mulf %139, %138 : vector<8x128xf32>
    %cst_51 = arith.constant 5.000000e-01 : f32
    %141 = vector.broadcast %cst_51 : f32 to vector<8x128xf32>
    %142 = arith.addf %140, %141 : vector<8x128xf32>
    %143 = arith.select %54, %138, %142 : vector<8x128xi1>, vector<8x128xf32>
    %144 = vector.extract_strided_slice %143 {offsets = [0, 0], sizes = [8, 32], strides = [1, 1]} : vector<8x128xf32> to vector<8x32xf32>
    %145 = vector.extract_strided_slice %143 {offsets = [0, 32], sizes = [8, 32], strides = [1, 1]} : vector<8x128xf32> to vector<8x32xf32>
    %146 = vector.extract_strided_slice %143 {offsets = [0, 64], sizes = [8, 32], strides = [1, 1]} : vector<8x128xf32> to vector<8x32xf32>
    %147 = vector.extract_strided_slice %143 {offsets = [0, 96], sizes = [8, 32], strides = [1, 1]} : vector<8x128xf32> to vector<8x32xf32>
    %148 = arith.mulf %145, %125 : vector<8x32xf32>
    %149 = arith.mulf %144, %146 : vector<8x32xf32>
    %150 = arith.addf %148, %149 : vector<8x32xf32>
    %151 = math.tanh %150 : vector<8x32xf32>
    %152 = arith.mulf %147, %151 : vector<8x32xf32>
    %cst_52 = arith.constant 0.000000e+00 : f32
    %cst_53 = arith.constant 6.000000e+00 : f32
    %153 = vector.broadcast %cst_52 : f32 to vector<8x32xf32>
    %154 = arith.maximumf %153, %152 : vector<8x32xf32>
    %155 = vector.broadcast %cst_53 : f32 to vector<8x32xf32>
    %156 = arith.minimumf %155, %154 : vector<8x32xf32>
    %157 = vector.extract_strided_slice %47 {offsets = [32, 0], sizes = [8, 128], strides = [1, 1]} : vector<64x128xf32> to vector<8x128xf32>
    %cst_54 = arith.constant dense<0.000000e+00> : vector<8x128xf32>
    %158 = tpu.matmul %152, %48, %cst_54 {dimension_numbers = #tpu.dot_dimension_numbers<[1], [0], [0], [1], [0, 0, 1, 1], [], []>} : vector<8x32xf32>, vector<32x128xf32>, vector<8x128xf32> -> vector<8x128xf32>
    %159 = arith.addf %157, %158 : vector<8x128xf32>
    %cst_55 = arith.constant 5.000000e-01 : f32
    %160 = vector.broadcast %cst_55 : f32 to vector<8x128xf32>
    %161 = arith.mulf %160, %159 : vector<8x128xf32>
    %162 = arith.select %54, %159, %161 : vector<8x128xi1>, vector<8x128xf32>
    %163 = math.tanh %162 : vector<8x128xf32>
    %cst_56 = arith.constant 5.000000e-01 : f32
    %164 = vector.broadcast %cst_56 : f32 to vector<8x128xf32>
    %165 = arith.mulf %164, %163 : vector<8x128xf32>
    %cst_57 = arith.constant 5.000000e-01 : f32
    %166 = vector.broadcast %cst_57 : f32 to vector<8x128xf32>
    %167 = arith.addf %165, %166 : vector<8x128xf32>
    %168 = arith.select %54, %163, %167 : vector<8x128xi1>, vector<8x128xf32>
    %169 = vector.extract_strided_slice %168 {offsets = [0, 0], sizes = [8, 32], strides = [1, 1]} : vector<8x128xf32> to vector<8x32xf32>
    %170 = vector.extract_strided_slice %168 {offsets = [0, 32], sizes = [8, 32], strides = [1, 1]} : vector<8x128xf32> to vector<8x32xf32>
    %171 = vector.extract_strided_slice %168 {offsets = [0, 64], sizes = [8, 32], strides = [1, 1]} : vector<8x128xf32> to vector<8x32xf32>
    %172 = vector.extract_strided_slice %168 {offsets = [0, 96], sizes = [8, 32], strides = [1, 1]} : vector<8x128xf32> to vector<8x32xf32>
    %173 = arith.mulf %170, %150 : vector<8x32xf32>
    %174 = arith.mulf %169, %171 : vector<8x32xf32>
    %175 = arith.addf %173, %174 : vector<8x32xf32>
    %176 = math.tanh %175 : vector<8x32xf32>
    %177 = arith.mulf %172, %176 : vector<8x32xf32>
    %cst_58 = arith.constant 0.000000e+00 : f32
    %cst_59 = arith.constant 6.000000e+00 : f32
    %178 = vector.broadcast %cst_58 : f32 to vector<8x32xf32>
    %179 = arith.maximumf %178, %177 : vector<8x32xf32>
    %180 = vector.broadcast %cst_59 : f32 to vector<8x32xf32>
    %181 = arith.minimumf %180, %179 : vector<8x32xf32>
    %182 = vector.extract_strided_slice %47 {offsets = [40, 0], sizes = [8, 128], strides = [1, 1]} : vector<64x128xf32> to vector<8x128xf32>
    %cst_60 = arith.constant dense<0.000000e+00> : vector<8x128xf32>
    %183 = tpu.matmul %177, %48, %cst_60 {dimension_numbers = #tpu.dot_dimension_numbers<[1], [0], [0], [1], [0, 0, 1, 1], [], []>} : vector<8x32xf32>, vector<32x128xf32>, vector<8x128xf32> -> vector<8x128xf32>
    %184 = arith.addf %182, %183 : vector<8x128xf32>
    %cst_61 = arith.constant 5.000000e-01 : f32
    %185 = vector.broadcast %cst_61 : f32 to vector<8x128xf32>
    %186 = arith.mulf %185, %184 : vector<8x128xf32>
    %187 = arith.select %54, %184, %186 : vector<8x128xi1>, vector<8x128xf32>
    %188 = math.tanh %187 : vector<8x128xf32>
    %cst_62 = arith.constant 5.000000e-01 : f32
    %189 = vector.broadcast %cst_62 : f32 to vector<8x128xf32>
    %190 = arith.mulf %189, %188 : vector<8x128xf32>
    %cst_63 = arith.constant 5.000000e-01 : f32
    %191 = vector.broadcast %cst_63 : f32 to vector<8x128xf32>
    %192 = arith.addf %190, %191 : vector<8x128xf32>
    %193 = arith.select %54, %188, %192 : vector<8x128xi1>, vector<8x128xf32>
    %194 = vector.extract_strided_slice %193 {offsets = [0, 0], sizes = [8, 32], strides = [1, 1]} : vector<8x128xf32> to vector<8x32xf32>
    %195 = vector.extract_strided_slice %193 {offsets = [0, 32], sizes = [8, 32], strides = [1, 1]} : vector<8x128xf32> to vector<8x32xf32>
    %196 = vector.extract_strided_slice %193 {offsets = [0, 64], sizes = [8, 32], strides = [1, 1]} : vector<8x128xf32> to vector<8x32xf32>
    %197 = vector.extract_strided_slice %193 {offsets = [0, 96], sizes = [8, 32], strides = [1, 1]} : vector<8x128xf32> to vector<8x32xf32>
    %198 = arith.mulf %195, %175 : vector<8x32xf32>
    %199 = arith.mulf %194, %196 : vector<8x32xf32>
    %200 = arith.addf %198, %199 : vector<8x32xf32>
    %201 = math.tanh %200 : vector<8x32xf32>
    %202 = arith.mulf %197, %201 : vector<8x32xf32>
    %cst_64 = arith.constant 0.000000e+00 : f32
    %cst_65 = arith.constant 6.000000e+00 : f32
    %203 = vector.broadcast %cst_64 : f32 to vector<8x32xf32>
    %204 = arith.maximumf %203, %202 : vector<8x32xf32>
    %205 = vector.broadcast %cst_65 : f32 to vector<8x32xf32>
    %206 = arith.minimumf %205, %204 : vector<8x32xf32>
    %207 = vector.extract_strided_slice %47 {offsets = [48, 0], sizes = [8, 128], strides = [1, 1]} : vector<64x128xf32> to vector<8x128xf32>
    %cst_66 = arith.constant dense<0.000000e+00> : vector<8x128xf32>
    %208 = tpu.matmul %202, %48, %cst_66 {dimension_numbers = #tpu.dot_dimension_numbers<[1], [0], [0], [1], [0, 0, 1, 1], [], []>} : vector<8x32xf32>, vector<32x128xf32>, vector<8x128xf32> -> vector<8x128xf32>
    %209 = arith.addf %207, %208 : vector<8x128xf32>
    %cst_67 = arith.constant 5.000000e-01 : f32
    %210 = vector.broadcast %cst_67 : f32 to vector<8x128xf32>
    %211 = arith.mulf %210, %209 : vector<8x128xf32>
    %212 = arith.select %54, %209, %211 : vector<8x128xi1>, vector<8x128xf32>
    %213 = math.tanh %212 : vector<8x128xf32>
    %cst_68 = arith.constant 5.000000e-01 : f32
    %214 = vector.broadcast %cst_68 : f32 to vector<8x128xf32>
    %215 = arith.mulf %214, %213 : vector<8x128xf32>
    %cst_69 = arith.constant 5.000000e-01 : f32
    %216 = vector.broadcast %cst_69 : f32 to vector<8x128xf32>
    %217 = arith.addf %215, %216 : vector<8x128xf32>
    %218 = arith.select %54, %213, %217 : vector<8x128xi1>, vector<8x128xf32>
    %219 = vector.extract_strided_slice %218 {offsets = [0, 0], sizes = [8, 32], strides = [1, 1]} : vector<8x128xf32> to vector<8x32xf32>
    %220 = vector.extract_strided_slice %218 {offsets = [0, 32], sizes = [8, 32], strides = [1, 1]} : vector<8x128xf32> to vector<8x32xf32>
    %221 = vector.extract_strided_slice %218 {offsets = [0, 64], sizes = [8, 32], strides = [1, 1]} : vector<8x128xf32> to vector<8x32xf32>
    %222 = vector.extract_strided_slice %218 {offsets = [0, 96], sizes = [8, 32], strides = [1, 1]} : vector<8x128xf32> to vector<8x32xf32>
    %223 = arith.mulf %220, %200 : vector<8x32xf32>
    %224 = arith.mulf %219, %221 : vector<8x32xf32>
    %225 = arith.addf %223, %224 : vector<8x32xf32>
    %226 = math.tanh %225 : vector<8x32xf32>
    %227 = arith.mulf %222, %226 : vector<8x32xf32>
    %cst_70 = arith.constant 0.000000e+00 : f32
    %cst_71 = arith.constant 6.000000e+00 : f32
    %228 = vector.broadcast %cst_70 : f32 to vector<8x32xf32>
    %229 = arith.maximumf %228, %227 : vector<8x32xf32>
    %230 = vector.broadcast %cst_71 : f32 to vector<8x32xf32>
    %231 = arith.minimumf %230, %229 : vector<8x32xf32>
    %232 = vector.extract_strided_slice %47 {offsets = [56, 0], sizes = [8, 128], strides = [1, 1]} : vector<64x128xf32> to vector<8x128xf32>
    %cst_72 = arith.constant dense<0.000000e+00> : vector<8x128xf32>
    %233 = tpu.matmul %227, %48, %cst_72 {dimension_numbers = #tpu.dot_dimension_numbers<[1], [0], [0], [1], [0, 0, 1, 1], [], []>} : vector<8x32xf32>, vector<32x128xf32>, vector<8x128xf32> -> vector<8x128xf32>
    %234 = arith.addf %232, %233 : vector<8x128xf32>
    %cst_73 = arith.constant 5.000000e-01 : f32
    %235 = vector.broadcast %cst_73 : f32 to vector<8x128xf32>
    %236 = arith.mulf %235, %234 : vector<8x128xf32>
    %237 = arith.select %54, %234, %236 : vector<8x128xi1>, vector<8x128xf32>
    %238 = math.tanh %237 : vector<8x128xf32>
    %cst_74 = arith.constant 5.000000e-01 : f32
    %239 = vector.broadcast %cst_74 : f32 to vector<8x128xf32>
    %240 = arith.mulf %239, %238 : vector<8x128xf32>
    %cst_75 = arith.constant 5.000000e-01 : f32
    %241 = vector.broadcast %cst_75 : f32 to vector<8x128xf32>
    %242 = arith.addf %240, %241 : vector<8x128xf32>
    %243 = arith.select %54, %238, %242 : vector<8x128xi1>, vector<8x128xf32>
    %244 = vector.extract_strided_slice %243 {offsets = [0, 0], sizes = [8, 32], strides = [1, 1]} : vector<8x128xf32> to vector<8x32xf32>
    %245 = vector.extract_strided_slice %243 {offsets = [0, 32], sizes = [8, 32], strides = [1, 1]} : vector<8x128xf32> to vector<8x32xf32>
    %246 = vector.extract_strided_slice %243 {offsets = [0, 64], sizes = [8, 32], strides = [1, 1]} : vector<8x128xf32> to vector<8x32xf32>
    %247 = vector.extract_strided_slice %243 {offsets = [0, 96], sizes = [8, 32], strides = [1, 1]} : vector<8x128xf32> to vector<8x32xf32>
    %248 = arith.mulf %245, %225 : vector<8x32xf32>
    %249 = arith.mulf %244, %246 : vector<8x32xf32>
    %250 = arith.addf %248, %249 : vector<8x32xf32>
    %251 = math.tanh %250 : vector<8x32xf32>
    %252 = arith.mulf %247, %251 : vector<8x32xf32>
    %cst_76 = arith.constant 0.000000e+00 : f32
    %cst_77 = arith.constant 6.000000e+00 : f32
    %253 = vector.broadcast %cst_76 : f32 to vector<8x32xf32>
    %254 = arith.maximumf %253, %252 : vector<8x32xf32>
    %255 = vector.broadcast %cst_77 : f32 to vector<8x32xf32>
    %256 = arith.minimumf %255, %254 : vector<8x32xf32>
    %257 = tpu.concatenate %81, %106, %131, %156, %181, %206, %231, %256 in 0 : vector<8x32xf32>, vector<8x32xf32>, vector<8x32xf32>, vector<8x32xf32>, vector<8x32xf32>, vector<8x32xf32>, vector<8x32xf32>, vector<8x32xf32> -> vector<64x32xf32>
    %c0_78 = arith.constant 0 : index
    %c0_79 = arith.constant 0 : index
    %258 = vector.load %arg10[%c0_78, %c0_79] : memref<32x128xf32, #tpu.memory_space<vmem>>, vector<32x128xf32>
    %cst_80 = arith.constant dense<0.000000e+00> : vector<64x128xf32>
    %259 = tpu.matmul %257, %258, %cst_80 {dimension_numbers = #tpu.dot_dimension_numbers<[1], [0], [0], [1], [0, 0, 1, 1], [], []>} : vector<64x32xf32>, vector<32x128xf32>, vector<64x128xf32> -> vector<64x128xf32>
    %c0_81 = arith.constant 0 : index
    %c0_82 = arith.constant 0 : index
    %260 = vector.load %arg11[%c0_81, %c0_82] : memref<1x128xf32, #tpu.memory_space<vmem>>, vector<1x128xf32>
    %261 = vector.broadcast %260 : vector<1x128xf32> to vector<64x128xf32>
    %262 = arith.addf %259, %261 : vector<64x128xf32>
    %cst_83 = arith.constant 0.000000e+00 : f32
    %263 = vector.broadcast %cst_83 : f32 to vector<64x128xf32>
    %264 = arith.cmpf ogt, %262, %263 : vector<64x128xf32>
    %cst_84 = arith.constant 0.000000e+00 : f32
    %265 = vector.broadcast %cst_84 : f32 to vector<64x128xf32>
    %266 = arith.minimumf %262, %265 : vector<64x128xf32>
    %267 = math.exp %266 : vector<64x128xf32>
    %cst_85 = arith.constant 1.000000e+00 : f32
    %268 = vector.broadcast %cst_85 : f32 to vector<64x128xf32>
    %269 = arith.subf %267, %268 : vector<64x128xf32>
    %cst_86 = arith.constant 1.67326319 : f32
    %270 = vector.broadcast %cst_86 : f32 to vector<64x128xf32>
    %271 = arith.mulf %270, %269 : vector<64x128xf32>
    %272 = arith.select %264, %262, %271 : vector<64x128xi1>, vector<64x128xf32>
    %cst_87 = arith.constant 1.05070102 : f32
    %273 = vector.broadcast %cst_87 : f32 to vector<64x128xf32>
    %274 = arith.mulf %273, %272 : vector<64x128xf32>
    %c0_88 = arith.constant 0 : index
    %c0_89 = arith.constant 0 : index
    %275 = vector.load %arg12[%c0_88, %c0_89] : memref<1x128xf32, #tpu.memory_space<vmem>>, vector<1x128xf32>
    %276 = vector.broadcast %275 : vector<1x128xf32> to vector<64x128xf32>
    %277 = arith.addf %274, %276 : vector<64x128xf32>
    %278 = tpu.iota {dimensions = array<i32: 1>} : vector<64x128xi32>
    %c8_i32 = arith.constant 8 : i32
    %279 = vector.broadcast %c8_i32 : i32 to vector<64x128xi32>
    %280 = arith.cmpi slt, %278, %279 : vector<64x128xi32>
    %281 = arith.select %280, %277, %262 : vector<64x128xi1>, vector<64x128xf32>
    %282 = vector.shape_cast %281 : vector<64x128xf32> to vector<8x8x128xf32>
    %c0_90 = arith.constant 0 : index
    %c0_91 = arith.constant 0 : index
    %c0_92 = arith.constant 0 : index
    %283 = vector.load %arg13[%c0_90, %c0_91, %c0_92] : memref<8x8x128xf32, #tpu.memory_space<vmem>>, vector<8x8x128xf32>
    tpu.vector_store %arg13[%c0_90, %c0_91, %c0_92], %282 {strides = array<i32>} : memref<8x8x128xf32, #tpu.memory_space<vmem>>, vector<8x8x128xf32>,
    return
  }
  func.func @transform_0(%arg0: i32) -> (i32, i32, i32) {
    %c0_i32 = arith.constant 0 : i32
    %c0_i32_0 = arith.constant 0 : i32
    %c0_i32_1 = arith.constant 0 : i32
    return %c0_i32, %arg0, %c0_i32_0 : i32, i32, i32
  }
  func.func @transform_1(%arg0: i32) -> (i32, i32) {
    %c0_i32 = arith.constant 0 : i32
    %c0_i32_0 = arith.constant 0 : i32
    %c0_i32_1 = arith.constant 0 : i32
    return %c0_i32, %c0_i32_0 : i32, i32
  }
  func.func @transform_2(%arg0: i32) -> (i32, i32) {
    %c0_i32 = arith.constant 0 : i32
    %c0_i32_0 = arith.constant 0 : i32
    %c0_i32_1 = arith.constant 0 : i32
    return %c0_i32, %c0_i32_0 : i32, i32
  }
  func.func @transform_3(%arg0: i32) -> (i32, i32) {
    %c0_i32 = arith.constant 0 : i32
    %c0_i32_0 = arith.constant 0 : i32
    %c0_i32_1 = arith.constant 0 : i32
    return %c0_i32, %c0_i32_0 : i32, i32
  }
  func.func @transform_4(%arg0: i32) -> (i32, i32) {
    %c0_i32 = arith.constant 0 : i32
    %c0_i32_0 = arith.constant 0 : i32
    %c0_i32_1 = arith.constant 0 : i32
    return %c0_i32, %c0_i32_0 : i32, i32
  }
  func.func @transform_5(%arg0: i32) -> (i32, i32) {
    %c0_i32 = arith.constant 0 : i32
    %c0_i32_0 = arith.constant 0 : i32
    %c0_i32_1 = arith.constant 0 : i32
    return %c0_i32, %c0_i32_0 : i32, i32
  }
  func.func @transform_6(%arg0: i32) -> (i32, i32) {
    %c0_i32 = arith.constant 0 : i32
    %c0_i32_0 = arith.constant 0 : i32
    %c0_i32_1 = arith.constant 0 : i32
    return %c0_i32, %c0_i32_0 : i32, i32
  }
  func.func @transform_7(%arg0: i32) -> (i32, i32) {
    %c0_i32 = arith.constant 0 : i32
    %c0_i32_0 = arith.constant 0 : i32
    %c0_i32_1 = arith.constant 0 : i32
    return %c0_i32, %c0_i32_0 : i32, i32
  }
  func.func @transform_8(%arg0: i32) -> (i32, i32) {
    %c0_i32 = arith.constant 0 : i32
    %c0_i32_0 = arith.constant 0 : i32
    %c0_i32_1 = arith.constant 0 : i32
    return %c0_i32, %c0_i32_0 : i32, i32
  }
  func.func @transform_9(%arg0: i32) -> (i32, i32) {
    %c0_i32 = arith.constant 0 : i32
    %c0_i32_0 = arith.constant 0 : i32
    %c0_i32_1 = arith.constant 0 : i32
    return %c0_i32, %c0_i32_0 : i32, i32
  }
  func.func @transform_10(%arg0: i32) -> (i32, i32) {
    %c0_i32 = arith.constant 0 : i32
    %c0_i32_0 = arith.constant 0 : i32
    %c0_i32_1 = arith.constant 0 : i32
    return %c0_i32, %c0_i32_0 : i32, i32
  }
  func.func @transform_11(%arg0: i32) -> (i32, i32) {
    %c0_i32 = arith.constant 0 : i32
    %c0_i32_0 = arith.constant 0 : i32
    %c0_i32_1 = arith.constant 0 : i32
    return %c0_i32, %c0_i32_0 : i32, i32
  }
  func.func @transform_12(%arg0: i32) -> (i32, i32, i32) {
    %c0_i32 = arith.constant 0 : i32
    %c0_i32_0 = arith.constant 0 : i32
    %c0_i32_1 = arith.constant 0 : i32
    return %c0_i32, %arg0, %c0_i32_0 : i32, i32, i32
  }
}

</mosaic_0001>

<llo_original>
// kernel: tpu_custom_call.1
$region0: #{tpu_custom_call.1}
  #allocation0 [shape = 'u32[]', space=smem, size = 0x4, offset = 0x4, fixed_abs, tag = 'smem constant byte address 0x4 - core index']
  #allocation1 [shape = 'u32[144,128]{1,0:T(1,128)}', space=vmem, size = 0x12000, scoped, tag = 'internal scratch']
  %s0 = inlined_call_operand.hbm [shape: f32[8,8,256], index: 0, kind: input, shape index: {}]
  %s1 = inlined_call_operand.hbm [shape: f32[256,1536], index: 1, kind: input, shape index: {}]
  %s2 = inlined_call_operand.hbm [shape: f32[1,1536], index: 2, kind: input, shape index: {}]
  %s3 = inlined_call_operand.hbm [shape: f32[384,512], index: 3, kind: input, shape index: {}]
  %s4 = inlined_call_operand.hbm [shape: f32[1,512], index: 4, kind: input, shape index: {}]
  %s5 = inlined_call_operand.vmem [shape: f32[128,32], index: 5, kind: input, shape index: {}]
  %s6 = inlined_call_operand.hbm [shape: f32[1,32], index: 6, kind: input, shape index: {}]
  %s7 = inlined_call_operand.hbm [shape: f32[32,128], index: 7, kind: input, shape index: {}]
  %s8 = inlined_call_operand.hbm [shape: f32[32,128], index: 8, kind: input, shape index: {}]
  %s9 = inlined_call_operand.hbm [shape: f32[32,128], index: 9, kind: input, shape index: {}]
  %s10 = inlined_call_operand.hbm [shape: f32[1,128], index: 10, kind: input, shape index: {}]
  %s11 = inlined_call_operand.hbm [shape: f32[1,128], index: 11, kind: input, shape index: {}]
  %s12 = inlined_call_operand.hbm [shape: f32[8,8,128], index: 12, kind: output, shape index: {}]
  %s13 = sld [smem:[#allocation0]]
  $region102: #{tpu_custom_call.1} parent=0
    _
  %s15 = ssub.s32 1, %s13
  %s16 = scalar_select 0, %s15, %s13
  $region1: #{tpu_custom_call.1} parent=0
    #allocation2 [shape = 'u8[65536]{0}', space=vmem, size = 0x10000, scoped, tag = 'input window, operand 0, single buffered']
    #allocation3 [shape = 's32[1]{0}', space=sflag, size = 0x4, scoped, tag = 'scoped memory for tpu_custom_call.1']
    #allocation4 [shape = 's32[1]{0}', space=sflag, size = 0x4, scoped, tag = 'scoped memory for tpu_custom_call.1']
    #allocation5 [shape = 'u8[1572864]{0}', space=vmem, size = 0x180000, scoped, tag = 'input window, operand 1, single buffered']
    #allocation6 [shape = 's32[1]{0}', space=sflag, size = 0x4, scoped, tag = 'scoped memory for tpu_custom_call.1']
    #allocation7 [shape = 'u8[6144]{0}', space=vmem, size = 0x1800, scoped, tag = 'input window, operand 2, single buffered']
    #allocation8 [shape = 'u8[786432]{0}', space=vmem, size = 0xc0000, scoped, tag = 'input window, operand 3, single buffered']
    #allocation9 [shape = 's32[1]{0}', space=sflag, size = 0x4, scoped, tag = 'scoped memory for tpu_custom_call.1']
    #allocation10 [shape = 'u8[2048]{0}', space=vmem, size = 0x800, scoped, tag = 'input window, operand 4, single buffered']
    #allocation11 [shape = 'u8[512]{0}', space=vmem, size = 0x400, scoped, tag = 'input window, operand 6, single buffered']
    #allocation12 [shape = 's32[1]{0}', space=sflag, size = 0x4, scoped, tag = 'scoped memory for tpu_custom_call.1']
    #allocation13 [shape = 'u8[16384]{0}', space=vmem, size = 0x4000, scoped, tag = 'input window, operand 7, single buffered']
    #allocation14 [shape = 'u8[16384]{0}', space=vmem, size = 0x4000, scoped, tag = 'input window, operand 8, single buffered']
    #allocation15 [shape = 's32[1]{0}', space=sflag, size = 0x4, scoped, tag = 'scoped memory for tpu_custom_call.1']
    #allocation16 [shape = 'u8[16384]{0}', space=vmem, size = 0x4000, scoped, tag = 'input window, operand 9, single buffered']
    #allocation17 [shape = 'u8[512]{0}', space=vmem, size = 0x400, scoped, tag = 'input window, operand 10, single buffered']
    #allocation18 [shape = 's32[1]{0}', space=sflag, size = 0x4, scoped, tag = 'scoped memory for tpu_custom_call.1']
    #allocation19 [shape = 'u8[512]{0}', space=vmem, size = 0x400, scoped, tag = 'input window, operand 11, single buffered']
    #allocation20 [shape = 'u8[32768]{0}', space=vmem, size = 0x8000, scoped, tag = 'output window, operand 0, single buffered']
    %17 = vsyncpa [#allocation3], 0
    %18 = vsyncpa [#allocation6], 0
    %19 = vsyncpa [#allocation9], 0
    %20 = vsyncpa [#allocation12], 0
    %21 = vsyncpa [#allocation15], 0
    %22 = vsyncpa [#allocation18], 0
    %23 = vsyncpa [#allocation4], 0
    // Predicated region
    $region2: #{tpu_custom_call.1} parent=1 // pred_check
      _
    $region3: #{tpu_custom_call.1} parent=1 // pred_check_branch
      %25 = sbr.rel (0) target = $region5
    $region4: #{tpu_custom_call.1} parent=1 // pred_region
      %s27 = ssub.s32 2048, 2048
      %28 = vsyncadd [#allocation3], %s27
      %s29 = sshll.u32 [#allocation2], 4
      %s30 = int_to_ptr.vmem [resolvable:$true] %s29
      %35 = dma.hbm_to_vmem [thread:$0]  %s0, 2048, %s30, [#allocation3], 256, 256, 16
    $region5: #{tpu_custom_call.1} parent=1 // pred_fallthru
      _
    // Predicated region
    $region6: #{tpu_custom_call.1} parent=1 // pred_check
      _
    $region7: #{tpu_custom_call.1} parent=1 // pred_check_branch
      %37 = sbr.rel (0) target = $region9
    $region8: #{tpu_custom_call.1} parent=1 // pred_region
      %s39 = ssub.s32 49152, 49152
      %40 = vsyncadd [#allocation6], %s39
      %s41 = sshll.u32 [#allocation5], 4
      %s42 = int_to_ptr.vmem [resolvable:$true] %s41
      %47 = dma.hbm_to_vmem [thread:$0]  %s1, 49152, %s42, [#allocation6], 1536, 1536, 96
    $region9: #{tpu_custom_call.1} parent=1 // pred_fallthru
      _
    // Predicated region
    $region10: #{tpu_custom_call.1} parent=1 // pred_check
      _
    $region11: #{tpu_custom_call.1} parent=1 // pred_check_branch
      %49 = sbr.rel (0) target = $region13
    $region12: #{tpu_custom_call.1} parent=1 // pred_region
      %s51 = ssub.s32 192, 192
      %52 = vsyncadd [#allocation6], %s51
      %s54 = sshll.u32 [#allocation7], 4
      %s55 = int_to_ptr.vmem [resolvable:$true] %s54
      %57 = dma.hbm_to_vmem [thread:$0]  %s2, 192, %s55, [#allocation6]
    $region13: #{tpu_custom_call.1} parent=1 // pred_fallthru
      _
    // Predicated region
    $region14: #{tpu_custom_call.1} parent=1 // pred_check
      _
    $region15: #{tpu_custom_call.1} parent=1 // pred_check_branch
      %59 = sbr.rel (0) target = $region17
    $region16: #{tpu_custom_call.1} parent=1 // pred_region
      %s61 = ssub.s32 24576, 24576
      %62 = vsyncadd [#allocation9], %s61
      %s63 = sshll.u32 [#allocation8], 4
      %s64 = int_to_ptr.vmem [resolvable:$true] %s63
      %69 = dma.hbm_to_vmem [thread:$0]  %s3, 24576, %s64, [#allocation9], 512, 512, 32
    $region17: #{tpu_custom_call.1} parent=1 // pred_fallthru
      _
    // Predicated region
    $region18: #{tpu_custom_call.1} parent=1 // pred_check
      _
    $region19: #{tpu_custom_call.1} parent=1 // pred_check_branch
      %71 = sbr.rel (0) target = $region21
    $region20: #{tpu_custom_call.1} parent=1 // pred_region
      %s73 = ssub.s32 64, 64
      %74 = vsyncadd [#allocation9], %s73
      %s76 = sshll.u32 [#allocation10], 4
      %s77 = int_to_ptr.vmem [resolvable:$true] %s76
      %79 = dma.hbm_to_vmem [thread:$0]  %s4, 64, %s77, [#allocation9]
    $region21: #{tpu_custom_call.1} parent=1 // pred_fallthru
      _
    // Predicated region
    $region22: #{tpu_custom_call.1} parent=1 // pred_check
      _
    $region23: #{tpu_custom_call.1} parent=1 // pred_check_branch
      %81 = sbr.rel (0) target = $region25
    $region24: #{tpu_custom_call.1} parent=1 // pred_region
      _
    $region25: #{tpu_custom_call.1} parent=1 // pred_fallthru
      _
    // Predicated region
    $region26: #{tpu_custom_call.1} parent=1 // pred_check
      _
    $region27: #{tpu_custom_call.1} parent=1 // pred_check_branch
      %83 = sbr.rel (0) target = $region29
    $region28: #{tpu_custom_call.1} parent=1 // pred_region
      %s85 = ssub.s32 16, 16
      %86 = vsyncadd [#allocation12], %s85
      %s88 = sshll.u32 [#allocation11], 4
      %s89 = int_to_ptr.vmem [resolvable:$true] %s88
      %91 = dma.hbm_to_vmem [thread:$0]  %s6, 16, %s89, [#allocation12]
    $region29: #{tpu_custom_call.1} parent=1 // pred_fallthru
      _
    // Predicated region
    $region30: #{tpu_custom_call.1} parent=1 // pred_check
      _
    $region31: #{tpu_custom_call.1} parent=1 // pred_check_branch
      %93 = sbr.rel (0) target = $region33
    $region32: #{tpu_custom_call.1} parent=1 // pred_region
      %s95 = ssub.s32 512, 512
      %96 = vsyncadd [#allocation12], %s95
      %s97 = sshll.u32 [#allocation13], 4
      %s98 = int_to_ptr.vmem [resolvable:$true] %s97
      %103 = dma.hbm_to_vmem [thread:$0]  %s7, 512, %s98, [#allocation12], 128, 128, 8
    $region33: #{tpu_custom_call.1} parent=1 // pred_fallthru
      _
    // Predicated region
    $region34: #{tpu_custom_call.1} parent=1 // pred_check
      _
    $region35: #{tpu_custom_call.1} parent=1 // pred_check_branch
      %105 = sbr.rel (0) target = $region37
    $region36: #{tpu_custom_call.1} parent=1 // pred_region
      %s107 = ssub.s32 512, 512
      %108 = vsyncadd [#allocation15], %s107
      %s109 = sshll.u32 [#allocation14], 4
      %s110 = int_to_ptr.vmem [resolvable:$true] %s109
      %115 = dma.hbm_to_vmem [thread:$0]  %s8, 512, %s110, [#allocation15], 128, 128, 8
    $region37: #{tpu_custom_call.1} parent=1 // pred_fallthru
      _
    // Predicated region
    $region38: #{tpu_custom_call.1} parent=1 // pred_check
      _
    $region39: #{tpu_custom_call.1} parent=1 // pred_check_branch
      %117 = sbr.rel (0) target = $region41
    $region40: #{tpu_custom_call.1} parent=1 // pred_region
      %s119 = ssub.s32 512, 512
      %120 = vsyncadd [#allocation15], %s119
      %s121 = sshll.u32 [#allocation16], 4
      %s122 = int_to_ptr.vmem [resolvable:$true] %s121
      %127 = dma.hbm_to_vmem [thread:$0]  %s9, 512, %s122, [#allocation15], 128, 128, 8
    $region41: #{tpu_custom_call.1} parent=1 // pred_fallthru
      _
    // Predicated region
    $region42: #{tpu_custom_call.1} parent=1 // pred_check
      _
    $region43: #{tpu_custom_call.1} parent=1 // pred_check_branch
      %129 = sbr.rel (0) target = $region45
    $region44: #{tpu_custom_call.1} parent=1 // pred_region
      %s131 = ssub.s32 16, 16
      %132 = vsyncadd [#allocation18], %s131
      %s134 = sshll.u32 [#allocation17], 4
      %s135 = int_to_ptr.vmem [resolvable:$true] %s134
      %137 = dma.hbm_to_vmem [thread:$0]  %s10, 16, %s135, [#allocation18]
    $region45: #{tpu_custom_call.1} parent=1 // pred_fallthru
      _
    // Predicated region
    $region46: #{tpu_custom_call.1} parent=1 // pred_check
      _
    $region47: #{tpu_custom_call.1} parent=1 // pred_check_branch
      %139 = sbr.rel (0) target = $region49
    $region48: #{tpu_custom_call.1} parent=1 // pred_region
      %s141 = ssub.s32 16, 16
      %142 = vsyncadd [#allocation18], %s141
      %s144 = sshll.u32 [#allocation19], 4
      %s145 = int_to_ptr.vmem [resolvable:$true] %s144
      %147 = dma.hbm_to_vmem [thread:$0]  %s11, 16, %s145, [#allocation18]
    $region49: #{tpu_custom_call.1} parent=1 // pred_fallthru
      _
    // Predicated region
    $region50: #{tpu_custom_call.1} parent=1 // pred_check
      _
    $region51: #{tpu_custom_call.1} parent=1 // pred_check_branch
      %149 = sbr.rel (0) target = $region53
    $region52: #{tpu_custom_call.1} parent=1 // pred_region
      %150 = dma.done [#allocation3], 2048
    $region53: #{tpu_custom_call.1} parent=1 // pred_fallthru
      _
    // Predicated region
    $region54: #{tpu_custom_call.1} parent=1 // pred_check
      _
    $region55: #{tpu_custom_call.1} parent=1 // pred_check_branch
      %152 = sbr.rel (0) target = $region57
    $region56: #{tpu_custom_call.1} parent=1 // pred_region
      %153 = dma.done [#allocation6], 49152
    $region57: #{tpu_custom_call.1} parent=1 // pred_fallthru
      _
    // Predicated region
    $region58: #{tpu_custom_call.1} parent=1 // pred_check
      _
    $region59: #{tpu_custom_call.1} parent=1 // pred_check_branch
      %155 = sbr.rel (0) target = $region61
    $region60: #{tpu_custom_call.1} parent=1 // pred_region
      %156 = dma.done [#allocation6], 192
    $region61: #{tpu_custom_call.1} parent=1 // pred_fallthru
      _
    // Predicated region
    $region62: #{tpu_custom_call.1} parent=1 // pred_check
      _
    $region63: #{tpu_custom_call.1} parent=1 // pred_check_branch
      %158 = sbr.rel (0) target = $region65
    $region64: #{tpu_custom_call.1} parent=1 // pred_region
      %159 = dma.done [#allocation9], 24576
    $region65: #{tpu_custom_call.1} parent=1 // pred_fallthru
      _
    // Predicated region
    $region66: #{tpu_custom_call.1} parent=1 // pred_check
      _
    $region67: #{tpu_custom_call.1} parent=1 // pred_check_branch
      %161 = sbr.rel (0) target = $region69
    $region68: #{tpu_custom_call.1} parent=1 // pred_region
      %162 = dma.done [#allocation9], 64
    $region69: #{tpu_custom_call.1} parent=1 // pred_fallthru
      _
    // Predicated region
    $region70: #{tpu_custom_call.1} parent=1 // pred_check
      _
    $region71: #{tpu_custom_call.1} parent=1 // pred_check_branch
      %164 = sbr.rel (0) target = $region73
    $region72: #{tpu_custom_call.1} parent=1 // pred_region
      %165 = dma.done [#allocation12], 16
    $region73: #{tpu_custom_call.1} parent=1 // pred_fallthru
      _
    // Predicated region
    $region74: #{tpu_custom_call.1} parent=1 // pred_check
      _
    $region75: #{tpu_custom_call.1} parent=1 // pred_check_branch
      %167 = sbr.rel (0) target = $region77
    $region76: #{tpu_custom_call.1} parent=1 // pred_region
      %168 = dma.done [#allocation12], 512
    $region77: #{tpu_custom_call.1} parent=1 // pred_fallthru
      _
    // Predicated region
    $region78: #{tpu_custom_call.1} parent=1 // pred_check
      _
    $region79: #{tpu_custom_call.1} parent=1 // pred_check_branch
      %170 = sbr.rel (0) target = $region81
    $region80: #{tpu_custom_call.1} parent=1 // pred_region
      %171 = dma.done [#allocation15], 512
    $region81: #{tpu_custom_call.1} parent=1 // pred_fallthru
      _
    // Predicated region
    $region82: #{tpu_custom_call.1} parent=1 // pred_check
      _
    $region83: #{tpu_custom_call.1} parent=1 // pred_check_branch
      %173 = sbr.rel (0) target = $region85
    $region84: #{tpu_custom_call.1} parent=1 // pred_region
      %174 = dma.done [#allocation15], 512
    $region85: #{tpu_custom_call.1} parent=1 // pred_fallthru
      _
    // Predicated region
    $region86: #{tpu_custom_call.1} parent=1 // pred_check
      _
    $region87: #{tpu_custom_call.1} parent=1 // pred_check_branch
      %176 = sbr.rel (0) target = $region89
    $region88: #{tpu_custom_call.1} parent=1 // pred_region
      %177 = dma.done [#allocation18], 16
    $region89: #{tpu_custom_call.1} parent=1 // pred_fallthru
      _
    // Predicated region
    $region90: #{tpu_custom_call.1} parent=1 // pred_check
      _
    $region91: #{tpu_custom_call.1} parent=1 // pred_check_branch
      %179 = sbr.rel (0) target = $region93
    $region92: #{tpu_custom_call.1} parent=1 // pred_region
      %180 = dma.done [#allocation18], 16
    $region93: #{tpu_custom_call.1} parent=1 // pred_fallthru
      _
    %v181 = vld [vmem:[#allocation2] sm:$0xff]
    %v182 = vld [vmem:[#allocation2 + $0x8] sm:$0xff]
    %v183 = vld [vmem:[#allocation2 + $0x10] sm:$0xff]
    %v184 = vld [vmem:[#allocation2 + $0x18] sm:$0xff]
    %v185 = vld [vmem:[#allocation2 + $0x20] sm:$0xff]
    %v186 = vld [vmem:[#allocation2 + $0x28] sm:$0xff]
    %v187 = vld [vmem:[#allocation2 + $0x30] sm:$0xff]
    %v188 = vld [vmem:[#allocation2 + $0x38] sm:$0xff]
    %v189 = vld [vmem:[#allocation2 + $0x40] sm:$0xff]
    %v190 = vld [vmem:[#allocation2 + $0x48] sm:$0xff]
    %v191 = vld [vmem:[#allocation2 + $0x50] sm:$0xff]
    %v192 = vld [vmem:[#allocation2 + $0x58] sm:$0xff]
    %v193 = vld [vmem:[#allocation2 + $0x60] sm:$0xff]
    %v194 = vld [vmem:[#allocation2 + $0x68] sm:$0xff]
    %v195 = vld [vmem:[#allocation2 + $0x70] sm:$0xff]
    %v196 = vld [vmem:[#allocation2 + $0x78] sm:$0xff]
    %vm197 = vcmp.ne.f32.partialorder %v181, %v181
    %vm198 = vcmp.ne.f32.partialorder %v182, %v182
    %vm199 = vcmp.ne.f32.partialorder %v183, %v183
    %vm200 = vcmp.ne.f32.partialorder %v184, %v184
    %vm201 = vcmp.ne.f32.partialorder %v185, %v185
    %vm202 = vcmp.ne.f32.partialorder %v186, %v186
    %vm203 = vcmp.ne.f32.partialorder %v187, %v187
    %vm204 = vcmp.ne.f32.partialorder %v188, %v188
    %vm205 = vcmp.ne.f32.partialorder %v189, %v189
    %vm206 = vcmp.ne.f32.partialorder %v190, %v190
    %vm207 = vcmp.ne.f32.partialorder %v191, %v191
    %vm208 = vcmp.ne.f32.partialorder %v192, %v192
    %vm209 = vcmp.ne.f32.partialorder %v193, %v193
    %vm210 = vcmp.ne.f32.partialorder %v194, %v194
    %vm211 = vcmp.ne.f32.partialorder %v195, %v195
    %vm212 = vcmp.ne.f32.partialorder %v196, %v196
    %v213 = vsel %vm197, 0.0, %v181
    %v214 = vsel %vm198, 0.0, %v182
    %v215 = vsel %vm199, 0.0, %v183
    %v216 = vsel %vm200, 0.0, %v184
    %v217 = vsel %vm201, 0.0, %v185
    %v218 = vsel %vm202, 0.0, %v186
    %v219 = vsel %vm203, 0.0, %v187
    %v220 = vsel %vm204, 0.0, %v188
    %v221 = vsel %vm205, 0.0, %v189
    %v222 = vsel %vm206, 0.0, %v190
    %v223 = vsel %vm207, 0.0, %v191
    %v224 = vsel %vm208, 0.0, %v192
    %v225 = vsel %vm209, 0.0, %v193
    %v226 = vsel %vm210, 0.0, %v194
    %v227 = vsel %vm211, 0.0, %v195
    %v228 = vsel %vm212, 0.0, %v196
    %v229 = vld [vmem:[#allocation5] sm:$0xff]
    %v230 = vld [vmem:[#allocation5 + $0x8] sm:$0xff]
    %v231 = vld [vmem:[#allocation5 + $0x10] sm:$0xff]
    %v232 = vld [vmem:[#allocation5 + $0x18] sm:$0xff]
    %v233 = vld [vmem:[#allocation5 + $0x20] sm:$0xff]
    %v234 = vld [vmem:[#allocation5 + $0x28] sm:$0xff]
    %v235 = vld [vmem:[#allocation5 + $0x30] sm:$0xff]
    %v236 = vld [vmem:[#allocation5 + $0x38] sm:$0xff]
    %v237 = vld [vmem:[#allocation5 + $0x40] sm:$0xff]
    %v238 = vld [vmem:[#allocation5 + $0x48] sm:$0xff]
    %v239 = vld [vmem:[#allocation5 + $0x50] sm:$0xff]
    %v240 = vld [vmem:[#allocation5 + $0x58] sm:$0xff]
    %v241 = vld [vmem:[#allocation5 + $0x60] sm:$0xff]
    %v242 = vld [vmem:[#allocation5 + $0x68] sm:$0xff]
    %v243 = vld [vmem:[#allocation5 + $0x70] sm:$0xff]
    %v244 = vld [vmem:[#allocation5 + $0x78] sm:$0xff]
    %v245 = vld [vmem:[#allocation5 + $0x80] sm:$0xff]
    %v246 = vld [vmem:[#allocation5 + $0x88] sm:$0xff]
    %v247 = vld [vmem:[#allocation5 + $0x90] sm:$0xff]
    %v248 = vld [vmem:[#allocation5 + $0x98] sm:$0xff]
    %v249 = vld [vmem:[#allocation5 + $0xa0] sm:$0xff]
    %v250 = vld [vmem:[#allocation5 + $0xa8] sm:$0xff]
    %v251 = vld [vmem:[#allocation5 + $0xb0] sm:$0xff]
    %v252 = vld [vmem:[#allocation5 + $0xb8] sm:$0xff]
    %v253 = vld [vmem:[#allocation5 + $0xc0] sm:$0xff]
    %v254 = vld [vmem:[#allocation5 + $0xc8] sm:$0xff]
    %v255 = vld [vmem:[#allocation5 + $0xd0] sm:$0xff]
    %v256 = vld [vmem:[#allocation5 + $0xd8] sm:$0xff]
    %v257 = vld [vmem:[#allocation5 + $0xe0] sm:$0xff]
    %v258 = vld [vmem:[#allocation5 + $0xe8] sm:$0xff]
    %v259 = vld [vmem:[#allocation5 + $0xf0] sm:$0xff]
    %v260 = vld [vmem:[#allocation5 + $0xf8] sm:$0xff]
    %v261 = vld [vmem:[#allocation5 + $0x100] sm:$0xff]
    %v262 = vld [vmem:[#allocation5 + $0x108] sm:$0xff]
    %v263 = vld [vmem:[#allocation5 + $0x110] sm:$0xff]
    %v264 = vld [vmem:[#allocation5 + $0x118] sm:$0xff]
    %v265 = vld [vmem:[#allocation5 + $0x120] sm:$0xff]
    %v266 = vld [vmem:[#allocation5 + $0x128] sm:$0xff]
    %v267 = vld [vmem:[#allocation5 + $0x130] sm:$0xff]
    %v268 = vld [vmem:[#allocation5 + $0x138] sm:$0xff]
    %v269 = vld [vmem:[#allocation5 + $0x140] sm:$0xff]
    %v270 = vld [vmem:[#allocation5 + $0x148] sm:$0xff]
    %v271 = vld [vmem:[#allocation5 + $0x150] sm:$0xff]
    %v272 = vld [vmem:[#allocation5 + $0x158] sm:$0xff]
    %v273 = vld [vmem:[#allocation5 + $0x160] sm:$0xff]
    %v274 = vld [vmem:[#allocation5 + $0x168] sm:$0xff]
    %v275 = vld [vmem:[#allocation5 + $0x170] sm:$0xff]
    %v276 = vld [vmem:[#allocation5 + $0x178] sm:$0xff]
    %v277 = vld [vmem:[#allocation5 + $0x180] sm:$0xff]
    %v278 = vld [vmem:[#allocation5 + $0x188] sm:$0xff]
    %v279 = vld [vmem:[#allocation5 + $0x190] sm:$0xff]
    %v280 = vld [vmem:[#allocation5 + $0x198] sm:$0xff]
    %v281 = vld [vmem:[#allocation5 + $0x1a0] sm:$0xff]
    %v282 = vld [vmem:[#allocation5 + $0x1a8] sm:$0xff]
    %v283 = vld [vmem:[#allocation5 + $0x1b0] sm:$0xff]
    %v284 = vld [vmem:[#allocation5 + $0x1b8] sm:$0xff]
    %v285 = vld [vmem:[#allocation5 + $0x1c0] sm:$0xff]
    %v286 = vld [vmem:[#allocation5 + $0x1c8] sm:$0xff]
    %v287 = vld [vmem:[#allocation5 + $0x1d0] sm:$0xff]
    %v288 = vld [vmem:[#allocation5 + $0x1d8] sm:$0xff]
    %v289 = vld [vmem:[#allocation5 + $0x1e0] sm:$0xff]
    %v290 = vld [vmem:[#allocation5 + $0x1e8] sm:$0xff]
    %v291 = vld [vmem:[#allocation5 + $0x1f0] sm:$0xff]
    %v292 = vld [vmem:[#allocation5 + $0x1f8] sm:$0xff]
    %v293 = vld [vmem:[#allocation5 + $0x200] sm:$0xff]
    %v294 = vld [vmem:[#allocation5 + $0x208] sm:$0xff]
    %v295 = vld [vmem:[#allocation5 + $0x210] sm:$0xff]
    %v296 = vld [vmem:[#allocation5 + $0x218] sm:$0xff]
    %v297 = vld [vmem:[#allocation5 + $0x220] sm:$0xff]
    %v298 = vld [vmem:[#allocation5 + $0x228] sm:$0xff]
    %v299 = vld [vmem:[#allocation5 + $0x230] sm:$0xff]
    %v300 = vld [vmem:[#allocation5 + $0x238] sm:$0xff]
    %v301 = vld [vmem:[#allocation5 + $0x240] sm:$0xff]
    %v302 = vld [vmem:[#allocation5 + $0x248] sm:$0xff]
    %v303 = vld [vmem:[#allocation5 + $0x250] sm:$0xff]
    %v304 = vld [vmem:[#allocation5 + $0x258] sm:$0xff]
    %v305 = vld [vmem:[#allocation5 + $0x260] sm:$0xff]
    %v306 = vld [vmem:[#allocation5 + $0x268] sm:$0xff]
    %v307 = vld [vmem:[#allocation5 + $0x270] sm:$0xff]
    %v308 = vld [vmem:[#allocation5 + $0x278] sm:$0xff]
    %v309 = vld [vmem:[#allocation5 + $0x280] sm:$0xff]
    %v310 = vld [vmem:[#allocation5 + $0x288] sm:$0xff]
    %v311 = vld [vmem:[#allocation5 + $0x290] sm:$0xff]
    %v312 = vld [vmem:[#allocation5 + $0x298] sm:$0xff]
    %v313 = vld [vmem:[#allocation5 + $0x2a0] sm:$0xff]
    %v314 = vld [vmem:[#allocation5 + $0x2a8] sm:$0xff]
    %v315 = vld [vmem:[#allocation5 + $0x2b0] sm:$0xff]
    %v316 = vld [vmem:[#allocation5 + $0x2b8] sm:$0xff]
    %v317 = vld [vmem:[#allocation5 + $0x2c0] sm:$0xff]
    %v318 = vld [vmem:[#allocation5 + $0x2c8] sm:$0xff]
    %v319 = vld [vmem:[#allocation5 + $0x2d0] sm:$0xff]
    %v320 = vld [vmem:[#allocation5 + $0x2d8] sm:$0xff]
    %v321 = vld [vmem:[#allocation5 + $0x2e0] sm:$0xff]
    %v322 = vld [vmem:[#allocation5 + $0x2e8] sm:$0xff]
    %v323 = vld [vmem:[#allocation5 + $0x2f0] sm:$0xff]
    %v324 = vld [vmem:[#allocation5 + $0x2f8] sm:$0xff]
    %v325 = vld [vmem:[#allocation5 + $0x300] sm:$0xff]
    %v326 = vld [vmem:[#allocation5 + $0x308] sm:$0xff]
    %v327 = vld [vmem:[#allocation5 + $0x310] sm:$0xff]
    %v328 = vld [vmem:[#allocation5 + $0x318] sm:$0xff]
    %v329 = vld [vmem:[#allocation5 + $0x320] sm:$0xff]
    %v330 = vld [vmem:[#allocation5 + $0x328] sm:$0xff]
    %v331 = vld [vmem:[#allocation5 + $0x330] sm:$0xff]
    %v332 = vld [vmem:[#allocation5 + $0x338] sm:$0xff]
    %v333 = vld [vmem:[#allocation5 + $0x340] sm:$0xff]
    %v334 = vld [vmem:[#allocation5 + $0x348] sm:$0xff]
    %v335 = vld [vmem:[#allocation5 + $0x350] sm:$0xff]
    %v336 = vld [vmem:[#allocation5 + $0x358] sm:$0xff]
    %v337 = vld [vmem:[#allocation5 + $0x360] sm:$0xff]
    %v338 = vld [vmem:[#allocation5 + $0x368] sm:$0xff]
    %v339 = vld [vmem:[#allocation5 + $0x370] sm:$0xff]
    %v340 = vld [vmem:[#allocation5 + $0x378] sm:$0xff]
    %v341 = vld [vmem:[#allocation5 + $0x380] sm:$0xff]
    %v342 = vld [vmem:[#allocation5 + $0x388] sm:$0xff]
    %v343 = vld [vmem:[#allocation5 + $0x390] sm:$0xff]
    %v344 = vld [vmem:[#allocation5 + $0x398] sm:$0xff]
    %v345 = vld [vmem:[#allocation5 + $0x3a0] sm:$0xff]
    %v346 = vld [vmem:[#allocation5 + $0x3a8] sm:$0xff]
    %v347 = vld [vmem:[#allocation5 + $0x3b0] sm:$0xff]
    %v348 = vld [vmem:[#allocation5 + $0x3b8] sm:$0xff]
    %v349 = vld [vmem:[#allocation5 + $0x3c0] sm:$0xff]
    %v350 = vld [vmem:[#allocation5 + $0x3c8] sm:$0xff]
    %v351 = vld [vmem:[#allocation5 + $0x3d0] sm:$0xff]
    %v352 = vld [vmem:[#allocation5 + $0x3d8] sm:$0xff]
    %v353 = vld [vmem:[#allocation5 + $0x3e0] sm:$0xff]
    %v354 = vld [vmem:[#allocation5 + $0x3e8] sm:$0xff]
    %v355 = vld [vmem:[#allocation5 + $0x3f0] sm:$0xff]
    %v356 = vld [vmem:[#allocation5 + $0x3f8] sm:$0xff]
    %v357 = vld [vmem:[#allocation5 + $0x400] sm:$0xff]
    %v358 = vld [vmem:[#allocation5 + $0x408] sm:$0xff]
    %v359 = vld [vmem:[#allocation5 + $0x410] sm:$0xff]
    %v360 = vld [vmem:[#allocation5 + $0x418] sm:$0xff]
    %v361 = vld [vmem:[#allocation5 + $0x420] sm:$0xff]
    %v362 = vld [vmem:[#allocation5 + $0x428] sm:$0xff]
    %v363 = vld [vmem:[#allocation5 + $0x430] sm:$0xff]
    %v364 = vld [vmem:[#allocation5 + $0x438] sm:$0xff]
    %v365 = vld [vmem:[#allocation5 + $0x440] sm:$0xff]
    %v366 = vld [vmem:[#allocation5 + $0x448] sm:$0xff]
    %v367 = vld [vmem:[#allocation5 + $0x450] sm:$0xff]
    %v368 = vld [vmem:[#allocation5 + $0x458] sm:$0xff]
    %v369 = vld [vmem:[#allocation5 + $0x460] sm:$0xff]
    %v370 = vld [vmem:[#allocation5 + $0x468] sm:$0xff]
    %v371 = vld [vmem:[#allocation5 + $0x470] sm:$0xff]
    %v372 = vld [vmem:[#allocation5 + $0x478] sm:$0xff]
    %v373 = vld [vmem:[#allocation5 + $0x480] sm:$0xff]
    %v374 = vld [vmem:[#allocation5 + $0x488] sm:$0xff]
    %v375 = vld [vmem:[#allocation5 + $0x490] sm:$0xff]
    %v376 = vld [vmem:[#allocation5 + $0x498] sm:$0xff]
    %v377 = vld [vmem:[#allocation5 + $0x4a0] sm:$0xff]
    %v378 = vld [vmem:[#allocation5 + $0x4a8] sm:$0xff]
    %v379 = vld [vmem:[#allocation5 + $0x4b0] sm:$0xff]
    %v380 = vld [vmem:[#allocation5 + $0x4b8] sm:$0xff]
    %v381 = vld [vmem:[#allocation5 + $0x4c0] sm:$0xff]
    %v382 = vld [vmem:[#allocation5 + $0x4c8] sm:$0xff]
    %v383 = vld [vmem:[#allocation5 + $0x4d0] sm:$0xff]
    %v384 = vld [vmem:[#allocation5 + $0x4d8] sm:$0xff]
    %v385 = vld [vmem:[#allocation5 + $0x4e0] sm:$0xff]
    %v386 = vld [vmem:[#allocation5 + $0x4e8] sm:$0xff]
    %v387 = vld [vmem:[#allocation5 + $0x4f0] sm:$0xff]
    %v388 = vld [vmem:[#allocation5 + $0x4f8] sm:$0xff]
    %v389 = vld [vmem:[#allocation5 + $0x500] sm:$0xff]
    %v390 = vld [vmem:[#allocation5 + $0x508] sm:$0xff]
    %v391 = vld [vmem:[#allocation5 + $0x510] sm:$0xff]
    %v392 = vld [vmem:[#allocation5 + $0x518] sm:$0xff]
    %v393 = vld [vmem:[#allocation5 + $0x520] sm:$0xff]
    %v394 = vld [vmem:[#allocation5 + $0x528] sm:$0xff]
    %v395 = vld [vmem:[#allocation5 + $0x530] sm:$0xff]
    %v396 = vld [vmem:[#allocation5 + $0x538] sm:$0xff]
    %v397 = vld [vmem:[#allocation5 + $0x540] sm:$0xff]
    %v398 = vld [vmem:[#allocation5 + $0x548] sm:$0xff]
    %v399 = vld [vmem:[#allocation5 + $0x550] sm:$0xff]
    %v400 = vld [vmem:[#allocation5 + $0x558] sm:$0xff]
    %v401 = vld [vmem:[#allocation5 + $0x560] sm:$0xff]
    %v402 = vld [vmem:[#allocation5 + $0x568] sm:$0xff]
    %v403 = vld [vmem:[#allocation5 + $0x570] sm:$0xff]
    %v404 = vld [vmem:[#allocation5 + $0x578] sm:$0xff]
    %v405 = vld [vmem:[#allocation5 + $0x580] sm:$0xff]
    %v406 = vld [vmem:[#allocation5 + $0x588] sm:$0xff]
    %v407 = vld [vmem:[#allocation5 + $0x590] sm:$0xff]
    %v408 = vld [vmem:[#allocation5 + $0x598] sm:$0xff]
    %v409 = vld [vmem:[#allocation5 + $0x5a0] sm:$0xff]
    %v410 = vld [vmem:[#allocation5 + $0x5a8] sm:$0xff]
    %v411 = vld [vmem:[#allocation5 + $0x5b0] sm:$0xff]
    %v412 = vld [vmem:[#allocation5 + $0x5b8] sm:$0xff]
    %v413 = vld [vmem:[#allocation5 + $0x5c0] sm:$0xff]
    %v414 = vld [vmem:[#allocation5 + $0x5c8] sm:$0xff]
    %v415 = vld [vmem:[#allocation5 + $0x5d0] sm:$0xff]
    %v416 = vld [vmem:[#allocation5 + $0x5d8] sm:$0xff]
    %v417 = vld [vmem:[#allocation5 + $0x5e0] sm:$0xff]
    %v418 = vld [vmem:[#allocation5 + $0x5e8] sm:$0xff]
    %v419 = vld [vmem:[#allocation5 + $0x5f0] sm:$0xff]
    %v420 = vld [vmem:[#allocation5 + $0x5f8] sm:$0xff]
    %v421 = vld [vmem:[#allocation5 + $0x600] sm:$0xff]
    %v422 = vld [vmem:[#allocation5 + $0x608] sm:$0xff]
    %v423 = vld [vmem:[#allocation5 + $0x610] sm:$0xff]
    %v424 = vld [vmem:[#allocation5 + $0x618] sm:$0xff]
    %v425 = vld [vmem:[#allocation5 + $0x620] sm:$0xff]
    %v426 = vld [vmem:[#allocation5 + $0x628] sm:$0xff]
    %v427 = vld [vmem:[#allocation5 + $0x630] sm:$0xff]
    %v428 = vld [vmem:[#allocation5 + $0x638] sm:$0xff]
    %v429 = vld [vmem:[#allocation5 + $0x640] sm:$0xff]
    %v430 = vld [vmem:[#allocation5 + $0x648] sm:$0xff]
    %v431 = vld [vmem:[#allocation5 + $0x650] sm:$0xff]
    %v432 = vld [vmem:[#allocation5 + $0x658] sm:$0xff]
    %v433 = vld [vmem:[#allocation5 + $0x660] sm:$0xff]
    %v434 = vld [vmem:[#allocation5 + $0x668] sm:$0xff]
    %v435 = vld [vmem:[#allocation5 + $0x670] sm:$0xff]
    %v436 = vld [vmem:[#allocation5 + $0x678] sm:$0xff]
    %v437 = vld [vmem:[#allocation5 + $0x680] sm:$0xff]
    %v438 = vld [vmem:[#allocation5 + $0x688] sm:$0xff]
    %v439 = vld [vmem:[#allocation5 + $0x690] sm:$0xff]
    %v440 = vld [vmem:[#allocation5 + $0x698] sm:$0xff]
    %v441 = vld [vmem:[#allocation5 + $0x6a0] sm:$0xff]
    %v442 = vld [vmem:[#allocation5 + $0x6a8] sm:$0xff]
    %v443 = vld [vmem:[#allocation5 + $0x6b0] sm:$0xff]
    %v444 = vld [vmem:[#allocation5 + $0x6b8] sm:$0xff]
    %v445 = vld [vmem:[#allocation5 + $0x6c0] sm:$0xff]
    %v446 = vld [vmem:[#allocation5 + $0x6c8] sm:$0xff]
    %v447 = vld [vmem:[#allocation5 + $0x6d0] sm:$0xff]
    %v448 = vld [vmem:[#allocation5 + $0x6d8] sm:$0xff]
    %v449 = vld [vmem:[#allocation5 + $0x6e0] sm:$0xff]
    %v450 = vld [vmem:[#allocation5 + $0x6e8] sm:$0xff]
    %v451 = vld [vmem:[#allocation5 + $0x6f0] sm:$0xff]
    %v452 = vld [vmem:[#allocation5 + $0x6f8] sm:$0xff]
    %v453 = vld [vmem:[#allocation5 + $0x700] sm:$0xff]
    %v454 = vld [vmem:[#allocation5 + $0x708] sm:$0xff]
    %v455 = vld [vmem:[#allocation5 + $0x710] sm:$0xff]
    %v456 = vld [vmem:[#allocation5 + $0x718] sm:$0xff]
    %v457 = vld [vmem:[#allocation5 + $0x720] sm:$0xff]
    %v458 = vld [vmem:[#allocation5 + $0x728] sm:$0xff]
    %v459 = vld [vmem:[#allocation5 + $0x730] sm:$0xff]
    %v460 = vld [vmem:[#allocation5 + $0x738] sm:$0xff]
    %v461 = vld [vmem:[#allocation5 + $0x740] sm:$0xff]
    %v462 = vld [vmem:[#allocation5 + $0x748] sm:$0xff]
    %v463 = vld [vmem:[#allocation5 + $0x750] sm:$0xff]
    %v464 = vld [vmem:[#allocation5 + $0x758] sm:$0xff]
    %v465 = vld [vmem:[#allocation5 + $0x760] sm:$0xff]
    %v466 = vld [vmem:[#allocation5 + $0x768] sm:$0xff]
    %v467 = vld [vmem:[#allocation5 + $0x770] sm:$0xff]
    %v468 = vld [vmem:[#allocation5 + $0x778] sm:$0xff]
    %v469 = vld [vmem:[#allocation5 + $0x780] sm:$0xff]
    %v470 = vld [vmem:[#allocation5 + $0x788] sm:$0xff]
    %v471 = vld [vmem:[#allocation5 + $0x790] sm:$0xff]
    %v472 = vld [vmem:[#allocation5 + $0x798] sm:$0xff]
    %v473 = vld [vmem:[#allocation5 + $0x7a0] sm:$0xff]
    %v474 = vld [vmem:[#allocation5 + $0x7a8] sm:$0xff]
    %v475 = vld [vmem:[#allocation5 + $0x7b0] sm:$0xff]
    %v476 = vld [vmem:[#allocation5 + $0x7b8] sm:$0xff]
    %v477 = vld [vmem:[#allocation5 + $0x7c0] sm:$0xff]
    %v478 = vld [vmem:[#allocation5 + $0x7c8] sm:$0xff]
    %v479 = vld [vmem:[#allocation5 + $0x7d0] sm:$0xff]
    %v480 = vld [vmem:[#allocation5 + $0x7d8] sm:$0xff]
    %v481 = vld [vmem:[#allocation5 + $0x7e0] sm:$0xff]
    %v482 = vld [vmem:[#allocation5 + $0x7e8] sm:$0xff]
    %v483 = vld [vmem:[#allocation5 + $0x7f0] sm:$0xff]
    %v484 = vld [vmem:[#allocation5 + $0x7f8] sm:$0xff]
    %v485 = vld [vmem:[#allocation5 + $0x800] sm:$0xff]
    %v486 = vld [vmem:[#allocation5 + $0x808] sm:$0xff]
    %v487 = vld [vmem:[#allocation5 + $0x810] sm:$0xff]
    %v488 = vld [vmem:[#allocation5 + $0x818] sm:$0xff]
    %v489 = vld [vmem:[#allocation5 + $0x820] sm:$0xff]
    %v490 = vld [vmem:[#allocation5 + $0x828] sm:$0xff]
    %v491 = vld [vmem:[#allocation5 + $0x830] sm:$0xff]
    %v492 = vld [vmem:[#allocation5 + $0x838] sm:$0xff]
    %v493 = vld [vmem:[#allocation5 + $0x840] sm:$0xff]
    %v494 = vld [vmem:[#allocation5 + $0x848] sm:$0xff]
    %v495 = vld [vmem:[#allocation5 + $0x850] sm:$0xff]
    %v496 = vld [vmem:[#allocation5 + $0x858] sm:$0xff]
    %v497 = vld [vmem:[#allocation5 + $0x860] sm:$0xff]
    %v498 = vld [vmem:[#allocation5 + $0x868] sm:$0xff]
    %v499 = vld [vmem:[#allocation5 + $0x870] sm:$0xff]
    %v500 = vld [vmem:[#allocation5 + $0x878] sm:$0xff]
    %v501 = vld [vmem:[#allocation5 + $0x880] sm:$0xff]
    %v502 = vld [vmem:[#allocation5 + $0x888] sm:$0xff]
    %v503 = vld [vmem:[#allocation5 + $0x890] sm:$0xff]
    %v504 = vld [vmem:[#allocation5 + $0x898] sm:$0xff]
    %v505 = vld [vmem:[#allocation5 + $0x8a0] sm:$0xff]
    %v506 = vld [vmem:[#allocation5 + $0x8a8] sm:$0xff]
    %v507 = vld [vmem:[#allocation5 + $0x8b0] sm:$0xff]
    %v508 = vld [vmem:[#allocation5 + $0x8b8] sm:$0xff]
    %v509 = vld [vmem:[#allocation5 + $0x8c0] sm:$0xff]
    %v510 = vld [vmem:[#allocation5 + $0x8c8] sm:$0xff]
    %v511 = vld [vmem:[#allocation5 + $0x8d0] sm:$0xff]
    %v512 = vld [vmem:[#allocation5 + $0x8d8] sm:$0xff]
    %v513 = vld [vmem:[#allocation5 + $0x8e0] sm:$0xff]
    %v514 = vld [vmem:[#allocation5 + $0x8e8] sm:$0xff]
    %v515 = vld [vmem:[#allocation5 + $0x8f0] sm:$0xff]
    %v516 = vld [vmem:[#allocation5 + $0x8f8] sm:$0xff]
    %v517 = vld [vmem:[#allocation5 + $0x900] sm:$0xff]
    %v518 = vld [vmem:[#allocation5 + $0x908] sm:$0xff]
    %v519 = vld [vmem:[#allocation5 + $0x910] sm:$0xff]
    %v520 = vld [vmem:[#allocation5 + $0x918] sm:$0xff]
    %v521 = vld [vmem:[#allocation5 + $0x920] sm:$0xff]
    %v522 = vld [vmem:[#allocation5 + $0x928] sm:$0xff]
    %v523 = vld [vmem:[#allocation5 + $0x930] sm:$0xff]
    %v524 = vld [vmem:[#allocation5 + $0x938] sm:$0xff]
    %v525 = vld [vmem:[#allocation5 + $0x940] sm:$0xff]
    %v526 = vld [vmem:[#allocation5 + $0x948] sm:$0xff]
    %v527 = vld [vmem:[#allocation5 + $0x950] sm:$0xff]
    %v528 = vld [vmem:[#allocation5 + $0x958] sm:$0xff]
    %v529 = vld [vmem:[#allocation5 + $0x960] sm:$0xff]
    %v530 = vld [vmem:[#allocation5 + $0x968] sm:$0xff]
    %v531 = vld [vmem:[#allocation5 + $0x970] sm:$0xff]
    %v532 = vld [vmem:[#allocation5 + $0x978] sm:$0xff]
    %v533 = vld [vmem:[#allocation5 + $0x980] sm:$0xff]
    %v534 = vld [vmem:[#allocation5 + $0x988] sm:$0xff]
    %v535 = vld [vmem:[#allocation5 + $0x990] sm:$0xff]
    %v536 = vld [vmem:[#allocation5 + $0x998] sm:$0xff]
    %v537 = vld [vmem:[#allocation5 + $0x9a0] sm:$0xff]
    %v538 = vld [vmem:[#allocation5 + $0x9a8] sm:$0xff]
    %v539 = vld [vmem:[#allocation5 + $0x9b0] sm:$0xff]
    %v540 = vld [vmem:[#allocation5 + $0x9b8] sm:$0xff]
    %v541 = vld [vmem:[#allocation5 + $0x9c0] sm:$0xff]
    %v542 = vld [vmem:[#allocation5 + $0x9c8] sm:$0xff]
    %v543 = vld [vmem:[#allocation5 + $0x9d0] sm:$0xff]
    %v544 = vld [vmem:[#allocation5 + $0x9d8] sm:$0xff]
    %v545 = vld [vmem:[#allocation5 + $0x9e0] sm:$0xff]
    %v546 = vld [vmem:[#allocation5 + $0x9e8] sm:$0xff]
    %v547 = vld [vmem:[#allocation5 + $0x9f0] sm:$0xff]
    %v548 = vld [vmem:[#allocation5 + $0x9f8] sm:$0xff]
    %v549 = vld [vmem:[#allocation5 + $0xa00] sm:$0xff]
    %v550 = vld [vmem:[#allocation5 + $0xa08] sm:$0xff]
    %v551 = vld [vmem:[#allocation5 + $0xa10] sm:$0xff]
    %v552 = vld [vmem:[#allocation5 + $0xa18] sm:$0xff]
    %v553 = vld [vmem:[#allocation5 + $0xa20] sm:$0xff]
    %v554 = vld [vmem:[#allocation5 + $0xa28] sm:$0xff]
    %v555 = vld [vmem:[#allocation5 + $0xa30] sm:$0xff]
    %v556 = vld [vmem:[#allocation5 + $0xa38] sm:$0xff]
    %v557 = vld [vmem:[#allocation5 + $0xa40] sm:$0xff]
    %v558 = vld [vmem:[#allocation5 + $0xa48] sm:$0xff]
    %v559 = vld [vmem:[#allocation5 + $0xa50] sm:$0xff]
    %v560 = vld [vmem:[#allocation5 + $0xa58] sm:$0xff]
    %v561 = vld [vmem:[#allocation5 + $0xa60] sm:$0xff]
    %v562 = vld [vmem:[#allocation5 + $0xa68] sm:$0xff]
    %v563 = vld [vmem:[#allocation5 + $0xa70] sm:$0xff]
    %v564 = vld [vmem:[#allocation5 + $0xa78] sm:$0xff]
    %v565 = vld [vmem:[#allocation5 + $0xa80] sm:$0xff]
    %v566 = vld [vmem:[#allocation5 + $0xa88] sm:$0xff]
    %v567 = vld [vmem:[#allocation5 + $0xa90] sm:$0xff]
    %v568 = vld [vmem:[#allocation5 + $0xa98] sm:$0xff]
    %v569 = vld [vmem:[#allocation5 + $0xaa0] sm:$0xff]
    %v570 = vld [vmem:[#allocation5 + $0xaa8] sm:$0xff]
    %v571 = vld [vmem:[#allocation5 + $0xab0] sm:$0xff]
    %v572 = vld [vmem:[#allocation5 + $0xab8] sm:$0xff]
    %v573 = vld [vmem:[#allocation5 + $0xac0] sm:$0xff]
    %v574 = vld [vmem:[#allocation5 + $0xac8] sm:$0xff]
    %v575 = vld [vmem:[#allocation5 + $0xad0] sm:$0xff]
    %v576 = vld [vmem:[#allocation5 + $0xad8] sm:$0xff]
    %v577 = vld [vmem:[#allocation5 + $0xae0] sm:$0xff]
    %v578 = vld [vmem:[#allocation5 + $0xae8] sm:$0xff]
    %v579 = vld [vmem:[#allocation5 + $0xaf0] sm:$0xff]
    %v580 = vld [vmem:[#allocation5 + $0xaf8] sm:$0xff]
    %v581 = vld [vmem:[#allocation5 + $0xb00] sm:$0xff]
    %v582 = vld [vmem:[#allocation5 + $0xb08] sm:$0xff]
    %v583 = vld [vmem:[#allocation5 + $0xb10] sm:$0xff]
    %v584 = vld [vmem:[#allocation5 + $0xb18] sm:$0xff]
    %v585 = vld [vmem:[#allocation5 + $0xb20] sm:$0xff]
    %v586 = vld [vmem:[#allocation5 + $0xb28] sm:$0xff]
    %v587 = vld [vmem:[#allocation5 + $0xb30] sm:$0xff]
    %v588 = vld [vmem:[#allocation5 + $0xb38] sm:$0xff]
    %v589 = vld [vmem:[#allocation5 + $0xb40] sm:$0xff]
    %v590 = vld [vmem:[#allocation5 + $0xb48] sm:$0xff]
    %v591 = vld [vmem:[#allocation5 + $0xb50] sm:$0xff]
    %v592 = vld [vmem:[#allocation5 + $0xb58] sm:$0xff]
    %v593 = vld [vmem:[#allocation5 + $0xb60] sm:$0xff]
    %v594 = vld [vmem:[#allocation5 + $0xb68] sm:$0xff]
    %v595 = vld [vmem:[#allocation5 + $0xb70] sm:$0xff]
    %v596 = vld [vmem:[#allocation5 + $0xb78] sm:$0xff]
    %v597 = vld [vmem:[#allocation5 + $0xb80] sm:$0xff]
    %v598 = vld [vmem:[#allocation5 + $0xb88] sm:$0xff]
    %v599 = vld [vmem:[#allocation5 + $0xb90] sm:$0xff]
    %v600 = vld [vmem:[#allocation5 + $0xb98] sm:$0xff]
    %v601 = vld [vmem:[#allocation5 + $0xba0] sm:$0xff]
    %v602 = vld [vmem:[#allocation5 + $0xba8] sm:$0xff]
    %v603 = vld [vmem:[#allocation5 + $0xbb0] sm:$0xff]
    %v604 = vld [vmem:[#allocation5 + $0xbb8] sm:$0xff]
    %v605 = vld [vmem:[#allocation5 + $0xbc0] sm:$0xff]
    %v606 = vld [vmem:[#allocation5 + $0xbc8] sm:$0xff]
    %v607 = vld [vmem:[#allocation5 + $0xbd0] sm:$0xff]
    %v608 = vld [vmem:[#allocation5 + $0xbd8] sm:$0xff]
    %v609 = vld [vmem:[#allocation5 + $0xbe0] sm:$0xff]
    %v610 = vld [vmem:[#allocation5 + $0xbe8] sm:$0xff]
    %v611 = vld [vmem:[#allocation5 + $0xbf0] sm:$0xff]
    %v612 = vld [vmem:[#allocation5 + $0xbf8] sm:$0xff]
    %v613 = vld [vmem:[#allocation7] sm:$0xff]
    %v614 = vld [vmem:[#allocation7 + $0x8] sm:$0xf]
    %v617 = vlaneseq
    %v618 = vshrl.u32 %v617, 7
    %v619 = vsub.s32 0, %v618
    %v620 = vrot.slane %v613, %v619
    %v621 = vlaneseq
    %v622 = vshrl.u32 %v621, 7
    %v623 = vsub.s32 1, %v622
    %v624 = vrot.slane %v613, %v623
    %v625 = vlaneseq
    %v626 = vshrl.u32 %v625, 7
    %v627 = vsub.s32 2, %v626
    %v628 = vrot.slane %v613, %v627
    %v629 = vlaneseq
    %v630 = vshrl.u32 %v629, 7
    %v631 = vsub.s32 3, %v630
    %v632 = vrot.slane %v613, %v631
    %v633 = vlaneseq
    %v634 = vshrl.u32 %v633, 7
    %v635 = vsub.s32 4, %v634
    %v636 = vrot.slane %v613, %v635
    %v637 = vlaneseq
    %v638 = vshrl.u32 %v637, 7
    %v639 = vsub.s32 5, %v638
    %v640 = vrot.slane %v613, %v639
    %v641 = vlaneseq
    %v642 = vshrl.u32 %v641, 7
    %v643 = vsub.s32 6, %v642
    %v644 = vrot.slane %v613, %v643
    %v645 = vlaneseq
    %v646 = vshrl.u32 %v645, 7
    %v647 = vsub.s32 7, %v646
    %v648 = vrot.slane %v613, %v647
    %v649 = vlaneseq
    %v650 = vshrl.u32 %v649, 7
    %v651 = vsub.s32 0, %v650
    %v652 = vrot.slane %v614, %v651
    %v653 = vlaneseq
    %v654 = vshrl.u32 %v653, 7
    %v655 = vsub.s32 1, %v654
    %v656 = vrot.slane %v614, %v655
    %v657 = vlaneseq
    %v658 = vshrl.u32 %v657, 7
    %v659 = vsub.s32 2, %v658
    %v660 = vrot.slane %v614, %v659
    %v661 = vlaneseq
    %v662 = vshrl.u32 %v661, 7
    %v663 = vsub.s32 3, %v662
    %v664 = vrot.slane %v614, %v663
    %677 = vmatprep.subr.mxu0 %v230
    %678 = vmatpush1.msra.mxu0 %v229
    %679 = vmatprep.subr.mxu0 %v242
    %680 = vmatpush1.msra.mxu0 %v241
    %681 = vmatprep.subr.mxu0 %v254
    %682 = vmatpush1.msra.mxu0 %v253
    %683 = vmatprep.subr.mxu0 %v266
    %684 = vmatpush1.msra.mxu0 %v265
    %685 = vmatprep.subr.mxu0 %v278
    %686 = vmatpush1.msra.mxu0 %v277
    %687 = vmatprep.subr.mxu0 %v290
    %688 = vmatpush1.msra.mxu0 %v289
    %689 = vmatprep.subr.mxu0 %v302
    %690 = vmatpush1.msra.mxu0 %v301
    %691 = vmatprep.subr.mxu0 %v314
    %692 = vmatpush1.msra.mxu0 %v313
    %693 = vmatprep.subr.mxu0 %v326
    %694 = vmatpush1.msra.mxu0 %v325
    %695 = vmatprep.subr.mxu0 %v338
    %696 = vmatpush1.msra.mxu0 %v337
    %697 = vmatprep.subr.mxu0 %v350
    %698 = vmatpush1.msra.mxu0 %v349
    %699 = vmatprep.subr.mxu0 %v362
    %700 = vmatpush1.msra.mxu0 %v361
    %701 = vmatprep.subr.mxu0 %v374
    %702 = vmatpush1.msra.mxu0 %v373
    %703 = vmatprep.subr.mxu0 %v386
    %704 = vmatpush1.msra.mxu0 %v385
    %705 = vmatprep.subr.mxu0 %v398
    %706 = vmatpush1.msra.mxu0 %v397
    %707 = vmatprep.subr.mxu0 %v410
    %708 = vmatpush1.msra.mxu0 %v409
    %709 = vmatprep.subr.mxu0 %v422
    %710 = vmatpush1.msra.mxu0 %v421
    %711 = vmatprep.subr.mxu0 %v434
    %712 = vmatpush1.msra.mxu0 %v433
    %713 = vmatprep.subr.mxu0 %v446
    %714 = vmatpush1.msra.mxu0 %v445
    %715 = vmatprep.subr.mxu0 %v458
    %716 = vmatpush1.msra.mxu0 %v457
    %717 = vmatprep.subr.mxu0 %v470
    %718 = vmatpush1.msra.mxu0 %v469
    %719 = vmatprep.subr.mxu0 %v482
    %720 = vmatpush1.msra.mxu0 %v481
    %721 = vmatprep.subr.mxu0 %v494
    %722 = vmatpush1.msra.mxu0 %v493
    %723 = vmatprep.subr.mxu0 %v506
    %724 = vmatpush1.msra.mxu0 %v505
    %725 = vmatprep.subr.mxu0 %v518
    %726 = vmatpush1.msra.mxu0 %v517
    %727 = vmatprep.subr.mxu0 %v530
    %728 = vmatpush1.msra.mxu0 %v529
    %729 = vmatprep.subr.mxu0 %v542
    %730 = vmatpush1.msra.mxu0 %v541
    %731 = vmatprep.subr.mxu0 %v554
    %732 = vmatpush1.msra.mxu0 %v553
    %733 = vmatprep.subr.mxu0 %v566
    %734 = vmatpush1.msra.mxu0 %v565
    %735 = vmatprep.subr.mxu0 %v578
    %736 = vmatpush1.msra.mxu0 %v577
    %737 = vmatprep.subr.mxu0 %v590
    %738 = vmatpush1.msra.mxu0 %v589
    %739 = vmatprep.subr.mxu0 %v602
    %740 = vmatpush1.msra.mxu0 %v601
    %741 = vmatprep.mubr.f32.mxu0 %v214
    %742 = vmatmul.mubr.f32.gmra.mrb[0].mxu0 %v213
    %v743 = vpop.f32.mrb[0].mxu0
    %v744 = vadd.f32 %v620, %v743
    %v745 = vpop.f32.mrb[0].mxu0
    %v746 = vadd.f32 %v624, %v745
    %747 = vmatprep.mubr.f32.mxu0 %v216
    %748 = vmatmul.mubr.f32.gmra.mrb[0].mxu0 %v215
    %v749 = vpop.f32.mrb[0].mxu0
    %v750 = vadd.f32 %v620, %v749
    %v751 = vpop.f32.mrb[0].mxu0
    %v752 = vadd.f32 %v624, %v751
    %753 = vmatprep.mubr.f32.mxu0 %v218
    %754 = vmatmul.mubr.f32.gmra.mrb[0].mxu0 %v217
    %v755 = vpop.f32.mrb[0].mxu0
    %v756 = vadd.f32 %v620, %v755
    %v757 = vpop.f32.mrb[0].mxu0
    %v758 = vadd.f32 %v624, %v757
    %759 = vmatprep.mubr.f32.mxu0 %v220
    %760 = vmatmul.mubr.f32.gmra.mrb[0].mxu0 %v219
    %v761 = vpop.f32.mrb[0].mxu0
    %v762 = vadd.f32 %v620, %v761
    %v763 = vpop.f32.mrb[0].mxu0
    %v764 = vadd.f32 %v624, %v763
    %765 = vmatprep.mubr.f32.mxu0 %v222
    %766 = vmatmul.mubr.f32.gmra.mrb[0].mxu0 %v221
    %v767 = vpop.f32.mrb[0].mxu0
    %v768 = vadd.f32 %v620, %v767
    %v769 = vpop.f32.mrb[0].mxu0
    %v770 = vadd.f32 %v624, %v769
    %771 = vmatprep.mubr.f32.mxu0 %v224
    %772 = vmatmul.mubr.f32.gmra.mrb[0].mxu0 %v223
    %v773 = vpop.f32.mrb[0].mxu0
    %v774 = vadd.f32 %v620, %v773
    %v775 = vpop.f32.mrb[0].mxu0
    %v776 = vadd.f32 %v624, %v775
    %777 = vmatprep.mubr.f32.mxu0 %v226
    %778 = vmatmul.mubr.f32.gmra.mrb[0].mxu0 %v225
    %v779 = vpop.f32.mrb[0].mxu0
    %v780 = vadd.f32 %v620, %v779
    %v781 = vpop.f32.mrb[0].mxu0
    %v782 = vadd.f32 %v624, %v781
    %783 = vmatprep.mubr.f32.mxu0 %v228
    %784 = vmatmul.mubr.f32.gmra.mrb[0].mxu0 %v227
    %v785 = vpop.f32.mrb[0].mxu0
    %v786 = vadd.f32 %v620, %v785
    %v787 = vpop.f32.mrb[0].mxu0
    %v788 = vadd.f32 %v624, %v787
    %789 = vdwg.mxu0
    %790 = vmatprep.subr.mxu0 %v232
    %791 = vmatpush1.msra.mxu0 %v231
    %792 = vmatprep.subr.mxu0 %v244
    %793 = vmatpush1.msra.mxu0 %v243
    %794 = vmatprep.subr.mxu0 %v256
    %795 = vmatpush1.msra.mxu0 %v255
    %796 = vmatprep.subr.mxu0 %v268
    %797 = vmatpush1.msra.mxu0 %v267
    %798 = vmatprep.subr.mxu0 %v280
    %799 = vmatpush1.msra.mxu0 %v279
    %800 = vmatprep.subr.mxu0 %v292
    %801 = vmatpush1.msra.mxu0 %v291
    %802 = vmatprep.subr.mxu0 %v304
    %803 = vmatpush1.msra.mxu0 %v303
    %804 = vmatprep.subr.mxu0 %v316
    %805 = vmatpush1.msra.mxu0 %v315
    %806 = vmatprep.subr.mxu0 %v328
    %807 = vmatpush1.msra.mxu0 %v327
    %808 = vmatprep.subr.mxu0 %v340
    %809 = vmatpush1.msra.mxu0 %v339
    %810 = vmatprep.subr.mxu0 %v352
    %811 = vmatpush1.msra.mxu0 %v351
    %812 = vmatprep.subr.mxu0 %v364
    %813 = vmatpush1.msra.mxu0 %v363
    %814 = vmatprep.subr.mxu0 %v376
    %815 = vmatpush1.msra.mxu0 %v375
    %816 = vmatprep.subr.mxu0 %v388
    %817 = vmatpush1.msra.mxu0 %v387
    %818 = vmatprep.subr.mxu0 %v400
    %819 = vmatpush1.msra.mxu0 %v399
    %820 = vmatprep.subr.mxu0 %v412
    %821 = vmatpush1.msra.mxu0 %v411
    %822 = vmatprep.subr.mxu0 %v424
    %823 = vmatpush1.msra.mxu0 %v423
    %824 = vmatprep.subr.mxu0 %v436
    %825 = vmatpush1.msra.mxu0 %v435
    %826 = vmatprep.subr.mxu0 %v448
    %827 = vmatpush1.msra.mxu0 %v447
    %828 = vmatprep.subr.mxu0 %v460
    %829 = vmatpush1.msra.mxu0 %v459
    %830 = vmatprep.subr.mxu0 %v472
    %831 = vmatpush1.msra.mxu0 %v471
    %832 = vmatprep.subr.mxu0 %v484
    %833 = vmatpush1.msra.mxu0 %v483
    %834 = vmatprep.subr.mxu0 %v496
    %835 = vmatpush1.msra.mxu0 %v495
    %836 = vmatprep.subr.mxu0 %v508
    %837 = vmatpush1.msra.mxu0 %v507
    %838 = vmatprep.subr.mxu0 %v520
    %839 = vmatpush1.msra.mxu0 %v519
    %840 = vmatprep.subr.mxu0 %v532
    %841 = vmatpush1.msra.mxu0 %v531
    %842 = vmatprep.subr.mxu0 %v544
    %843 = vmatpush1.msra.mxu0 %v543
    %844 = vmatprep.subr.mxu0 %v556
    %845 = vmatpush1.msra.mxu0 %v555
    %846 = vmatprep.subr.mxu0 %v568
    %847 = vmatpush1.msra.mxu0 %v567
    %848 = vmatprep.subr.mxu0 %v580
    %849 = vmatpush1.msra.mxu0 %v579
    %850 = vmatprep.subr.mxu0 %v592
    %851 = vmatpush1.msra.mxu0 %v591
    %852 = vmatprep.subr.mxu0 %v604
    %853 = vmatpush1.msra.mxu0 %v603
    %854 = vmatprep.mubr.f32.mxu0 %v214
    %855 = vmatmul.mubr.f32.gmra.mrb[0].mxu0 %v213
    %v856 = vpop.f32.mrb[0].mxu0
    %v857 = vadd.f32 %v628, %v856
    %v858 = vpop.f32.mrb[0].mxu0
    %v859 = vadd.f32 %v632, %v858
    %860 = vmatprep.mubr.f32.mxu0 %v216
    %861 = vmatmul.mubr.f32.gmra.mrb[0].mxu0 %v215
    %v862 = vpop.f32.mrb[0].mxu0
    %v863 = vadd.f32 %v628, %v862
    %v864 = vpop.f32.mrb[0].mxu0
    %v865 = vadd.f32 %v632, %v864
    %866 = vmatprep.mubr.f32.mxu0 %v218
    %867 = vmatmul.mubr.f32.gmra.mrb[0].mxu0 %v217
    %v868 = vpop.f32.mrb[0].mxu0
    %v869 = vadd.f32 %v628, %v868
    %v870 = vpop.f32.mrb[0].mxu0
    %v871 = vadd.f32 %v632, %v870
    %872 = vmatprep.mubr.f32.mxu0 %v220
    %873 = vmatmul.mubr.f32.gmra.mrb[0].mxu0 %v219
    %v874 = vpop.f32.mrb[0].mxu0
    %v875 = vadd.f32 %v628, %v874
    %v876 = vpop.f32.mrb[0].mxu0
    %v877 = vadd.f32 %v632, %v876
    %878 = vmatprep.mubr.f32.mxu0 %v222
    %879 = vmatmul.mubr.f32.gmra.mrb[0].mxu0 %v221
    %v880 = vpop.f32.mrb[0].mxu0
    %v881 = vadd.f32 %v628, %v880
    %v882 = vpop.f32.mrb[0].mxu0
    %v883 = vadd.f32 %v632, %v882
    %884 = vmatprep.mubr.f32.mxu0 %v224
    %885 = vmatmul.mubr.f32.gmra.mrb[0].mxu0 %v223
    %v886 = vpop.f32.mrb[0].mxu0
    %v887 = vadd.f32 %v628, %v886
    %v888 = vpop.f32.mrb[0].mxu0
    %v889 = vadd.f32 %v632, %v888
    %890 = vmatprep.mubr.f32.mxu0 %v226
    %891 = vmatmul.mubr.f32.gmra.mrb[0].mxu0 %v225
    %v892 = vpop.f32.mrb[0].mxu0
    %v893 = vadd.f32 %v628, %v892
    %v894 = vpop.f32.mrb[0].mxu0
    %v895 = vadd.f32 %v632, %v894
    %896 = vmatprep.mubr.f32.mxu0 %v228
    %897 = vmatmul.mubr.f32.gmra.mrb[0].mxu0 %v227
    %v898 = vpop.f32.mrb[0].mxu0
    %v899 = vadd.f32 %v628, %v898
    %v900 = vpop.f32.mrb[0].mxu0
    %v901 = vadd.f32 %v632, %v900
    %902 = vdwg.mxu0
    %903 = vmatprep.subr.mxu0 %v234
    %904 = vmatpush1.msra.mxu0 %v233
    %905 = vmatprep.subr.mxu0 %v246
    %906 = vmatpush1.msra.mxu0 %v245
    %907 = vmatprep.subr.mxu0 %v258
    %908 = vmatpush1.msra.mxu0 %v257
    %909 = vmatprep.subr.mxu0 %v270
    %910 = vmatpush1.msra.mxu0 %v269
    %911 = vmatprep.subr.mxu0 %v282
    %912 = vmatpush1.msra.mxu0 %v281
    %913 = vmatprep.subr.mxu0 %v294
    %914 = vmatpush1.msra.mxu0 %v293
    %915 = vmatprep.subr.mxu0 %v306
    %916 = vmatpush1.msra.mxu0 %v305
    %917 = vmatprep.subr.mxu0 %v318
    %918 = vmatpush1.msra.mxu0 %v317
    %919 = vmatprep.subr.mxu0 %v330
    %920 = vmatpush1.msra.mxu0 %v329
    %921 = vmatprep.subr.mxu0 %v342
    %922 = vmatpush1.msra.mxu0 %v341
    %923 = vmatprep.subr.mxu0 %v354
    %924 = vmatpush1.msra.mxu0 %v353
    %925 = vmatprep.subr.mxu0 %v366
    %926 = vmatpush1.msra.mxu0 %v365
    %927 = vmatprep.subr.mxu0 %v378
    %928 = vmatpush1.msra.mxu0 %v377
    %929 = vmatprep.subr.mxu0 %v390
    %930 = vmatpush1.msra.mxu0 %v389
    %931 = vmatprep.subr.mxu0 %v402
    %932 = vmatpush1.msra.mxu0 %v401
    %933 = vmatprep.subr.mxu0 %v414
    %934 = vmatpush1.msra.mxu0 %v413
    %935 = vmatprep.subr.mxu0 %v426
    %936 = vmatpush1.msra.mxu0 %v425
    %937 = vmatprep.subr.mxu0 %v438
    %938 = vmatpush1.msra.mxu0 %v437
    %939 = vmatprep.subr.mxu0 %v450
    %940 = vmatpush1.msra.mxu0 %v449
    %941 = vmatprep.subr.mxu0 %v462
    %942 = vmatpush1.msra.mxu0 %v461
    %943 = vmatprep.subr.mxu0 %v474
    %944 = vmatpush1.msra.mxu0 %v473
    %945 = vmatprep.subr.mxu0 %v486
    %946 = vmatpush1.msra.mxu0 %v485
    %947 = vmatprep.subr.mxu0 %v498
    %948 = vmatpush1.msra.mxu0 %v497
    %949 = vmatprep.subr.mxu0 %v510
    %950 = vmatpush1.msra.mxu0 %v509
    %951 = vmatprep.subr.mxu0 %v522
    %952 = vmatpush1.msra.mxu0 %v521
    %953 = vmatprep.subr.mxu0 %v534
    %954 = vmatpush1.msra.mxu0 %v533
    %955 = vmatprep.subr.mxu0 %v546
    %956 = vmatpush1.msra.mxu0 %v545
    %957 = vmatprep.subr.mxu0 %v558
    %958 = vmatpush1.msra.mxu0 %v557
    %959 = vmatprep.subr.mxu0 %v570
    %960 = vmatpush1.msra.mxu0 %v569
    %961 = vmatprep.subr.mxu0 %v582
    %962 = vmatpush1.msra.mxu0 %v581
    %963 = vmatprep.subr.mxu0 %v594
    %964 = vmatpush1.msra.mxu0 %v593
    %965 = vmatprep.subr.mxu0 %v606
    %966 = vmatpush1.msra.mxu0 %v605
    %967 = vmatprep.mubr.f32.mxu0 %v214
    %968 = vmatmul.mubr.f32.gmra.mrb[0].mxu0 %v213
    %v969 = vpop.f32.mrb[0].mxu0
    %v970 = vadd.f32 %v636, %v969
    %v971 = vpop.f32.mrb[0].mxu0
    %v972 = vadd.f32 %v640, %v971
    %973 = vmatprep.mubr.f32.mxu0 %v216
    %974 = vmatmul.mubr.f32.gmra.mrb[0].mxu0 %v215
    %v975 = vpop.f32.mrb[0].mxu0
    %v976 = vadd.f32 %v636, %v975
    %v977 = vpop.f32.mrb[0].mxu0
    %v978 = vadd.f32 %v640, %v977
    %979 = vmatprep.mubr.f32.mxu0 %v218
    %980 = vmatmul.mubr.f32.gmra.mrb[0].mxu0 %v217
    %v981 = vpop.f32.mrb[0].mxu0
    %v982 = vadd.f32 %v636, %v981
    %v983 = vpop.f32.mrb[0].mxu0
    %v984 = vadd.f32 %v640, %v983
    %985 = vmatprep.mubr.f32.mxu0 %v220
    %986 = vmatmul.mubr.f32.gmra.mrb[0].mxu0 %v219
    %v987 = vpop.f32.mrb[0].mxu0
    %v988 = vadd.f32 %v636, %v987
    %v989 = vpop.f32.mrb[0].mxu0
    %v990 = vadd.f32 %v640, %v989
    %991 = vmatprep.mubr.f32.mxu0 %v222
    %992 = vmatmul.mubr.f32.gmra.mrb[0].mxu0 %v221
    %v993 = vpop.f32.mrb[0].mxu0
    %v994 = vadd.f32 %v636, %v993
    %v995 = vpop.f32.mrb[0].mxu0
    %v996 = vadd.f32 %v640, %v995
    %997 = vmatprep.mubr.f32.mxu0 %v224
    %998 = vmatmul.mubr.f32.gmra.mrb[0].mxu0 %v223
    %v999 = vpop.f32.mrb[0].mxu0
    %v1000 = vadd.f32 %v636, %v999
    %v1001 = vpop.f32.mrb[0].mxu0
    %v1002 = vadd.f32 %v640, %v1001
    %1003 = vmatprep.mubr.f32.mxu0 %v226
    %1004 = vmatmul.mubr.f32.gmra.mrb[0].mxu0 %v225
    %v1005 = vpop.f32.mrb[0].mxu0
    %v1006 = vadd.f32 %v636, %v1005
    %v1007 = vpop.f32.mrb[0].mxu0
    %v1008 = vadd.f32 %v640, %v1007
    %1009 = vmatprep.mubr.f32.mxu0 %v228
    %1010 = vmatmul.mubr.f32.gmra.mrb[0].mxu0 %v227
    %v1011 = vpop.f32.mrb[0].mxu0
    %v1012 = vadd.f32 %v636, %v1011
    %v1013 = vpop.f32.mrb[0].mxu0
    %v1014 = vadd.f32 %v640, %v1013
    %1015 = vdwg.mxu0
    %1016 = vmatprep.subr.mxu0 %v236
    %1017 = vmatpush1.msra.mxu0 %v235
    %1018 = vmatprep.subr.mxu0 %v248
    %1019 = vmatpush1.msra.mxu0 %v247
    %1020 = vmatprep.subr.mxu0 %v260
    %1021 = vmatpush1.msra.mxu0 %v259
    %1022 = vmatprep.subr.mxu0 %v272
    %1023 = vmatpush1.msra.mxu0 %v271
    %1024 = vmatprep.subr.mxu0 %v284
    %1025 = vmatpush1.msra.mxu0 %v283
    %1026 = vmatprep.subr.mxu0 %v296
    %1027 = vmatpush1.msra.mxu0 %v295
    %1028 = vmatprep.subr.mxu0 %v308
    %1029 = vmatpush1.msra.mxu0 %v307
    %1030 = vmatprep.subr.mxu0 %v320
    %1031 = vmatpush1.msra.mxu0 %v319
    %1032 = vmatprep.subr.mxu0 %v332
    %1033 = vmatpush1.msra.mxu0 %v331
    %1034 = vmatprep.subr.mxu0 %v344
    %1035 = vmatpush1.msra.mxu0 %v343
    %1036 = vmatprep.subr.mxu0 %v356
    %1037 = vmatpush1.msra.mxu0 %v355
    %1038 = vmatprep.subr.mxu0 %v368
    %1039 = vmatpush1.msra.mxu0 %v367
    %1040 = vmatprep.subr.mxu0 %v380
    %1041 = vmatpush1.msra.mxu0 %v379
    %1042 = vmatprep.subr.mxu0 %v392
    %1043 = vmatpush1.msra.mxu0 %v391
    %1044 = vmatprep.subr.mxu0 %v404
    %1045 = vmatpush1.msra.mxu0 %v403
    %1046 = vmatprep.subr.mxu0 %v416
    %1047 = vmatpush1.msra.mxu0 %v415
    %1048 = vmatprep.subr.mxu0 %v428
    %1049 = vmatpush1.msra.mxu0 %v427
    %1050 = vmatprep.subr.mxu0 %v440
    %1051 = vmatpush1.msra.mxu0 %v439
    %1052 = vmatprep.subr.mxu0 %v452
    %1053 = vmatpush1.msra.mxu0 %v451
    %1054 = vmatprep.subr.mxu0 %v464
    %1055 = vmatpush1.msra.mxu0 %v463
    %1056 = vmatprep.subr.mxu0 %v476
    %1057 = vmatpush1.msra.mxu0 %v475
    %1058 = vmatprep.subr.mxu0 %v488
    %1059 = vmatpush1.msra.mxu0 %v487
    %1060 = vmatprep.subr.mxu0 %v500
    %1061 = vmatpush1.msra.mxu0 %v499
    %1062 = vmatprep.subr.mxu0 %v512
    %1063 = vmatpush1.msra.mxu0 %v511
    %1064 = vmatprep.subr.mxu0 %v524
    %1065 = vmatpush1.msra.mxu0 %v523
    %1066 = vmatprep.subr.mxu0 %v536
    %1067 = vmatpush1.msra.mxu0 %v535
    %1068 = vmatprep.subr.mxu0 %v548
    %1069 = vmatpush1.msra.mxu0 %v547
    %1070 = vmatprep.subr.mxu0 %v560
    %1071 = vmatpush1.msra.mxu0 %v559
    %1072 = vmatprep.subr.mxu0 %v572
    %1073 = vmatpush1.msra.mxu0 %v571
    %1074 = vmatprep.subr.mxu0 %v584
    %1075 = vmatpush1.msra.mxu0 %v583
    %1076 = vmatprep.subr.mxu0 %v596
    %1077 = vmatpush1.msra.mxu0 %v595
    %1078 = vmatprep.subr.mxu0 %v608
    %1079 = vmatpush1.msra.mxu0 %v607
    %1080 = vmatprep.mubr.f32.mxu0 %v214
    %1081 = vmatmul.mubr.f32.gmra.mrb[0].mxu0 %v213
    %v1082 = vpop.f32.mrb[0].mxu0
    %v1083 = vadd.f32 %v644, %v1082
    %v1084 = vpop.f32.mrb[0].mxu0
    %v1085 = vadd.f32 %v648, %v1084
    %1086 = vmatprep.mubr.f32.mxu0 %v216
    %1087 = vmatmul.mubr.f32.gmra.mrb[0].mxu0 %v215
    %v1088 = vpop.f32.mrb[0].mxu0
    %v1089 = vadd.f32 %v644, %v1088
    %v1090 = vpop.f32.mrb[0].mxu0
    %v1091 = vadd.f32 %v648, %v1090
    %1092 = vmatprep.mubr.f32.mxu0 %v218
    %1093 = vmatmul.mubr.f32.gmra.mrb[0].mxu0 %v217
    %v1094 = vpop.f32.mrb[0].mxu0
    %v1095 = vadd.f32 %v644, %v1094
    %v1096 = vpop.f32.mrb[0].mxu0
    %v1097 = vadd.f32 %v648, %v1096
    %1098 = vmatprep.mubr.f32.mxu0 %v220
    %1099 = vmatmul.mubr.f32.gmra.mrb[0].mxu0 %v219
    %v1100 = vpop.f32.mrb[0].mxu0
    %v1101 = vadd.f32 %v644, %v1100
    %v1102 = vpop.f32.mrb[0].mxu0
    %v1103 = vadd.f32 %v648, %v1102
    %1104 = vmatprep.mubr.f32.mxu0 %v222
    %1105 = vmatmul.mubr.f32.gmra.mrb[0].mxu0 %v221
    %v1106 = vpop.f32.mrb[0].mxu0
    %v1107 = vadd.f32 %v644, %v1106
    %v1108 = vpop.f32.mrb[0].mxu0
    %v1109 = vadd.f32 %v648, %v1108
    %1110 = vmatprep.mubr.f32.mxu0 %v224
    %1111 = vmatmul.mubr.f32.gmra.mrb[0].mxu0 %v223
    %v1112 = vpop.f32.mrb[0].mxu0
    %v1113 = vadd.f32 %v644, %v1112
    %v1114 = vpop.f32.mrb[0].mxu0
    %v1115 = vadd.f32 %v648, %v1114
    %1116 = vmatprep.mubr.f32.mxu0 %v226
    %1117 = vmatmul.mubr.f32.gmra.mrb[0].mxu0 %v225
    %v1118 = vpop.f32.mrb[0].mxu0
    %v1119 = vadd.f32 %v644, %v1118
    %v1120 = vpop.f32.mrb[0].mxu0
    %v1121 = vadd.f32 %v648, %v1120
    %1122 = vmatprep.mubr.f32.mxu0 %v228
    %1123 = vmatmul.mubr.f32.gmra.mrb[0].mxu0 %v227
    %v1124 = vpop.f32.mrb[0].mxu0
    %v1125 = vadd.f32 %v644, %v1124
    %v1126 = vpop.f32.mrb[0].mxu0
    %v1127 = vadd.f32 %v648, %v1126
    %1128 = vdwg.mxu0
    %1129 = vmatprep.subr.mxu0 %v238
    %1130 = vmatpush1.msra.mxu0 %v237
    %1131 = vmatprep.subr.mxu0 %v250
    %1132 = vmatpush1.msra.mxu0 %v249
    %1133 = vmatprep.subr.mxu0 %v262
    %1134 = vmatpush1.msra.mxu0 %v261
    %1135 = vmatprep.subr.mxu0 %v274
    %1136 = vmatpush1.msra.mxu0 %v273
    %1137 = vmatprep.subr.mxu0 %v286
    %1138 = vmatpush1.msra.mxu0 %v285
    %1139 = vmatprep.subr.mxu0 %v298
    %1140 = vmatpush1.msra.mxu0 %v297
    %1141 = vmatprep.subr.mxu0 %v310
    %1142 = vmatpush1.msra.mxu0 %v309
    %1143 = vmatprep.subr.mxu0 %v322
    %1144 = vmatpush1.msra.mxu0 %v321
    %1145 = vmatprep.subr.mxu0 %v334
    %1146 = vmatpush1.msra.mxu0 %v333
    %1147 = vmatprep.subr.mxu0 %v346
    %1148 = vmatpush1.msra.mxu0 %v345
    %1149 = vmatprep.subr.mxu0 %v358
    %1150 = vmatpush1.msra.mxu0 %v357
    %1151 = vmatprep.subr.mxu0 %v370
    %1152 = vmatpush1.msra.mxu0 %v369
    %1153 = vmatprep.subr.mxu0 %v382
    %1154 = vmatpush1.msra.mxu0 %v381
    %1155 = vmatprep.subr.mxu0 %v394
    %1156 = vmatpush1.msra.mxu0 %v393
    %1157 = vmatprep.subr.mxu0 %v406
    %1158 = vmatpush1.msra.mxu0 %v405
    %1159 = vmatprep.subr.mxu0 %v418
    %1160 = vmatpush1.msra.mxu0 %v417
    %1161 = vmatprep.subr.mxu0 %v430
    %1162 = vmatpush1.msra.mxu0 %v429
    %1163 = vmatprep.subr.mxu0 %v442
    %1164 = vmatpush1.msra.mxu0 %v441
    %1165 = vmatprep.subr.mxu0 %v454
    %1166 = vmatpush1.msra.mxu0 %v453
    %1167 = vmatprep.subr.mxu0 %v466
    %1168 = vmatpush1.msra.mxu0 %v465
    %1169 = vmatprep.subr.mxu0 %v478
    %1170 = vmatpush1.msra.mxu0 %v477
    %1171 = vmatprep.subr.mxu0 %v490
    %1172 = vmatpush1.msra.mxu0 %v489
    %1173 = vmatprep.subr.mxu0 %v502
    %1174 = vmatpush1.msra.mxu0 %v501
    %1175 = vmatprep.subr.mxu0 %v514
    %1176 = vmatpush1.msra.mxu0 %v513
    %1177 = vmatprep.subr.mxu0 %v526
    %1178 = vmatpush1.msra.mxu0 %v525
    %1179 = vmatprep.subr.mxu0 %v538
    %1180 = vmatpush1.msra.mxu0 %v537
    %1181 = vmatprep.subr.mxu0 %v550
    %1182 = vmatpush1.msra.mxu0 %v549
    %1183 = vmatprep.subr.mxu0 %v562
    %1184 = vmatpush1.msra.mxu0 %v561
    %1185 = vmatprep.subr.mxu0 %v574
    %1186 = vmatpush1.msra.mxu0 %v573
    %1187 = vmatprep.subr.mxu0 %v586
    %1188 = vmatpush1.msra.mxu0 %v585
    %1189 = vmatprep.subr.mxu0 %v598
    %1190 = vmatpush1.msra.mxu0 %v597
    %1191 = vmatprep.subr.mxu0 %v610
    %1192 = vmatpush1.msra.mxu0 %v609
    %1193 = vmatprep.mubr.f32.mxu0 %v214
    %1194 = vmatmul.mubr.f32.gmra.mrb[0].mxu0 %v213
    %v1195 = vpop.f32.mrb[0].mxu0
    %v1196 = vadd.f32 %v652, %v1195
    %v1197 = vpop.f32.mrb[0].mxu0
    %v1198 = vadd.f32 %v656, %v1197
    %1199 = vmatprep.mubr.f32.mxu0 %v216
    %1200 = vmatmul.mubr.f32.gmra.mrb[0].mxu0 %v215
    %v1201 = vpop.f32.mrb[0].mxu0
    %v1202 = vadd.f32 %v652, %v1201
    %v1203 = vpop.f32.mrb[0].mxu0
    %v1204 = vadd.f32 %v656, %v1203
    %1205 = vmatprep.mubr.f32.mxu0 %v218
    %1206 = vmatmul.mubr.f32.gmra.mrb[0].mxu0 %v217
    %v1207 = vpop.f32.mrb[0].mxu0
    %v1208 = vadd.f32 %v652, %v1207
    %v1209 = vpop.f32.mrb[0].mxu0
    %v1210 = vadd.f32 %v656, %v1209
    %1211 = vmatprep.mubr.f32.mxu0 %v220
    %1212 = vmatmul.mubr.f32.gmra.mrb[0].mxu0 %v219
    %v1213 = vpop.f32.mrb[0].mxu0
    %v1214 = vadd.f32 %v652, %v1213
    %v1215 = vpop.f32.mrb[0].mxu0
    %v1216 = vadd.f32 %v656, %v1215
    %1217 = vmatprep.mubr.f32.mxu0 %v222
    %1218 = vmatmul.mubr.f32.gmra.mrb[0].mxu0 %v221
    %v1219 = vpop.f32.mrb[0].mxu0
    %v1220 = vadd.f32 %v652, %v1219
    %v1221 = vpop.f32.mrb[0].mxu0
    %v1222 = vadd.f32 %v656, %v1221
    %1223 = vmatprep.mubr.f32.mxu0 %v224
    %1224 = vmatmul.mubr.f32.gmra.mrb[0].mxu0 %v223
    %v1225 = vpop.f32.mrb[0].mxu0
    %v1226 = vadd.f32 %v652, %v1225
    %v1227 = vpop.f32.mrb[0].mxu0
    %v1228 = vadd.f32 %v656, %v1227
    %1229 = vmatprep.mubr.f32.mxu0 %v226
    %1230 = vmatmul.mubr.f32.gmra.mrb[0].mxu0 %v225
    %v1231 = vpop.f32.mrb[0].mxu0
    %v1232 = vadd.f32 %v652, %v1231
    %v1233 = vpop.f32.mrb[0].mxu0
    %v1234 = vadd.f32 %v656, %v1233
    %1235 = vmatprep.mubr.f32.mxu0 %v228
    %1236 = vmatmul.mubr.f32.gmra.mrb[0].mxu0 %v227
    %v1237 = vpop.f32.mrb[0].mxu0
    %v1238 = vadd.f32 %v652, %v1237
    %v1239 = vpop.f32.mrb[0].mxu0
    %v1240 = vadd.f32 %v656, %v1239
    %1241 = vdwg.mxu0
    %1242 = vmatprep.subr.mxu0 %v240
    %1243 = vmatpush1.msra.mxu0 %v239
    %1244 = vmatprep.subr.mxu0 %v252
    %1245 = vmatpush1.msra.mxu0 %v251
    %1246 = vmatprep.subr.mxu0 %v264
    %1247 = vmatpush1.msra.mxu0 %v263
    %1248 = vmatprep.subr.mxu0 %v276
    %1249 = vmatpush1.msra.mxu0 %v275
    %1250 = vmatprep.subr.mxu0 %v288
    %1251 = vmatpush1.msra.mxu0 %v287
    %1252 = vmatprep.subr.mxu0 %v300
    %1253 = vmatpush1.msra.mxu0 %v299
    %1254 = vmatprep.subr.mxu0 %v312
    %1255 = vmatpush1.msra.mxu0 %v311
    %1256 = vmatprep.subr.mxu0 %v324
    %1257 = vmatpush1.msra.mxu0 %v323
    %1258 = vmatprep.subr.mxu0 %v336
    %1259 = vmatpush1.msra.mxu0 %v335
    %1260 = vmatprep.subr.mxu0 %v348
    %1261 = vmatpush1.msra.mxu0 %v347
    %1262 = vmatprep.subr.mxu0 %v360
    %1263 = vmatpush1.msra.mxu0 %v359
    %1264 = vmatprep.subr.mxu0 %v372
    %1265 = vmatpush1.msra.mxu0 %v371
    %1266 = vmatprep.subr.mxu0 %v384
    %1267 = vmatpush1.msra.mxu0 %v383
    %1268 = vmatprep.subr.mxu0 %v396
    %1269 = vmatpush1.msra.mxu0 %v395
    %1270 = vmatprep.subr.mxu0 %v408
    %1271 = vmatpush1.msra.mxu0 %v407
    %1272 = vmatprep.subr.mxu0 %v420
    %1273 = vmatpush1.msra.mxu0 %v419
    %1274 = vmatprep.subr.mxu0 %v432
    %1275 = vmatpush1.msra.mxu0 %v431
    %1276 = vmatprep.subr.mxu0 %v444
    %1277 = vmatpush1.msra.mxu0 %v443
    %1278 = vmatprep.subr.mxu0 %v456
    %1279 = vmatpush1.msra.mxu0 %v455
    %1280 = vmatprep.subr.mxu0 %v468
    %1281 = vmatpush1.msra.mxu0 %v467
    %1282 = vmatprep.subr.mxu0 %v480
    %1283 = vmatpush1.msra.mxu0 %v479
    %1284 = vmatprep.subr.mxu0 %v492
    %1285 = vmatpush1.msra.mxu0 %v491
    %1286 = vmatprep.subr.mxu0 %v504
    %1287 = vmatpush1.msra.mxu0 %v503
    %1288 = vmatprep.subr.mxu0 %v516
    %1289 = vmatpush1.msra.mxu0 %v515
    %1290 = vmatprep.subr.mxu0 %v528
    %1291 = vmatpush1.msra.mxu0 %v527
    %1292 = vmatprep.subr.mxu0 %v540
    %1293 = vmatpush1.msra.mxu0 %v539
    %1294 = vmatprep.subr.mxu0 %v552
    %1295 = vmatpush1.msra.mxu0 %v551
    %1296 = vmatprep.subr.mxu0 %v564
    %1297 = vmatpush1.msra.mxu0 %v563
    %1298 = vmatprep.subr.mxu0 %v576
    %1299 = vmatpush1.msra.mxu0 %v575
    %1300 = vmatprep.subr.mxu0 %v588
    %1301 = vmatpush1.msra.mxu0 %v587
    %1302 = vmatprep.subr.mxu0 %v600
    %1303 = vmatpush1.msra.mxu0 %v599
    %1304 = vmatprep.subr.mxu0 %v612
    %1305 = vmatpush1.msra.mxu0 %v611
    %1306 = vmatprep.mubr.f32.mxu0 %v214
    %1307 = vmatmul.mubr.f32.gmra.mrb[0].mxu0 %v213
    %v1308 = vpop.f32.mrb[0].mxu0
    %v1309 = vadd.f32 %v660, %v1308
    %v1310 = vpop.f32.mrb[0].mxu0
    %v1311 = vadd.f32 %v664, %v1310
    %1312 = vmatprep.mubr.f32.mxu0 %v216
    %1313 = vmatmul.mubr.f32.gmra.mrb[0].mxu0 %v215
    %v1314 = vpop.f32.mrb[0].mxu0
    %v1315 = vadd.f32 %v660, %v1314
    %v1316 = vpop.f32.mrb[0].mxu0
    %v1317 = vadd.f32 %v664, %v1316
    %1318 = vmatprep.mubr.f32.mxu0 %v218
    %1319 = vmatmul.mubr.f32.gmra.mrb[0].mxu0 %v217
    %v1320 = vpop.f32.mrb[0].mxu0
    %v1321 = vadd.f32 %v660, %v1320
    %v1322 = vpop.f32.mrb[0].mxu0
    %v1323 = vadd.f32 %v664, %v1322
    %1324 = vmatprep.mubr.f32.mxu0 %v220
    %1325 = vmatmul.mubr.f32.gmra.mrb[0].mxu0 %v219
    %v1326 = vpop.f32.mrb[0].mxu0
    %v1327 = vadd.f32 %v660, %v1326
    %v1328 = vpop.f32.mrb[0].mxu0
    %v1329 = vadd.f32 %v664, %v1328
    %1330 = vmatprep.mubr.f32.mxu0 %v222
    %1331 = vmatmul.mubr.f32.gmra.mrb[0].mxu0 %v221
    %v1332 = vpop.f32.mrb[0].mxu0
    %v1333 = vadd.f32 %v660, %v1332
    %v1334 = vpop.f32.mrb[0].mxu0
    %v1335 = vadd.f32 %v664, %v1334
    %1336 = vmatprep.mubr.f32.mxu0 %v224
    %1337 = vmatmul.mubr.f32.gmra.mrb[0].mxu0 %v223
    %v1338 = vpop.f32.mrb[0].mxu0
    %v1339 = vadd.f32 %v660, %v1338
    %v1340 = vpop.f32.mrb[0].mxu0
    %v1341 = vadd.f32 %v664, %v1340
    %1342 = vmatprep.mubr.f32.mxu0 %v226
    %1343 = vmatmul.mubr.f32.gmra.mrb[0].mxu0 %v225
    %v1344 = vpop.f32.mrb[0].mxu0
    %v1345 = vadd.f32 %v660, %v1344
    %v1346 = vpop.f32.mrb[0].mxu0
    %v1347 = vadd.f32 %v664, %v1346
    %1348 = vmatprep.mubr.f32.mxu0 %v228
    %1349 = vmatmul.mubr.f32.gmra.mrb[0].mxu0 %v227
    %v1350 = vpop.f32.mrb[0].mxu0
    %v1351 = vadd.f32 %v660, %v1350
    %v1352 = vpop.f32.mrb[0].mxu0
    %v1353 = vadd.f32 %v664, %v1352
    %1354 = vdwg.mxu0
    %v1355 = vmax.f32 %v744, 0.0
    %v1356 = vmax.f32 %v746, 0.0
    %v1357 = vmax.f32 %v857, 0.0
    %v1358 = vmax.f32 %v859, 0.0
    %v1359 = vmax.f32 %v970, 0.0
    %v1360 = vmax.f32 %v972, 0.0
    %v1361 = vmax.f32 %v1083, 0.0
    %v1362 = vmax.f32 %v1085, 0.0
    %v1363 = vmax.f32 %v1196, 0.0
    %v1364 = vmax.f32 %v1198, 0.0
    %v1365 = vmax.f32 %v1309, 0.0
    %v1366 = vmax.f32 %v1311, 0.0
    %v1367 = vmax.f32 %v750, 0.0
    %v1368 = vmax.f32 %v752, 0.0
    %v1369 = vmax.f32 %v863, 0.0
    %v1370 = vmax.f32 %v865, 0.0
    %v1371 = vmax.f32 %v976, 0.0
    %v1372 = vmax.f32 %v978, 0.0
    %v1373 = vmax.f32 %v1089, 0.0
    %v1374 = vmax.f32 %v1091, 0.0
    %v1375 = vmax.f32 %v1202, 0.0
    %v1376 = vmax.f32 %v1204, 0.0
    %v1377 = vmax.f32 %v1315, 0.0
    %v1378 = vmax.f32 %v1317, 0.0
    %v1379 = vmax.f32 %v756, 0.0
    %v1380 = vmax.f32 %v758, 0.0
    %v1381 = vmax.f32 %v869, 0.0
    %v1382 = vmax.f32 %v871, 0.0
    %v1383 = vmax.f32 %v982, 0.0
    %v1384 = vmax.f32 %v984, 0.0
    %v1385 = vmax.f32 %v1095, 0.0
    %v1386 = vmax.f32 %v1097, 0.0
    %v1387 = vmax.f32 %v1208, 0.0
    %v1388 = vmax.f32 %v1210, 0.0
    %v1389 = vmax.f32 %v1321, 0.0
    %v1390 = vmax.f32 %v1323, 0.0
    %v1391 = vmax.f32 %v762, 0.0
    %v1392 = vmax.f32 %v764, 0.0
    %v1393 = vmax.f32 %v875, 0.0
    %v1394 = vmax.f32 %v877, 0.0
    %v1395 = vmax.f32 %v988, 0.0
    %v1396 = vmax.f32 %v990, 0.0
    %v1397 = vmax.f32 %v1101, 0.0
    %v1398 = vmax.f32 %v1103, 0.0
    %v1399 = vmax.f32 %v1214, 0.0
    %v1400 = vmax.f32 %v1216, 0.0
    %v1401 = vmax.f32 %v1327, 0.0
    %v1402 = vmax.f32 %v1329, 0.0
    %v1403 = vmax.f32 %v768, 0.0
    %v1404 = vmax.f32 %v770, 0.0
    %v1405 = vmax.f32 %v881, 0.0
    %v1406 = vmax.f32 %v883, 0.0
    %v1407 = vmax.f32 %v994, 0.0
    %v1408 = vmax.f32 %v996, 0.0
    %v1409 = vmax.f32 %v1107, 0.0
    %v1410 = vmax.f32 %v1109, 0.0
    %v1411 = vmax.f32 %v1220, 0.0
    %v1412 = vmax.f32 %v1222, 0.0
    %v1413 = vmax.f32 %v1333, 0.0
    %v1414 = vmax.f32 %v1335, 0.0
    %v1415 = vmax.f32 %v774, 0.0
    %v1416 = vmax.f32 %v776, 0.0
    %v1417 = vmax.f32 %v887, 0.0
    %v1418 = vmax.f32 %v889, 0.0
    %v1419 = vmax.f32 %v1000, 0.0
    %v1420 = vmax.f32 %v1002, 0.0
    %v1421 = vmax.f32 %v1113, 0.0
    %v1422 = vmax.f32 %v1115, 0.0
    %v1423 = vmax.f32 %v1226, 0.0
    %v1424 = vmax.f32 %v1228, 0.0
    %v1425 = vmax.f32 %v1339, 0.0
    %v1426 = vmax.f32 %v1341, 0.0
    %v1427 = vmax.f32 %v780, 0.0
    %v1428 = vmax.f32 %v782, 0.0
    %v1429 = vmax.f32 %v893, 0.0
    %v1430 = vmax.f32 %v895, 0.0
    %v1431 = vmax.f32 %v1006, 0.0
    %v1432 = vmax.f32 %v1008, 0.0
    %v1433 = vmax.f32 %v1119, 0.0
    %v1434 = vmax.f32 %v1121, 0.0
    %v1435 = vmax.f32 %v1232, 0.0
    %v1436 = vmax.f32 %v1234, 0.0
    %v1437 = vmax.f32 %v1345, 0.0
    %v1438 = vmax.f32 %v1347, 0.0
    %v1439 = vmax.f32 %v786, 0.0
    %v1440 = vmax.f32 %v788, 0.0
    %v1441 = vmax.f32 %v899, 0.0
    %v1442 = vmax.f32 %v901, 0.0
    %v1443 = vmax.f32 %v1012, 0.0
    %v1444 = vmax.f32 %v1014, 0.0
    %v1445 = vmax.f32 %v1125, 0.0
    %v1446 = vmax.f32 %v1127, 0.0
    %v1447 = vmax.f32 %v1238, 0.0
    %v1448 = vmax.f32 %v1240, 0.0
    %v1449 = vmax.f32 %v1351, 0.0
    %v1450 = vmax.f32 %v1353, 0.0
    %v1451 = vmin.f32 %v1355, 6.0
    %v1452 = vmin.f32 %v1356, 6.0
    %v1453 = vmin.f32 %v1357, 6.0
    %v1454 = vmin.f32 %v1358, 6.0
    %v1455 = vmin.f32 %v1359, 6.0
    %v1456 = vmin.f32 %v1360, 6.0
    %v1457 = vmin.f32 %v1361, 6.0
    %v1458 = vmin.f32 %v1362, 6.0
    %v1459 = vmin.f32 %v1363, 6.0
    %v1460 = vmin.f32 %v1364, 6.0
    %v1461 = vmin.f32 %v1365, 6.0
    %v1462 = vmin.f32 %v1366, 6.0
    %v1463 = vmin.f32 %v1367, 6.0
    %v1464 = vmin.f32 %v1368, 6.0
    %v1465 = vmin.f32 %v1369, 6.0
    %v1466 = vmin.f32 %v1370, 6.0
    %v1467 = vmin.f32 %v1371, 6.0
    %v1468 = vmin.f32 %v1372, 6.0
    %v1469 = vmin.f32 %v1373, 6.0
    %v1470 = vmin.f32 %v1374, 6.0
    %v1471 = vmin.f32 %v1375, 6.0
    %v1472 = vmin.f32 %v1376, 6.0
    %v1473 = vmin.f32 %v1377, 6.0
    %v1474 = vmin.f32 %v1378, 6.0
    %v1475 = vmin.f32 %v1379, 6.0
    %v1476 = vmin.f32 %v1380, 6.0
    %v1477 = vmin.f32 %v1381, 6.0
    %v1478 = vmin.f32 %v1382, 6.0
    %v1479 = vmin.f32 %v1383, 6.0
    %v1480 = vmin.f32 %v1384, 6.0
    %v1481 = vmin.f32 %v1385, 6.0
    %v1482 = vmin.f32 %v1386, 6.0
    %v1483 = vmin.f32 %v1387, 6.0
    %v1484 = vmin.f32 %v1388, 6.0
    %v1485 = vmin.f32 %v1389, 6.0
    %v1486 = vmin.f32 %v1390, 6.0
    %v1487 = vmin.f32 %v1391, 6.0
    %v1488 = vmin.f32 %v1392, 6.0
    %v1489 = vmin.f32 %v1393, 6.0
    %v1490 = vmin.f32 %v1394, 6.0
    %v1491 = vmin.f32 %v1395, 6.0
    %v1492 = vmin.f32 %v1396, 6.0
    %v1493 = vmin.f32 %v1397, 6.0
    %v1494 = vmin.f32 %v1398, 6.0
    %v1495 = vmin.f32 %v1399, 6.0
    %v1496 = vmin.f32 %v1400, 6.0
    %v1497 = vmin.f32 %v1401, 6.0
    %v1498 = vmin.f32 %v1402, 6.0
    %v1499 = vmin.f32 %v1403, 6.0
    %v1500 = vmin.f32 %v1404, 6.0
    %v1501 = vmin.f32 %v1405, 6.0
    %v1502 = vmin.f32 %v1406, 6.0
    %v1503 = vmin.f32 %v1407, 6.0
    %v1504 = vmin.f32 %v1408, 6.0
    %v1505 = vmin.f32 %v1409, 6.0
    %v1506 = vmin.f32 %v1410, 6.0
    %v1507 = vmin.f32 %v1411, 6.0
    %v1508 = vmin.f32 %v1412, 6.0
    %v1509 = vmin.f32 %v1413, 6.0
    %v1510 = vmin.f32 %v1414, 6.0
    %v1511 = vmin.f32 %v1415, 6.0
    %v1512 = vmin.f32 %v1416, 6.0
    %v1513 = vmin.f32 %v1417, 6.0
    %v1514 = vmin.f32 %v1418, 6.0
    %v1515 = vmin.f32 %v1419, 6.0
    %v1516 = vmin.f32 %v1420, 6.0
    %v1517 = vmin.f32 %v1421, 6.0
    %v1518 = vmin.f32 %v1422, 6.0
    %v1519 = vmin.f32 %v1423, 6.0
    %v1520 = vmin.f32 %v1424, 6.0
    %v1521 = vmin.f32 %v1425, 6.0
    %v1522 = vmin.f32 %v1426, 6.0
    %v1523 = vmin.f32 %v1427, 6.0
    %v1524 = vmin.f32 %v1428, 6.0
    %v1525 = vmin.f32 %v1429, 6.0
    %v1526 = vmin.f32 %v1430, 6.0
    %v1527 = vmin.f32 %v1431, 6.0
    %v1528 = vmin.f32 %v1432, 6.0
    %v1529 = vmin.f32 %v1433, 6.0
    %v1530 = vmin.f32 %v1434, 6.0
    %v1531 = vmin.f32 %v1435, 6.0
    %v1532 = vmin.f32 %v1436, 6.0
    %v1533 = vmin.f32 %v1437, 6.0
    %v1534 = vmin.f32 %v1438, 6.0
    %v1535 = vmin.f32 %v1439, 6.0
    %v1536 = vmin.f32 %v1440, 6.0
    %v1537 = vmin.f32 %v1441, 6.0
    %v1538 = vmin.f32 %v1442, 6.0
    %v1539 = vmin.f32 %v1443, 6.0
    %v1540 = vmin.f32 %v1444, 6.0
    %v1541 = vmin.f32 %v1445, 6.0
    %v1542 = vmin.f32 %v1446, 6.0
    %v1543 = vmin.f32 %v1447, 6.0
    %v1544 = vmin.f32 %v1448, 6.0
    %v1545 = vmin.f32 %v1449, 6.0
    %v1546 = vmin.f32 %v1450, 6.0
    %v1547 = vmax.f32 %v1451, %v1454
    %v1548 = vmax.f32 %v1452, %v1455
    %v1549 = vmax.f32 %v1453, %v1456
    %v1550 = vmax.f32 %v1463, %v1466
    %v1551 = vmax.f32 %v1464, %v1467
    %v1552 = vmax.f32 %v1465, %v1468
    %v1553 = vmax.f32 %v1475, %v1478
    %v1554 = vmax.f32 %v1476, %v1479
    %v1555 = vmax.f32 %v1477, %v1480
    %v1556 = vmax.f32 %v1487, %v1490
    %v1557 = vmax.f32 %v1488, %v1491
    %v1558 = vmax.f32 %v1489, %v1492
    %v1559 = vmax.f32 %v1499, %v1502
    %v1560 = vmax.f32 %v1500, %v1503
    %v1561 = vmax.f32 %v1501, %v1504
    %v1562 = vmax.f32 %v1511, %v1514
    %v1563 = vmax.f32 %v1512, %v1515
    %v1564 = vmax.f32 %v1513, %v1516
    %v1565 = vmax.f32 %v1523, %v1526
    %v1566 = vmax.f32 %v1524, %v1527
    %v1567 = vmax.f32 %v1525, %v1528
    %v1568 = vmax.f32 %v1535, %v1538
    %v1569 = vmax.f32 %v1536, %v1539
    %v1570 = vmax.f32 %v1537, %v1540
    %v1571 = vmax.f32 %v1457, %v1460
    %v1572 = vmax.f32 %v1458, %v1461
    %v1573 = vmax.f32 %v1459, %v1462
    %v1574 = vmax.f32 %v1469, %v1472
    %v1575 = vmax.f32 %v1470, %v1473
    %v1576 = vmax.f32 %v1471, %v1474
    %v1577 = vmax.f32 %v1481, %v1484
    %v1578 = vmax.f32 %v1482, %v1485
    %v1579 = vmax.f32 %v1483, %v1486
    %v1580 = vmax.f32 %v1493, %v1496
    %v1581 = vmax.f32 %v1494, %v1497
    %v1582 = vmax.f32 %v1495, %v1498
    %v1583 = vmax.f32 %v1505, %v1508
    %v1584 = vmax.f32 %v1506, %v1509
    %v1585 = vmax.f32 %v1507, %v1510
    %v1586 = vmax.f32 %v1517, %v1520
    %v1587 = vmax.f32 %v1518, %v1521
    %v1588 = vmax.f32 %v1519, %v1522
    %v1589 = vmax.f32 %v1529, %v1532
    %v1590 = vmax.f32 %v1530, %v1533
    %v1591 = vmax.f32 %v1531, %v1534
    %v1592 = vmax.f32 %v1541, %v1544
    %v1593 = vmax.f32 %v1542, %v1545
    %v1594 = vmax.f32 %v1543, %v1546
    %v1595 = vmax.f32 %v1547, %v1571
    %v1596 = vmax.f32 %v1548, %v1572
    %v1597 = vmax.f32 %v1549, %v1573
    %v1598 = vmax.f32 %v1550, %v1574
    %v1599 = vmax.f32 %v1551, %v1575
    %v1600 = vmax.f32 %v1552, %v1576
    %v1601 = vmax.f32 %v1553, %v1577
    %v1602 = vmax.f32 %v1554, %v1578
    %v1603 = vmax.f32 %v1555, %v1579
    %v1604 = vmax.f32 %v1556, %v1580
    %v1605 = vmax.f32 %v1557, %v1581
    %v1606 = vmax.f32 %v1558, %v1582
    %v1607 = vmax.f32 %v1559, %v1583
    %v1608 = vmax.f32 %v1560, %v1584
    %v1609 = vmax.f32 %v1561, %v1585
    %v1610 = vmax.f32 %v1562, %v1586
    %v1611 = vmax.f32 %v1563, %v1587
    %v1612 = vmax.f32 %v1564, %v1588
    %v1613 = vmax.f32 %v1565, %v1589
    %v1614 = vmax.f32 %v1566, %v1590
    %v1615 = vmax.f32 %v1567, %v1591
    %v1616 = vmax.f32 %v1568, %v1592
    %v1617 = vmax.f32 %v1569, %v1593
    %v1618 = vmax.f32 %v1570, %v1594
    %v1619 = vld [vmem:[#allocation8] sm:$0xff]
    %v1620 = vld [vmem:[#allocation8 + $0x8] sm:$0xff]
    %v1621 = vld [vmem:[#allocation8 + $0x10] sm:$0xff]
    %v1622 = vld [vmem:[#allocation8 + $0x18] sm:$0xff]
    %v1623 = vld [vmem:[#allocation8 + $0x20] sm:$0xff]
    %v1624 = vld [vmem:[#allocation8 + $0x28] sm:$0xff]
    %v1625 = vld [vmem:[#allocation8 + $0x30] sm:$0xff]
    %v1626 = vld [vmem:[#allocation8 + $0x38] sm:$0xff]
    %v1627 = vld [vmem:[#allocation8 + $0x40] sm:$0xff]
    %v1628 = vld [vmem:[#allocation8 + $0x48] sm:$0xff]
    %v1629 = vld [vmem:[#allocation8 + $0x50] sm:$0xff]
    %v1630 = vld [vmem:[#allocation8 + $0x58] sm:$0xff]
    %v1631 = vld [vmem:[#allocation8 + $0x60] sm:$0xff]
    %v1632 = vld [vmem:[#allocation8 + $0x68] sm:$0xff]
    %v1633 = vld [vmem:[#allocation8 + $0x70] sm:$0xff]
    %v1634 = vld [vmem:[#allocation8 + $0x78] sm:$0xff]
    %v1635 = vld [vmem:[#allocation8 + $0x80] sm:$0xff]
    %v1636 = vld [vmem:[#allocation8 + $0x88] sm:$0xff]
    %v1637 = vld [vmem:[#allocation8 + $0x90] sm:$0xff]
    %v1638 = vld [vmem:[#allocation8 + $0x98] sm:$0xff]
    %v1639 = vld [vmem:[#allocation8 + $0xa0] sm:$0xff]
    %v1640 = vld [vmem:[#allocation8 + $0xa8] sm:$0xff]
    %v1641 = vld [vmem:[#allocation8 + $0xb0] sm:$0xff]
    %v1642 = vld [vmem:[#allocation8 + $0xb8] sm:$0xff]
    %v1643 = vld [vmem:[#allocation8 + $0xc0] sm:$0xff]
    %v1644 = vld [vmem:[#allocation8 + $0xc8] sm:$0xff]
    %v1645 = vld [vmem:[#allocation8 + $0xd0] sm:$0xff]
    %v1646 = vld [vmem:[#allocation8 + $0xd8] sm:$0xff]
    %v1647 = vld [vmem:[#allocation8 + $0xe0] sm:$0xff]
    %v1648 = vld [vmem:[#allocation8 + $0xe8] sm:$0xff]
    %v1649 = vld [vmem:[#allocation8 + $0xf0] sm:$0xff]
    %v1650 = vld [vmem:[#allocation8 + $0xf8] sm:$0xff]
    %v1651 = vld [vmem:[#allocation8 + $0x100] sm:$0xff]
    %v1652 = vld [vmem:[#allocation8 + $0x108] sm:$0xff]
    %v1653 = vld [vmem:[#allocation8 + $0x110] sm:$0xff]
    %v1654 = vld [vmem:[#allocation8 + $0x118] sm:$0xff]
    %v1655 = vld [vmem:[#allocation8 + $0x120] sm:$0xff]
    %v1656 = vld [vmem:[#allocation8 + $0x128] sm:$0xff]
    %v1657 = vld [vmem:[#allocation8 + $0x130] sm:$0xff]
    %v1658 = vld [vmem:[#allocation8 + $0x138] sm:$0xff]
    %v1659 = vld [vmem:[#allocation8 + $0x140] sm:$0xff]
    %v1660 = vld [vmem:[#allocation8 + $0x148] sm:$0xff]
    %v1661 = vld [vmem:[#allocation8 + $0x150] sm:$0xff]
    %v1662 = vld [vmem:[#allocation8 + $0x158] sm:$0xff]
    %v1663 = vld [vmem:[#allocation8 + $0x160] sm:$0xff]
    %v1664 = vld [vmem:[#allocation8 + $0x168] sm:$0xff]
    %v1665 = vld [vmem:[#allocation8 + $0x170] sm:$0xff]
    %v1666 = vld [vmem:[#allocation8 + $0x178] sm:$0xff]
    %v1667 = vld [vmem:[#allocation8 + $0x180] sm:$0xff]
    %v1668 = vld [vmem:[#allocation8 + $0x188] sm:$0xff]
    %v1669 = vld [vmem:[#allocation8 + $0x190] sm:$0xff]
    %v1670 = vld [vmem:[#allocation8 + $0x198] sm:$0xff]
    %v1671 = vld [vmem:[#allocation8 + $0x1a0] sm:$0xff]
    %v1672 = vld [vmem:[#allocation8 + $0x1a8] sm:$0xff]
    %v1673 = vld [vmem:[#allocation8 + $0x1b0] sm:$0xff]
    %v1674 = vld [vmem:[#allocation8 + $0x1b8] sm:$0xff]
    %v1675 = vld [vmem:[#allocation8 + $0x1c0] sm:$0xff]
    %v1676 = vld [vmem:[#allocation8 + $0x1c8] sm:$0xff]
    %v1677 = vld [vmem:[#allocation8 + $0x1d0] sm:$0xff]
    %v1678 = vld [vmem:[#allocation8 + $0x1d8] sm:$0xff]
    %v1679 = vld [vmem:[#allocation8 + $0x1e0] sm:$0xff]
    %v1680 = vld [vmem:[#allocation8 + $0x1e8] sm:$0xff]
    %v1681 = vld [vmem:[#allocation8 + $0x1f0] sm:$0xff]
    %v1682 = vld [vmem:[#allocation8 + $0x1f8] sm:$0xff]
    %v1683 = vld [vmem:[#allocation8 + $0x200] sm:$0xff]
    %v1684 = vld [vmem:[#allocation8 + $0x208] sm:$0xff]
    %v1685 = vld [vmem:[#allocation8 + $0x210] sm:$0xff]
    %v1686 = vld [vmem:[#allocation8 + $0x218] sm:$0xff]
    %v1687 = vld [vmem:[#allocation8 + $0x220] sm:$0xff]
    %v1688 = vld [vmem:[#allocation8 + $0x228] sm:$0xff]
    %v1689 = vld [vmem:[#allocation8 + $0x230] sm:$0xff]
    %v1690 = vld [vmem:[#allocation8 + $0x238] sm:$0xff]
    %v1691 = vld [vmem:[#allocation8 + $0x240] sm:$0xff]
    %v1692 = vld [vmem:[#allocation8 + $0x248] sm:$0xff]
    %v1693 = vld [vmem:[#allocation8 + $0x250] sm:$0xff]
    %v1694 = vld [vmem:[#allocation8 + $0x258] sm:$0xff]
    %v1695 = vld [vmem:[#allocation8 + $0x260] sm:$0xff]
    %v1696 = vld [vmem:[#allocation8 + $0x268] sm:$0xff]
    %v1697 = vld [vmem:[#allocation8 + $0x270] sm:$0xff]
    %v1698 = vld [vmem:[#allocation8 + $0x278] sm:$0xff]
    %v1699 = vld [vmem:[#allocation8 + $0x280] sm:$0xff]
    %v1700 = vld [vmem:[#allocation8 + $0x288] sm:$0xff]
    %v1701 = vld [vmem:[#allocation8 + $0x290] sm:$0xff]
    %v1702 = vld [vmem:[#allocation8 + $0x298] sm:$0xff]
    %v1703 = vld [vmem:[#allocation8 + $0x2a0] sm:$0xff]
    %v1704 = vld [vmem:[#allocation8 + $0x2a8] sm:$0xff]
    %v1705 = vld [vmem:[#allocation8 + $0x2b0] sm:$0xff]
    %v1706 = vld [vmem:[#allocation8 + $0x2b8] sm:$0xff]
    %v1707 = vld [vmem:[#allocation8 + $0x2c0] sm:$0xff]
    %v1708 = vld [vmem:[#allocation8 + $0x2c8] sm:$0xff]
    %v1709 = vld [vmem:[#allocation8 + $0x2d0] sm:$0xff]
    %v1710 = vld [vmem:[#allocation8 + $0x2d8] sm:$0xff]
    %v1711 = vld [vmem:[#allocation8 + $0x2e0] sm:$0xff]
    %v1712 = vld [vmem:[#allocation8 + $0x2e8] sm:$0xff]
    %v1713 = vld [vmem:[#allocation8 + $0x2f0] sm:$0xff]
    %v1714 = vld [vmem:[#allocation8 + $0x2f8] sm:$0xff]
    %v1715 = vld [vmem:[#allocation8 + $0x300] sm:$0xff]
    %v1716 = vld [vmem:[#allocation8 + $0x308] sm:$0xff]
    %v1717 = vld [vmem:[#allocation8 + $0x310] sm:$0xff]
    %v1718 = vld [vmem:[#allocation8 + $0x318] sm:$0xff]
    %v1719 = vld [vmem:[#allocation8 + $0x320] sm:$0xff]
    %v1720 = vld [vmem:[#allocation8 + $0x328] sm:$0xff]
    %v1721 = vld [vmem:[#allocation8 + $0x330] sm:$0xff]
    %v1722 = vld [vmem:[#allocation8 + $0x338] sm:$0xff]
    %v1723 = vld [vmem:[#allocation8 + $0x340] sm:$0xff]
    %v1724 = vld [vmem:[#allocation8 + $0x348] sm:$0xff]
    %v1725 = vld [vmem:[#allocation8 + $0x350] sm:$0xff]
    %v1726 = vld [vmem:[#allocation8 + $0x358] sm:$0xff]
    %v1727 = vld [vmem:[#allocation8 + $0x360] sm:$0xff]
    %v1728 = vld [vmem:[#allocation8 + $0x368] sm:$0xff]
    %v1729 = vld [vmem:[#allocation8 + $0x370] sm:$0xff]
    %v1730 = vld [vmem:[#allocation8 + $0x378] sm:$0xff]
    %v1731 = vld [vmem:[#allocation8 + $0x380] sm:$0xff]
    %v1732 = vld [vmem:[#allocation8 + $0x388] sm:$0xff]
    %v1733 = vld [vmem:[#allocation8 + $0x390] sm:$0xff]
    %v1734 = vld [vmem:[#allocation8 + $0x398] sm:$0xff]
    %v1735 = vld [vmem:[#allocation8 + $0x3a0] sm:$0xff]
    %v1736 = vld [vmem:[#allocation8 + $0x3a8] sm:$0xff]
    %v1737 = vld [vmem:[#allocation8 + $0x3b0] sm:$0xff]
    %v1738 = vld [vmem:[#allocation8 + $0x3b8] sm:$0xff]
    %v1739 = vld [vmem:[#allocation8 + $0x3c0] sm:$0xff]
    %v1740 = vld [vmem:[#allocation8 + $0x3c8] sm:$0xff]
    %v1741 = vld [vmem:[#allocation8 + $0x3d0] sm:$0xff]
    %v1742 = vld [vmem:[#allocation8 + $0x3d8] sm:$0xff]
    %v1743 = vld [vmem:[#allocation8 + $0x3e0] sm:$0xff]
    %v1744 = vld [vmem:[#allocation8 + $0x3e8] sm:$0xff]
    %v1745 = vld [vmem:[#allocation8 + $0x3f0] sm:$0xff]
    %v1746 = vld [vmem:[#allocation8 + $0x3f8] sm:$0xff]
    %v1747 = vld [vmem:[#allocation8 + $0x400] sm:$0xff]
    %v1748 = vld [vmem:[#allocation8 + $0x408] sm:$0xff]
    %v1749 = vld [vmem:[#allocation8 + $0x410] sm:$0xff]
    %v1750 = vld [vmem:[#allocation8 + $0x418] sm:$0xff]
    %v1751 = vld [vmem:[#allocation8 + $0x420] sm:$0xff]
    %v1752 = vld [vmem:[#allocation8 + $0x428] sm:$0xff]
    %v1753 = vld [vmem:[#allocation8 + $0x430] sm:$0xff]
    %v1754 = vld [vmem:[#allocation8 + $0x438] sm:$0xff]
    %v1755 = vld [vmem:[#allocation8 + $0x440] sm:$0xff]
    %v1756 = vld [vmem:[#allocation8 + $0x448] sm:$0xff]
    %v1757 = vld [vmem:[#allocation8 + $0x450] sm:$0xff]
    %v1758 = vld [vmem:[#allocation8 + $0x458] sm:$0xff]
    %v1759 = vld [vmem:[#allocation8 + $0x460] sm:$0xff]
    %v1760 = vld [vmem:[#allocation8 + $0x468] sm:$0xff]
    %v1761 = vld [vmem:[#allocation8 + $0x470] sm:$0xff]
    %v1762 = vld [vmem:[#allocation8 + $0x478] sm:$0xff]
    %v1763 = vld [vmem:[#allocation8 + $0x480] sm:$0xff]
    %v1764 = vld [vmem:[#allocation8 + $0x488] sm:$0xff]
    %v1765 = vld [vmem:[#allocation8 + $0x490] sm:$0xff]
    %v1766 = vld [vmem:[#allocation8 + $0x498] sm:$0xff]
    %v1767 = vld [vmem:[#allocation8 + $0x4a0] sm:$0xff]
    %v1768 = vld [vmem:[#allocation8 + $0x4a8] sm:$0xff]
    %v1769 = vld [vmem:[#allocation8 + $0x4b0] sm:$0xff]
    %v1770 = vld [vmem:[#allocation8 + $0x4b8] sm:$0xff]
    %v1771 = vld [vmem:[#allocation8 + $0x4c0] sm:$0xff]
    %v1772 = vld [vmem:[#allocation8 + $0x4c8] sm:$0xff]
    %v1773 = vld [vmem:[#allocation8 + $0x4d0] sm:$0xff]
    %v1774 = vld [vmem:[#allocation8 + $0x4d8] sm:$0xff]
    %v1775 = vld [vmem:[#allocation8 + $0x4e0] sm:$0xff]
    %v1776 = vld [vmem:[#allocation8 + $0x4e8] sm:$0xff]
    %v1777 = vld [vmem:[#allocation8 + $0x4f0] sm:$0xff]
    %v1778 = vld [vmem:[#allocation8 + $0x4f8] sm:$0xff]
    %v1779 = vld [vmem:[#allocation8 + $0x500] sm:$0xff]
    %v1780 = vld [vmem:[#allocation8 + $0x508] sm:$0xff]
    %v1781 = vld [vmem:[#allocation8 + $0x510] sm:$0xff]
    %v1782 = vld [vmem:[#allocation8 + $0x518] sm:$0xff]
    %v1783 = vld [vmem:[#allocation8 + $0x520] sm:$0xff]
    %v1784 = vld [vmem:[#allocation8 + $0x528] sm:$0xff]
    %v1785 = vld [vmem:[#allocation8 + $0x530] sm:$0xff]
    %v1786 = vld [vmem:[#allocation8 + $0x538] sm:$0xff]
    %v1787 = vld [vmem:[#allocation8 + $0x540] sm:$0xff]
    %v1788 = vld [vmem:[#allocation8 + $0x548] sm:$0xff]
    %v1789 = vld [vmem:[#allocation8 + $0x550] sm:$0xff]
    %v1790 = vld [vmem:[#allocation8 + $0x558] sm:$0xff]
    %v1791 = vld [vmem:[#allocation8 + $0x560] sm:$0xff]
    %v1792 = vld [vmem:[#allocation8 + $0x568] sm:$0xff]
    %v1793 = vld [vmem:[#allocation8 + $0x570] sm:$0xff]
    %v1794 = vld [vmem:[#allocation8 + $0x578] sm:$0xff]
    %v1795 = vld [vmem:[#allocation8 + $0x580] sm:$0xff]
    %v1796 = vld [vmem:[#allocation8 + $0x588] sm:$0xff]
    %v1797 = vld [vmem:[#allocation8 + $0x590] sm:$0xff]
    %v1798 = vld [vmem:[#allocation8 + $0x598] sm:$0xff]
    %v1799 = vld [vmem:[#allocation8 + $0x5a0] sm:$0xff]
    %v1800 = vld [vmem:[#allocation8 + $0x5a8] sm:$0xff]
    %v1801 = vld [vmem:[#allocation8 + $0x5b0] sm:$0xff]
    %v1802 = vld [vmem:[#allocation8 + $0x5b8] sm:$0xff]
    %v1803 = vld [vmem:[#allocation8 + $0x5c0] sm:$0xff]
    %v1804 = vld [vmem:[#allocation8 + $0x5c8] sm:$0xff]
    %v1805 = vld [vmem:[#allocation8 + $0x5d0] sm:$0xff]
    %v1806 = vld [vmem:[#allocation8 + $0x5d8] sm:$0xff]
    %v1807 = vld [vmem:[#allocation8 + $0x5e0] sm:$0xff]
    %v1808 = vld [vmem:[#allocation8 + $0x5e8] sm:$0xff]
    %v1809 = vld [vmem:[#allocation8 + $0x5f0] sm:$0xff]
    %v1810 = vld [vmem:[#allocation8 + $0x5f8] sm:$0xff]
    %v1811 = vld [vmem:[#allocation10] sm:$0xf]
    %v1813 = vlaneseq
    %v1814 = vshrl.u32 %v1813, 7
    %v1815 = vsub.s32 0, %v1814
    %v1816 = vrot.slane %v1811, %v1815
    %v1817 = vlaneseq
    %v1818 = vshrl.u32 %v1817, 7
    %v1819 = vsub.s32 1, %v1818
    %v1820 = vrot.slane %v1811, %v1819
    %v1821 = vlaneseq
    %v1822 = vshrl.u32 %v1821, 7
    %v1823 = vsub.s32 2, %v1822
    %v1824 = vrot.slane %v1811, %v1823
    %v1825 = vlaneseq
    %v1826 = vshrl.u32 %v1825, 7
    %v1827 = vsub.s32 3, %v1826
    %v1828 = vrot.slane %v1811, %v1827
    %1833 = vmatprep.subr.mxu0 %v1620
    %1834 = vmatpush1.msra.mxu0 %v1619
    %1835 = vmatprep.subr.mxu0 %v1624
    %1836 = vmatpush1.msra.mxu0 %v1623
    %1837 = vmatprep.subr.mxu0 %v1628
    %1838 = vmatpush1.msra.mxu0 %v1627
    %1839 = vmatprep.subr.mxu0 %v1632
    %1840 = vmatpush1.msra.mxu0 %v1631
    %1841 = vmatprep.subr.mxu0 %v1636
    %1842 = vmatpush1.msra.mxu0 %v1635
    %1843 = vmatprep.subr.mxu0 %v1640
    %1844 = vmatpush1.msra.mxu0 %v1639
    %1845 = vmatprep.subr.mxu0 %v1644
    %1846 = vmatpush1.msra.mxu0 %v1643
    %1847 = vmatprep.subr.mxu0 %v1648
    %1848 = vmatpush1.msra.mxu0 %v1647
    %1849 = vmatprep.subr.mxu0 %v1652
    %1850 = vmatpush1.msra.mxu0 %v1651
    %1851 = vmatprep.subr.mxu0 %v1656
    %1852 = vmatpush1.msra.mxu0 %v1655
    %1853 = vmatprep.subr.mxu0 %v1660
    %1854 = vmatpush1.msra.mxu0 %v1659
    %1855 = vmatprep.subr.mxu0 %v1664
    %1856 = vmatpush1.msra.mxu0 %v1663
    %1857 = vmatprep.subr.mxu0 %v1668
    %1858 = vmatpush1.msra.mxu0 %v1667
    %1859 = vmatprep.subr.mxu0 %v1672
    %1860 = vmatpush1.msra.mxu0 %v1671
    %1861 = vmatprep.subr.mxu0 %v1676
    %1862 = vmatpush1.msra.mxu0 %v1675
    %1863 = vmatprep.subr.mxu0 %v1680
    %1864 = vmatpush1.msra.mxu0 %v1679
    %1865 = vmatprep.subr.mxu0 %v1684
    %1866 = vmatpush1.msra.mxu0 %v1683
    %1867 = vmatprep.subr.mxu0 %v1688
    %1868 = vmatpush1.msra.mxu0 %v1687
    %1869 = vmatprep.subr.mxu0 %v1692
    %1870 = vmatpush1.msra.mxu0 %v1691
    %1871 = vmatprep.subr.mxu0 %v1696
    %1872 = vmatpush1.msra.mxu0 %v1695
    %1873 = vmatprep.subr.mxu0 %v1700
    %1874 = vmatpush1.msra.mxu0 %v1699
    %1875 = vmatprep.subr.mxu0 %v1704
    %1876 = vmatpush1.msra.mxu0 %v1703
    %1877 = vmatprep.subr.mxu0 %v1708
    %1878 = vmatpush1.msra.mxu0 %v1707
    %1879 = vmatprep.subr.mxu0 %v1712
    %1880 = vmatpush1.msra.mxu0 %v1711
    %1881 = vmatprep.subr.mxu0 %v1716
    %1882 = vmatpush1.msra.mxu0 %v1715
    %1883 = vmatprep.subr.mxu0 %v1720
    %1884 = vmatpush1.msra.mxu0 %v1719
    %1885 = vmatprep.subr.mxu0 %v1724
    %1886 = vmatpush1.msra.mxu0 %v1723
    %1887 = vmatprep.subr.mxu0 %v1728
    %1888 = vmatpush1.msra.mxu0 %v1727
    %1889 = vmatprep.subr.mxu0 %v1732
    %1890 = vmatpush1.msra.mxu0 %v1731
    %1891 = vmatprep.subr.mxu0 %v1736
    %1892 = vmatpush1.msra.mxu0 %v1735
    %1893 = vmatprep.subr.mxu0 %v1740
    %1894 = vmatpush1.msra.mxu0 %v1739
    %1895 = vmatprep.subr.mxu0 %v1744
    %1896 = vmatpush1.msra.mxu0 %v1743
    %1897 = vmatprep.mubr.f32.mxu0 %v1596
    %1898 = vmatmul.mubr.f32.gmra.mrb[0].mxu0 %v1595
    %v1899 = vpop.f32.mrb[0].mxu0
    %v1900 = vadd.f32 %v1816, %v1899
    %v1901 = vpop.f32.mrb[0].mxu0
    %v1902 = vadd.f32 %v1820, %v1901
    %1903 = vmatprep.mubr.f32.mxu0 %v1599
    %1904 = vmatmul.mubr.f32.gmra.mrb[0].mxu0 %v1598
    %v1905 = vpop.f32.mrb[0].mxu0
    %v1906 = vadd.f32 %v1816, %v1905
    %v1907 = vpop.f32.mrb[0].mxu0
    %v1908 = vadd.f32 %v1820, %v1907
    %1909 = vmatprep.mubr.f32.mxu0 %v1602
    %1910 = vmatmul.mubr.f32.gmra.mrb[0].mxu0 %v1601
    %v1911 = vpop.f32.mrb[0].mxu0
    %v1912 = vadd.f32 %v1816, %v1911
    %v1913 = vpop.f32.mrb[0].mxu0
    %v1914 = vadd.f32 %v1820, %v1913
    %1915 = vmatprep.mubr.f32.mxu0 %v1605
    %1916 = vmatmul.mubr.f32.gmra.mrb[0].mxu0 %v1604
    %v1917 = vpop.f32.mrb[0].mxu0
    %v1918 = vadd.f32 %v1816, %v1917
    %v1919 = vpop.f32.mrb[0].mxu0
    %v1920 = vadd.f32 %v1820, %v1919
    %1921 = vmatprep.mubr.f32.mxu0 %v1608
    %1922 = vmatmul.mubr.f32.gmra.mrb[0].mxu0 %v1607
    %v1923 = vpop.f32.mrb[0].mxu0
    %v1924 = vadd.f32 %v1816, %v1923
    %v1925 = vpop.f32.mrb[0].mxu0
    %v1926 = vadd.f32 %v1820, %v1925
    %1927 = vmatprep.mubr.f32.mxu0 %v1611
    %1928 = vmatmul.mubr.f32.gmra.mrb[0].mxu0 %v1610
    %v1929 = vpop.f32.mrb[0].mxu0
    %v1930 = vadd.f32 %v1816, %v1929
    %v1931 = vpop.f32.mrb[0].mxu0
    %v1932 = vadd.f32 %v1820, %v1931
    %1933 = vmatprep.mubr.f32.mxu0 %v1614
    %1934 = vmatmul.mubr.f32.gmra.mrb[0].mxu0 %v1613
    %v1935 = vpop.f32.mrb[0].mxu0
    %v1936 = vadd.f32 %v1816, %v1935
    %v1937 = vpop.f32.mrb[0].mxu0
    %v1938 = vadd.f32 %v1820, %v1937
    %1939 = vmatprep.mubr.f32.mxu0 %v1617
    %1940 = vmatmul.mubr.f32.gmra.mrb[0].mxu0 %v1616
    %v1941 = vpop.f32.mrb[0].mxu0
    %v1942 = vadd.f32 %v1816, %v1941
    %v1943 = vpop.f32.mrb[0].mxu0
    %v1944 = vadd.f32 %v1820, %v1943
    %1945 = vdwg.mxu0
    %1946 = vmatprep.subr.mxu0 %v1748
    %1947 = vmatpush1.msra.mxu0 %v1747
    %1948 = vmatprep.subr.mxu0 %v1752
    %1949 = vmatpush1.msra.mxu0 %v1751
    %1950 = vmatprep.subr.mxu0 %v1756
    %1951 = vmatpush1.msra.mxu0 %v1755
    %1952 = vmatprep.subr.mxu0 %v1760
    %1953 = vmatpush1.msra.mxu0 %v1759
    %1954 = vmatprep.subr.mxu0 %v1764
    %1955 = vmatpush1.msra.mxu0 %v1763
    %1956 = vmatprep.subr.mxu0 %v1768
    %1957 = vmatpush1.msra.mxu0 %v1767
    %1958 = vmatprep.subr.mxu0 %v1772
    %1959 = vmatpush1.msra.mxu0 %v1771
    %1960 = vmatprep.subr.mxu0 %v1776
    %1961 = vmatpush1.msra.mxu0 %v1775
    %1962 = vmatprep.subr.mxu0 %v1780
    %1963 = vmatpush1.msra.mxu0 %v1779
    %1964 = vmatprep.subr.mxu0 %v1784
    %1965 = vmatpush1.msra.mxu0 %v1783
    %1966 = vmatprep.subr.mxu0 %v1788
    %1967 = vmatpush1.msra.mxu0 %v1787
    %1968 = vmatprep.subr.mxu0 %v1792
    %1969 = vmatpush1.msra.mxu0 %v1791
    %1970 = vmatprep.subr.mxu0 %v1796
    %1971 = vmatpush1.msra.mxu0 %v1795
    %1972 = vmatprep.subr.mxu0 %v1800
    %1973 = vmatpush1.msra.mxu0 %v1799
    %1974 = vmatprep.subr.mxu0 %v1804
    %1975 = vmatpush1.msra.mxu0 %v1803
    %1976 = vmatprep.subr.mxu0 %v1808
    %1977 = vmatpush1.msra.mxu0 %v1807
    %1978 = vmatprep.subr.mxu0 0.0
    %1979 = vmatpush1.msra.mxu0 0.0
    %1980 = vmatprep.subr.mxu0 0.0
    %1981 = vmatpush1.msra.mxu0 0.0
    %1982 = vmatprep.subr.mxu0 0.0
    %1983 = vmatpush1.msra.mxu0 0.0
    %1984 = vmatprep.subr.mxu0 0.0
    %1985 = vmatpush1.msra.mxu0 0.0
    %1986 = vmatprep.subr.mxu0 0.0
    %1987 = vmatpush1.msra.mxu0 0.0
    %1988 = vmatprep.subr.mxu0 0.0
    %1989 = vmatpush1.msra.mxu0 0.0
    %1990 = vmatprep.subr.mxu0 0.0
    %1991 = vmatpush1.msra.mxu0 0.0
    %1992 = vmatprep.subr.mxu0 0.0
    %1993 = vmatpush1.msra.mxu0 0.0
    %1994 = vmatprep.subr.mxu0 0.0
    %1995 = vmatpush1.msra.mxu0 0.0
    %1996 = vmatprep.subr.mxu0 0.0
    %1997 = vmatpush1.msra.mxu0 0.0
    %1998 = vmatprep.subr.mxu0 0.0
    %1999 = vmatpush1.msra.mxu0 0.0
    %2000 = vmatprep.subr.mxu0 0.0
    %2001 = vmatpush1.msra.mxu0 0.0
    %2002 = vmatprep.subr.mxu0 0.0
    %2003 = vmatpush1.msra.mxu0 0.0
    %2004 = vmatprep.subr.mxu0 0.0
    %2005 = vmatpush1.msra.mxu0 0.0
    %2006 = vmatprep.subr.mxu0 0.0
    %2007 = vmatpush1.msra.mxu0 0.0
    %2008 = vmatprep.subr.mxu0 0.0
    %2009 = vmatpush1.msra.mxu0 0.0
    %2010 = vmatprep.mubr.f32.mxu0 0.0
    %2011 = vmatmul.mubr.f32.gmra.mrb[0].mxu0 %v1597
    %v2012 = vpop.f32.mrb[0].mxu0
    %v2013 = vadd.f32 %v1900, %v2012
    %v2014 = vpop.f32.mrb[0].mxu0
    %v2015 = vadd.f32 %v1902, %v2014
    %2016 = vmatprep.mubr.f32.mxu0 0.0
    %2017 = vmatmul.mubr.f32.gmra.mrb[0].mxu0 %v1600
    %v2018 = vpop.f32.mrb[0].mxu0
    %v2019 = vadd.f32 %v1906, %v2018
    %v2020 = vpop.f32.mrb[0].mxu0
    %v2021 = vadd.f32 %v1908, %v2020
    %2022 = vmatprep.mubr.f32.mxu0 0.0
    %2023 = vmatmul.mubr.f32.gmra.mrb[0].mxu0 %v1603
    %v2024 = vpop.f32.mrb[0].mxu0
    %v2025 = vadd.f32 %v1912, %v2024
    %v2026 = vpop.f32.mrb[0].mxu0
    %v2027 = vadd.f32 %v1914, %v2026
    %2028 = vmatprep.mubr.f32.mxu0 0.0
    %2029 = vmatmul.mubr.f32.gmra.mrb[0].mxu0 %v1606
    %v2030 = vpop.f32.mrb[0].mxu0
    %v2031 = vadd.f32 %v1918, %v2030
    %v2032 = vpop.f32.mrb[0].mxu0
    %v2033 = vadd.f32 %v1920, %v2032
    %2034 = vmatprep.mubr.f32.mxu0 0.0
    %2035 = vmatmul.mubr.f32.gmra.mrb[0].mxu0 %v1609
    %v2036 = vpop.f32.mrb[0].mxu0
    %v2037 = vadd.f32 %v1924, %v2036
    %v2038 = vpop.f32.mrb[0].mxu0
    %v2039 = vadd.f32 %v1926, %v2038
    %2040 = vmatprep.mubr.f32.mxu0 0.0
    %2041 = vmatmul.mubr.f32.gmra.mrb[0].mxu0 %v1612
    %v2042 = vpop.f32.mrb[0].mxu0
    %v2043 = vadd.f32 %v1930, %v2042
    %v2044 = vpop.f32.mrb[0].mxu0
    %v2045 = vadd.f32 %v1932, %v2044
    %2046 = vmatprep.mubr.f32.mxu0 0.0
    %2047 = vmatmul.mubr.f32.gmra.mrb[0].mxu0 %v1615
    %v2048 = vpop.f32.mrb[0].mxu0
    %v2049 = vadd.f32 %v1936, %v2048
    %v2050 = vpop.f32.mrb[0].mxu0
    %v2051 = vadd.f32 %v1938, %v2050
    %2052 = vmatprep.mubr.f32.mxu0 0.0
    %2053 = vmatmul.mubr.f32.gmra.mrb[0].mxu0 %v1618
    %v2054 = vpop.f32.mrb[0].mxu0
    %v2055 = vadd.f32 %v1942, %v2054
    %v2056 = vpop.f32.mrb[0].mxu0
    %v2057 = vadd.f32 %v1944, %v2056
    %2058 = vdwg.mxu0
    %2059 = vmatprep.subr.mxu0 %v1622
    %2060 = vmatpush1.msra.mxu0 %v1621
    %2061 = vmatprep.subr.mxu0 %v1626
    %2062 = vmatpush1.msra.mxu0 %v1625
    %2063 = vmatprep.subr.mxu0 %v1630
    %2064 = vmatpush1.msra.mxu0 %v1629
    %2065 = vmatprep.subr.mxu0 %v1634
    %2066 = vmatpush1.msra.mxu0 %v1633
    %2067 = vmatprep.subr.mxu0 %v1638
    %2068 = vmatpush1.msra.mxu0 %v1637
    %2069 = vmatprep.subr.mxu0 %v1642
    %2070 = vmatpush1.msra.mxu0 %v1641
    %2071 = vmatprep.subr.mxu0 %v1646
    %2072 = vmatpush1.msra.mxu0 %v1645
    %2073 = vmatprep.subr.mxu0 %v1650
    %2074 = vmatpush1.msra.mxu0 %v1649
    %2075 = vmatprep.subr.mxu0 %v1654
    %2076 = vmatpush1.msra.mxu0 %v1653
    %2077 = vmatprep.subr.mxu0 %v1658
    %2078 = vmatpush1.msra.mxu0 %v1657
    %2079 = vmatprep.subr.mxu0 %v1662
    %2080 = vmatpush1.msra.mxu0 %v1661
    %2081 = vmatprep.subr.mxu0 %v1666
    %2082 = vmatpush1.msra.mxu0 %v1665
    %2083 = vmatprep.subr.mxu0 %v1670
    %2084 = vmatpush1.msra.mxu0 %v1669
    %2085 = vmatprep.subr.mxu0 %v1674
    %2086 = vmatpush1.msra.mxu0 %v1673
    %2087 = vmatprep.subr.mxu0 %v1678
    %2088 = vmatpush1.msra.mxu0 %v1677
    %2089 = vmatprep.subr.mxu0 %v1682
    %2090 = vmatpush1.msra.mxu0 %v1681
    %2091 = vmatprep.subr.mxu0 %v1686
    %2092 = vmatpush1.msra.mxu0 %v1685
    %2093 = vmatprep.subr.mxu0 %v1690
    %2094 = vmatpush1.msra.mxu0 %v1689
    %2095 = vmatprep.subr.mxu0 %v1694
    %2096 = vmatpush1.msra.mxu0 %v1693
    %2097 = vmatprep.subr.mxu0 %v1698
    %2098 = vmatpush1.msra.mxu0 %v1697
    %2099 = vmatprep.subr.mxu0 %v1702
    %2100 = vmatpush1.msra.mxu0 %v1701
    %2101 = vmatprep.subr.mxu0 %v1706
    %2102 = vmatpush1.msra.mxu0 %v1705
    %2103 = vmatprep.subr.mxu0 %v1710
    %2104 = vmatpush1.msra.mxu0 %v1709
    %2105 = vmatprep.subr.mxu0 %v1714
    %2106 = vmatpush1.msra.mxu0 %v1713
    %2107 = vmatprep.subr.mxu0 %v1718
    %2108 = vmatpush1.msra.mxu0 %v1717
    %2109 = vmatprep.subr.mxu0 %v1722
    %2110 = vmatpush1.msra.mxu0 %v1721
    %2111 = vmatprep.subr.mxu0 %v1726
    %2112 = vmatpush1.msra.mxu0 %v1725
    %2113 = vmatprep.subr.mxu0 %v1730
    %2114 = vmatpush1.msra.mxu0 %v1729
    %2115 = vmatprep.subr.mxu0 %v1734
    %2116 = vmatpush1.msra.mxu0 %v1733
    %2117 = vmatprep.subr.mxu0 %v1738
    %2118 = vmatpush1.msra.mxu0 %v1737
    %2119 = vmatprep.subr.mxu0 %v1742
    %2120 = vmatpush1.msra.mxu0 %v1741
    %2121 = vmatprep.subr.mxu0 %v1746
    %2122 = vmatpush1.msra.mxu0 %v1745
    %2123 = vmatprep.mubr.f32.mxu0 %v1596
    %2124 = vmatmul.mubr.f32.gmra.mrb[0].mxu0 %v1595
    %v2125 = vpop.f32.mrb[0].mxu0
    %v2126 = vadd.f32 %v1824, %v2125
    %v2127 = vpop.f32.mrb[0].mxu0
    %v2128 = vadd.f32 %v1828, %v2127
    %2129 = vmatprep.mubr.f32.mxu0 %v1599
    %2130 = vmatmul.mubr.f32.gmra.mrb[0].mxu0 %v1598
    %v2131 = vpop.f32.mrb[0].mxu0
    %v2132 = vadd.f32 %v1824, %v2131
    %v2133 = vpop.f32.mrb[0].mxu0
    %v2134 = vadd.f32 %v1828, %v2133
    %2135 = vmatprep.mubr.f32.mxu0 %v1602
    %2136 = vmatmul.mubr.f32.gmra.mrb[0].mxu0 %v1601
    %v2137 = vpop.f32.mrb[0].mxu0
    %v2138 = vadd.f32 %v1824, %v2137
    %v2139 = vpop.f32.mrb[0].mxu0
    %v2140 = vadd.f32 %v1828, %v2139
    %2141 = vmatprep.mubr.f32.mxu0 %v1605
    %2142 = vmatmul.mubr.f32.gmra.mrb[0].mxu0 %v1604
    %v2143 = vpop.f32.mrb[0].mxu0
    %v2144 = vadd.f32 %v1824, %v2143
    %v2145 = vpop.f32.mrb[0].mxu0
    %v2146 = vadd.f32 %v1828, %v2145
    %2147 = vmatprep.mubr.f32.mxu0 %v1608
    %2148 = vmatmul.mubr.f32.gmra.mrb[0].mxu0 %v1607
    %v2149 = vpop.f32.mrb[0].mxu0
    %v2150 = vadd.f32 %v1824, %v2149
    %v2151 = vpop.f32.mrb[0].mxu0
    %v2152 = vadd.f32 %v1828, %v2151
    %2153 = vmatprep.mubr.f32.mxu0 %v1611
    %2154 = vmatmul.mubr.f32.gmra.mrb[0].mxu0 %v1610
    %v2155 = vpop.f32.mrb[0].mxu0
    %v2156 = vadd.f32 %v1824, %v2155
    %v2157 = vpop.f32.mrb[0].mxu0
    %v2158 = vadd.f32 %v1828, %v2157
    %2159 = vmatprep.mubr.f32.mxu0 %v1614
    %2160 = vmatmul.mubr.f32.gmra.mrb[0].mxu0 %v1613
    %v2161 = vpop.f32.mrb[0].mxu0
    %v2162 = vadd.f32 %v1824, %v2161
    %v2163 = vpop.f32.mrb[0].mxu0
    %v2164 = vadd.f32 %v1828, %v2163
    %2165 = vmatprep.mubr.f32.mxu0 %v1617
    %2166 = vmatmul.mubr.f32.gmra.mrb[0].mxu0 %v1616
    %v2167 = vpop.f32.mrb[0].mxu0
    %v2168 = vadd.f32 %v1824, %v2167
    %v2169 = vpop.f32.mrb[0].mxu0
    %v2170 = vadd.f32 %v1828, %v2169
    %2171 = vdwg.mxu0
    %2172 = vmatprep.subr.mxu0 %v1750
    %2173 = vmatpush1.msra.mxu0 %v1749
    %2174 = vmatprep.subr.mxu0 %v1754
    %2175 = vmatpush1.msra.mxu0 %v1753
    %2176 = vmatprep.subr.mxu0 %v1758
    %2177 = vmatpush1.msra.mxu0 %v1757
    %2178 = vmatprep.subr.mxu0 %v1762
    %2179 = vmatpush1.msra.mxu0 %v1761
    %2180 = vmatprep.subr.mxu0 %v1766
    %2181 = vmatpush1.msra.mxu0 %v1765
    %2182 = vmatprep.subr.mxu0 %v1770
    %2183 = vmatpush1.msra.mxu0 %v1769
    %2184 = vmatprep.subr.mxu0 %v1774
    %2185 = vmatpush1.msra.mxu0 %v1773
    %2186 = vmatprep.subr.mxu0 %v1778
    %2187 = vmatpush1.msra.mxu0 %v1777
    %2188 = vmatprep.subr.mxu0 %v1782
    %2189 = vmatpush1.msra.mxu0 %v1781
    %2190 = vmatprep.subr.mxu0 %v1786
    %2191 = vmatpush1.msra.mxu0 %v1785
    %2192 = vmatprep.subr.mxu0 %v1790
    %2193 = vmatpush1.msra.mxu0 %v1789
    %2194 = vmatprep.subr.mxu0 %v1794
    %2195 = vmatpush1.msra.mxu0 %v1793
    %2196 = vmatprep.subr.mxu0 %v1798
    %2197 = vmatpush1.msra.mxu0 %v1797
    %2198 = vmatprep.subr.mxu0 %v1802
    %2199 = vmatpush1.msra.mxu0 %v1801
    %2200 = vmatprep.subr.mxu0 %v1806
    %2201 = vmatpush1.msra.mxu0 %v1805
    %2202 = vmatprep.subr.mxu0 %v1810
    %2203 = vmatpush1.msra.mxu0 %v1809
    %2204 = vmatprep.subr.mxu0 0.0
    %2205 = vmatpush1.msra.mxu0 0.0
    %2206 = vmatprep.subr.mxu0 0.0
    %2207 = vmatpush1.msra.mxu0 0.0
    %2208 = vmatprep.subr.mxu0 0.0
    %2209 = vmatpush1.msra.mxu0 0.0
    %2210 = vmatprep.subr.mxu0 0.0
    %2211 = vmatpush1.msra.mxu0 0.0
    %2212 = vmatprep.subr.mxu0 0.0
    %2213 = vmatpush1.msra.mxu0 0.0
    %2214 = vmatprep.subr.mxu0 0.0
    %2215 = vmatpush1.msra.mxu0 0.0
    %2216 = vmatprep.subr.mxu0 0.0
    %2217 = vmatpush1.msra.mxu0 0.0
    %2218 = vmatprep.subr.mxu0 0.0
    %2219 = vmatpush1.msra.mxu0 0.0
    %2220 = vmatprep.subr.mxu0 0.0
    %2221 = vmatpush1.msra.mxu0 0.0
    %2222 = vmatprep.subr.mxu0 0.0
    %2223 = vmatpush1.msra.mxu0 0.0
    %2224 = vmatprep.subr.mxu0 0.0
    %2225 = vmatpush1.msra.mxu0 0.0
    %2226 = vmatprep.subr.mxu0 0.0
    %2227 = vmatpush1.msra.mxu0 0.0
    %2228 = vmatprep.subr.mxu0 0.0
    %2229 = vmatpush1.msra.mxu0 0.0
    %2230 = vmatprep.subr.mxu0 0.0
    %2231 = vmatpush1.msra.mxu0 0.0
    %2232 = vmatprep.subr.mxu0 0.0
    %2233 = vmatpush1.msra.mxu0 0.0
    %2234 = vmatprep.subr.mxu0 0.0
    %2235 = vmatpush1.msra.mxu0 0.0
    %2236 = vmatprep.mubr.f32.mxu0 0.0
    %2237 = vmatmul.mubr.f32.gmra.mrb[0].mxu0 %v1597
    %v2238 = vpop.f32.mrb[0].mxu0
    %v2239 = vadd.f32 %v2126, %v2238
    %v2240 = vpop.f32.mrb[0].mxu0
    %v2241 = vadd.f32 %v2128, %v2240
    %2242 = vmatprep.mubr.f32.mxu0 0.0
    %2243 = vmatmul.mubr.f32.gmra.mrb[0].mxu0 %v1600
    %v2244 = vpop.f32.mrb[0].mxu0
    %v2245 = vadd.f32 %v2132, %v2244
    %v2246 = vpop.f32.mrb[0].mxu0
    %v2247 = vadd.f32 %v2134, %v2246
    %2248 = vmatprep.mubr.f32.mxu0 0.0
    %2249 = vmatmul.mubr.f32.gmra.mrb[0].mxu0 %v1603
    %v2250 = vpop.f32.mrb[0].mxu0
    %v2251 = vadd.f32 %v2138, %v2250
    %v2252 = vpop.f32.mrb[0].mxu0
    %v2253 = vadd.f32 %v2140, %v2252
    %2254 = vmatprep.mubr.f32.mxu0 0.0
    %2255 = vmatmul.mubr.f32.gmra.mrb[0].mxu0 %v1606
    %v2256 = vpop.f32.mrb[0].mxu0
    %v2257 = vadd.f32 %v2144, %v2256
    %v2258 = vpop.f32.mrb[0].mxu0
    %v2259 = vadd.f32 %v2146, %v2258
    %2260 = vmatprep.mubr.f32.mxu0 0.0
    %2261 = vmatmul.mubr.f32.gmra.mrb[0].mxu0 %v1609
    %v2262 = vpop.f32.mrb[0].mxu0
    %v2263 = vadd.f32 %v2150, %v2262
    %v2264 = vpop.f32.mrb[0].mxu0
    %v2265 = vadd.f32 %v2152, %v2264
    %2266 = vmatprep.mubr.f32.mxu0 0.0
    %2267 = vmatmul.mubr.f32.gmra.mrb[0].mxu0 %v1612
    %v2268 = vpop.f32.mrb[0].mxu0
    %v2269 = vadd.f32 %v2156, %v2268
    %v2270 = vpop.f32.mrb[0].mxu0
    %v2271 = vadd.f32 %v2158, %v2270
    %2272 = vmatprep.mubr.f32.mxu0 0.0
    %2273 = vmatmul.mubr.f32.gmra.mrb[0].mxu0 %v1615
    %v2274 = vpop.f32.mrb[0].mxu0
    %v2275 = vadd.f32 %v2162, %v2274
    %v2276 = vpop.f32.mrb[0].mxu0
    %v2277 = vadd.f32 %v2164, %v2276
    %2278 = vmatprep.mubr.f32.mxu0 0.0
    %2279 = vmatmul.mubr.f32.gmra.mrb[0].mxu0 %v1618
    %v2280 = vpop.f32.mrb[0].mxu0
    %v2281 = vadd.f32 %v2168, %v2280
    %v2282 = vpop.f32.mrb[0].mxu0
    %v2283 = vadd.f32 %v2170, %v2282
    %2284 = vdwg.mxu0
    %v2285 = vmax.f32 %v2013, 0.0
    %v2286 = vmax.f32 %v2015, 0.0
    %v2287 = vmax.f32 %v2239, 0.0
    %v2288 = vmax.f32 %v2241, 0.0
    %v2289 = vmax.f32 %v2019, 0.0
    %v2290 = vmax.f32 %v2021, 0.0
    %v2291 = vmax.f32 %v2245, 0.0
    %v2292 = vmax.f32 %v2247, 0.0
    %v2293 = vmax.f32 %v2025, 0.0
    %v2294 = vmax.f32 %v2027, 0.0
    %v2295 = vmax.f32 %v2251, 0.0
    %v2296 = vmax.f32 %v2253, 0.0
    %v2297 = vmax.f32 %v2031, 0.0
    %v2298 = vmax.f32 %v2033, 0.0
    %v2299 = vmax.f32 %v2257, 0.0
    %v2300 = vmax.f32 %v2259, 0.0
    %v2301 = vmax.f32 %v2037, 0.0
    %v2302 = vmax.f32 %v2039, 0.0
    %v2303 = vmax.f32 %v2263, 0.0
    %v2304 = vmax.f32 %v2265, 0.0
    %v2305 = vmax.f32 %v2043, 0.0
    %v2306 = vmax.f32 %v2045, 0.0
    %v2307 = vmax.f32 %v2269, 0.0
    %v2308 = vmax.f32 %v2271, 0.0
    %v2309 = vmax.f32 %v2049, 0.0
    %v2310 = vmax.f32 %v2051, 0.0
    %v2311 = vmax.f32 %v2275, 0.0
    %v2312 = vmax.f32 %v2277, 0.0
    %v2313 = vmax.f32 %v2055, 0.0
    %v2314 = vmax.f32 %v2057, 0.0
    %v2315 = vmax.f32 %v2281, 0.0
    %v2316 = vmax.f32 %v2283, 0.0
    %v2317 = vmin.f32 %v2285, 6.0
    %v2318 = vmin.f32 %v2286, 6.0
    %v2319 = vmin.f32 %v2287, 6.0
    %v2320 = vmin.f32 %v2288, 6.0
    %v2321 = vmin.f32 %v2289, 6.0
    %v2322 = vmin.f32 %v2290, 6.0
    %v2323 = vmin.f32 %v2291, 6.0
    %v2324 = vmin.f32 %v2292, 6.0
    %v2325 = vmin.f32 %v2293, 6.0
    %v2326 = vmin.f32 %v2294, 6.0
    %v2327 = vmin.f32 %v2295, 6.0
    %v2328 = vmin.f32 %v2296, 6.0
    %v2329 = vmin.f32 %v2297, 6.0
    %v2330 = vmin.f32 %v2298, 6.0
    %v2331 = vmin.f32 %v2299, 6.0
    %v2332 = vmin.f32 %v2300, 6.0
    %v2333 = vmin.f32 %v2301, 6.0
    %v2334 = vmin.f32 %v2302, 6.0
    %v2335 = vmin.f32 %v2303, 6.0
    %v2336 = vmin.f32 %v2304, 6.0
    %v2337 = vmin.f32 %v2305, 6.0
    %v2338 = vmin.f32 %v2306, 6.0
    %v2339 = vmin.f32 %v2307, 6.0
    %v2340 = vmin.f32 %v2308, 6.0
    %v2341 = vmin.f32 %v2309, 6.0
    %v2342 = vmin.f32 %v2310, 6.0
    %v2343 = vmin.f32 %v2311, 6.0
    %v2344 = vmin.f32 %v2312, 6.0
    %v2345 = vmin.f32 %v2313, 6.0
    %v2346 = vmin.f32 %v2314, 6.0
    %v2347 = vmin.f32 %v2315, 6.0
    %v2348 = vmin.f32 %v2316, 6.0
    %v2349 = vmax.f32 %v2317, %v2318
    %v2350 = vmax.f32 %v2321, %v2322
    %v2351 = vmax.f32 %v2325, %v2326
    %v2352 = vmax.f32 %v2329, %v2330
    %v2353 = vmax.f32 %v2333, %v2334
    %v2354 = vmax.f32 %v2337, %v2338
    %v2355 = vmax.f32 %v2341, %v2342
    %v2356 = vmax.f32 %v2345, %v2346
    %v2357 = vmax.f32 %v2319, %v2320
    %v2358 = vmax.f32 %v2323, %v2324
    %v2359 = vmax.f32 %v2327, %v2328
    %v2360 = vmax.f32 %v2331, %v2332
    %v2361 = vmax.f32 %v2335, %v2336
    %v2362 = vmax.f32 %v2339, %v2340
    %v2363 = vmax.f32 %v2343, %v2344
    %v2364 = vmax.f32 %v2347, %v2348
    %v2365 = vmax.f32 %v2349, %v2357
    %v2366 = vmax.f32 %v2350, %v2358
    %v2367 = vmax.f32 %v2351, %v2359
    %v2368 = vmax.f32 %v2352, %v2360
    %v2369 = vmax.f32 %v2353, %v2361
    %v2370 = vmax.f32 %v2354, %v2362
    %v2371 = vmax.f32 %v2355, %v2363
    %v2372 = vmax.f32 %v2356, %v2364
    %v2373 = vld [vmem:[%s5] sm:$0xff]
    %v2374 = vld [vmem:[%s5 + $0x8] sm:$0xff]
    %v2375 = vld [vmem:[%s5 + $0x10] sm:$0xff]
    %v2376 = vld [vmem:[%s5 + $0x18] sm:$0xff]
    %v2377 = vld [vmem:[%s5 + $0x20] sm:$0xff]
    %v2378 = vld [vmem:[%s5 + $0x28] sm:$0xff]
    %v2379 = vld [vmem:[%s5 + $0x30] sm:$0xff]
    %v2380 = vld [vmem:[%s5 + $0x38] sm:$0xff]
    %v2381 = vld [vmem:[%s5 + $0x40] sm:$0xff]
    %v2382 = vld [vmem:[%s5 + $0x48] sm:$0xff]
    %v2383 = vld [vmem:[%s5 + $0x50] sm:$0xff]
    %v2384 = vld [vmem:[%s5 + $0x58] sm:$0xff]
    %v2385 = vld [vmem:[%s5 + $0x60] sm:$0xff]
    %v2386 = vld [vmem:[%s5 + $0x68] sm:$0xff]
    %v2387 = vld [vmem:[%s5 + $0x70] sm:$0xff]
    %v2388 = vld [vmem:[%s5 + $0x78] sm:$0xff]
    %v2389 = vld [vmem:[#allocation11] sm:$0x1]
    %v2391 = vlaneseq
    %v2392 = vshrl.u32 %v2391, 7
    %v2393 = vsub.s32 0, %v2392
    %v2394 = vrot.slane %v2389, %v2393
    %2396 = vmatprep.subr.mxu0 0.0
    %2397 = vmatpush1.msra.mxu0 %v2373
    %2398 = vmatprep.subr.mxu0 0.0
    %2399 = vmatpush1.msra.mxu0 %v2374
    %2400 = vmatprep.subr.mxu0 0.0
    %2401 = vmatpush1.msra.mxu0 %v2375
    %2402 = vmatprep.subr.mxu0 0.0
    %2403 = vmatpush1.msra.mxu0 %v2376
    %2404 = vmatprep.subr.mxu0 0.0
    %2405 = vmatpush1.msra.mxu0 %v2377
    %2406 = vmatprep.subr.mxu0 0.0
    %2407 = vmatpush1.msra.mxu0 %v2378
    %2408 = vmatprep.subr.mxu0 0.0
    %2409 = vmatpush1.msra.mxu0 %v2379
    %2410 = vmatprep.subr.mxu0 0.0
    %2411 = vmatpush1.msra.mxu0 %v2380
    %2412 = vmatprep.subr.mxu0 0.0
    %2413 = vmatpush1.msra.mxu0 %v2381
    %2414 = vmatprep.subr.mxu0 0.0
    %2415 = vmatpush1.msra.mxu0 %v2382
    %2416 = vmatprep.subr.mxu0 0.0
    %2417 = vmatpush1.msra.mxu0 %v2383
    %2418 = vmatprep.subr.mxu0 0.0
    %2419 = vmatpush1.msra.mxu0 %v2384
    %2420 = vmatprep.subr.mxu0 0.0
    %2421 = vmatpush1.msra.mxu0 %v2385
    %2422 = vmatprep.subr.mxu0 0.0
    %2423 = vmatpush1.msra.mxu0 %v2386
    %2424 = vmatprep.subr.mxu0 0.0
    %2425 = vmatpush1.msra.mxu0 %v2387
    %2426 = vmatprep.subr.mxu0 0.0
    %2427 = vmatpush1.msra.mxu0 %v2388
    %2428 = vmatprep.subr.mxu0 0.0
    %2429 = vmatpush1.msra.mxu0 0.0
    %2430 = vmatprep.subr.mxu0 0.0
    %2431 = vmatpush1.msra.mxu0 0.0
    %2432 = vmatprep.subr.mxu0 0.0
    %2433 = vmatpush1.msra.mxu0 0.0
    %2434 = vmatprep.subr.mxu0 0.0
    %2435 = vmatpush1.msra.mxu0 0.0
    %2436 = vmatprep.subr.mxu0 0.0
    %2437 = vmatpush1.msra.mxu0 0.0
    %2438 = vmatprep.subr.mxu0 0.0
    %2439 = vmatpush1.msra.mxu0 0.0
    %2440 = vmatprep.subr.mxu0 0.0
    %2441 = vmatpush1.msra.mxu0 0.0
    %2442 = vmatprep.subr.mxu0 0.0
    %2443 = vmatpush1.msra.mxu0 0.0
    %2444 = vmatprep.subr.mxu0 0.0
    %2445 = vmatpush1.msra.mxu0 0.0
    %2446 = vmatprep.subr.mxu0 0.0
    %2447 = vmatpush1.msra.mxu0 0.0
    %2448 = vmatprep.subr.mxu0 0.0
    %2449 = vmatpush1.msra.mxu0 0.0
    %2450 = vmatprep.subr.mxu0 0.0
    %2451 = vmatpush1.msra.mxu0 0.0
    %2452 = vmatprep.subr.mxu0 0.0
    %2453 = vmatpush1.msra.mxu0 0.0
    %2454 = vmatprep.subr.mxu0 0.0
    %2455 = vmatpush1.msra.mxu0 0.0
    %2456 = vmatprep.subr.mxu0 0.0
    %2457 = vmatpush1.msra.mxu0 0.0
    %2458 = vmatprep.subr.mxu0 0.0
    %2459 = vmatpush1.msra.mxu0 0.0
    %2460 = vmatprep.mubr.f32.mxu0 0.0
    %2461 = vmatmul.mubr.f32.gmra.mrb[0].mxu0 %v2365
    %v2462 = vpop.f32.mrb[0].mxu0
    %v2463 = vadd.f32 %v2394, %v2462
    %v2464 = vpop.f32.mrb[0].mxu0
    %2465 = vmatprep.mubr.f32.mxu0 0.0
    %2466 = vmatmul.mubr.f32.gmra.mrb[0].mxu0 %v2366
    %v2467 = vpop.f32.mrb[0].mxu0
    %v2468 = vadd.f32 %v2394, %v2467
    %v2469 = vpop.f32.mrb[0].mxu0
    %2470 = vmatprep.mubr.f32.mxu0 0.0
    %2471 = vmatmul.mubr.f32.gmra.mrb[0].mxu0 %v2367
    %v2472 = vpop.f32.mrb[0].mxu0
    %v2473 = vadd.f32 %v2394, %v2472
    %v2474 = vpop.f32.mrb[0].mxu0
    %2475 = vmatprep.mubr.f32.mxu0 0.0
    %2476 = vmatmul.mubr.f32.gmra.mrb[0].mxu0 %v2368
    %v2477 = vpop.f32.mrb[0].mxu0
    %v2478 = vadd.f32 %v2394, %v2477
    %v2479 = vpop.f32.mrb[0].mxu0
    %2480 = vmatprep.mubr.f32.mxu0 0.0
    %2481 = vmatmul.mubr.f32.gmra.mrb[0].mxu0 %v2369
    %v2482 = vpop.f32.mrb[0].mxu0
    %v2483 = vadd.f32 %v2394, %v2482
    %v2484 = vpop.f32.mrb[0].mxu0
    %2485 = vmatprep.mubr.f32.mxu0 0.0
    %2486 = vmatmul.mubr.f32.gmra.mrb[0].mxu0 %v2370
    %v2487 = vpop.f32.mrb[0].mxu0
    %v2488 = vadd.f32 %v2394, %v2487
    %v2489 = vpop.f32.mrb[0].mxu0
    %2490 = vmatprep.mubr.f32.mxu0 0.0
    %2491 = vmatmul.mubr.f32.gmra.mrb[0].mxu0 %v2371
    %v2492 = vpop.f32.mrb[0].mxu0
    %v2493 = vadd.f32 %v2394, %v2492
    %v2494 = vpop.f32.mrb[0].mxu0
    %2495 = vmatprep.mubr.f32.mxu0 0.0
    %2496 = vmatmul.mubr.f32.gmra.mrb[0].mxu0 %v2372
    %v2497 = vpop.f32.mrb[0].mxu0
    %v2498 = vadd.f32 %v2394, %v2497
    %v2499 = vpop.f32.mrb[0].mxu0
    %2500 = vdwg.mxu0
    %v2501 = vmax.f32 %v2463, 0.0
    %v2502 = vmax.f32 %v2468, 0.0
    %v2503 = vmax.f32 %v2473, 0.0
    %v2504 = vmax.f32 %v2478, 0.0
    %v2505 = vmax.f32 %v2483, 0.0
    %v2506 = vmax.f32 %v2488, 0.0
    %v2507 = vmax.f32 %v2493, 0.0
    %v2508 = vmax.f32 %v2498, 0.0
    %v2509 = vmin.f32 %v2501, 6.0
    %v2510 = vmin.f32 %v2502, 6.0
    %v2511 = vmin.f32 %v2503, 6.0
    %v2512 = vmin.f32 %v2504, 6.0
    %v2513 = vmin.f32 %v2505, 6.0
    %v2514 = vmin.f32 %v2506, 6.0
    %v2515 = vmin.f32 %v2507, 6.0
    %v2516 = vmin.f32 %v2508, 6.0
    %v2517 = vld [vmem:[#allocation13] sm:$0xff]
    %v2518 = vld [vmem:[#allocation13 + $0x8] sm:$0xff]
    %v2519 = vld [vmem:[#allocation13 + $0x10] sm:$0xff]
    %v2520 = vld [vmem:[#allocation13 + $0x18] sm:$0xff]
    %vm2521 = vcmask 261120
    %v2523 = vsel %vm2521, %v2509, 0
    %v2526 = vsel %vm2521, %v2510, 0
    %v2529 = vsel %vm2521, %v2511, 0
    %v2532 = vsel %vm2521, %v2512, 0
    %v2535 = vsel %vm2521, %v2513, 0
    %v2538 = vsel %vm2521, %v2514, 0
    %v2541 = vsel %vm2521, %v2515, 0
    %v2544 = vsel %vm2521, %v2516, 0
    %2546 = vmatprep.subr.mxu0 0.0
    %2547 = vmatpush1.msra.mxu0 %v2517
    %2548 = vmatprep.subr.mxu0 0.0
    %2549 = vmatpush1.msra.mxu0 %v2518
    %2550 = vmatprep.subr.mxu0 0.0
    %2551 = vmatpush1.msra.mxu0 %v2519
    %2552 = vmatprep.subr.mxu0 0.0
    %2553 = vmatpush1.msra.mxu0 %v2520
    %2554 = vmatprep.subr.mxu0 0.0
    %2555 = vmatpush1.msra.mxu0 0.0
    %2556 = vmatprep.subr.mxu0 0.0
    %2557 = vmatpush1.msra.mxu0 0.0
    %2558 = vmatprep.subr.mxu0 0.0
    %2559 = vmatpush1.msra.mxu0 0.0
    %2560 = vmatprep.subr.mxu0 0.0
    %2561 = vmatpush1.msra.mxu0 0.0
    %2562 = vmatprep.subr.mxu0 0.0
    %2563 = vmatpush1.msra.mxu0 0.0
    %2564 = vmatprep.subr.mxu0 0.0
    %2565 = vmatpush1.msra.mxu0 0.0
    %2566 = vmatprep.subr.mxu0 0.0
    %2567 = vmatpush1.msra.mxu0 0.0
    %2568 = vmatprep.subr.mxu0 0.0
    %2569 = vmatpush1.msra.mxu0 0.0
    %2570 = vmatprep.subr.mxu0 0.0
    %2571 = vmatpush1.msra.mxu0 0.0
    %2572 = vmatprep.subr.mxu0 0.0
    %2573 = vmatpush1.msra.mxu0 0.0
    %2574 = vmatprep.subr.mxu0 0.0
    %2575 = vmatpush1.msra.mxu0 0.0
    %2576 = vmatprep.subr.mxu0 0.0
    %2577 = vmatpush1.msra.mxu0 0.0
    %2578 = vmatprep.subr.mxu0 0.0
    %2579 = vmatpush1.msra.mxu0 0.0
    %2580 = vmatprep.subr.mxu0 0.0
    %2581 = vmatpush1.msra.mxu0 0.0
    %2582 = vmatprep.subr.mxu0 0.0
    %2583 = vmatpush1.msra.mxu0 0.0
    %2584 = vmatprep.subr.mxu0 0.0
    %2585 = vmatpush1.msra.mxu0 0.0
    %2586 = vmatprep.subr.mxu0 0.0
    %2587 = vmatpush1.msra.mxu0 0.0
    %2588 = vmatprep.subr.mxu0 0.0
    %2589 = vmatpush1.msra.mxu0 0.0
    %2590 = vmatprep.subr.mxu0 0.0
    %2591 = vmatpush1.msra.mxu0 0.0
    %2592 = vmatprep.subr.mxu0 0.0
    %2593 = vmatpush1.msra.mxu0 0.0
    %2594 = vmatprep.subr.mxu0 0.0
    %2595 = vmatpush1.msra.mxu0 0.0
    %2596 = vmatprep.subr.mxu0 0.0
    %2597 = vmatpush1.msra.mxu0 0.0
    %2598 = vmatprep.subr.mxu0 0.0
    %2599 = vmatpush1.msra.mxu0 0.0
    %2600 = vmatprep.subr.mxu0 0.0
    %2601 = vmatpush1.msra.mxu0 0.0
    %2602 = vmatprep.subr.mxu0 0.0
    %2603 = vmatpush1.msra.mxu0 0.0
    %2604 = vmatprep.subr.mxu0 0.0
    %2605 = vmatpush1.msra.mxu0 0.0
    %2606 = vmatprep.subr.mxu0 0.0
    %2607 = vmatpush1.msra.mxu0 0.0
    %2608 = vmatprep.subr.mxu0 0.0
    %2609 = vmatpush1.msra.mxu0 0.0
    %2610 = vmatprep.mubr.f32.mxu0 0.0
    %2611 = vmatmul.mubr.f32.gmra.mrb[0].mxu0 %v2523
    %v2612 = vpop.f32.mrb[0].mxu0
    %v2613 = vadd.f32 0.0, %v2612
    %v2614 = vpop.f32.mrb[0].mxu0
    %2615 = vmatprep.mubr.f32.mxu0 0.0
    %2616 = vmatmul.mubr.f32.gmra.mrb[0].mxu0 %v2526
    %v2617 = vpop.f32.mrb[0].mxu0
    %v2618 = vadd.f32 0.0, %v2617
    %v2619 = vpop.f32.mrb[0].mxu0
    %2620 = vmatprep.mubr.f32.mxu0 0.0
    %2621 = vmatmul.mubr.f32.gmra.mrb[0].mxu0 %v2529
    %v2622 = vpop.f32.mrb[0].mxu0
    %v2623 = vadd.f32 0.0, %v2622
    %v2624 = vpop.f32.mrb[0].mxu0
    %2625 = vmatprep.mubr.f32.mxu0 0.0
    %2626 = vmatmul.mubr.f32.gmra.mrb[0].mxu0 %v2532
    %v2627 = vpop.f32.mrb[0].mxu0
    %v2628 = vadd.f32 0.0, %v2627
    %v2629 = vpop.f32.mrb[0].mxu0
    %2630 = vmatprep.mubr.f32.mxu0 0.0
    %2631 = vmatmul.mubr.f32.gmra.mrb[0].mxu0 %v2535
    %v2632 = vpop.f32.mrb[0].mxu0
    %v2633 = vadd.f32 0.0, %v2632
    %v2634 = vpop.f32.mrb[0].mxu0
    %2635 = vmatprep.mubr.f32.mxu0 0.0
    %2636 = vmatmul.mubr.f32.gmra.mrb[0].mxu0 %v2538
    %v2637 = vpop.f32.mrb[0].mxu0
    %v2638 = vadd.f32 0.0, %v2637
    %v2639 = vpop.f32.mrb[0].mxu0
    %2640 = vmatprep.mubr.f32.mxu0 0.0
    %2641 = vmatmul.mubr.f32.gmra.mrb[0].mxu0 %v2541
    %v2642 = vpop.f32.mrb[0].mxu0
    %v2643 = vadd.f32 0.0, %v2642
    %v2644 = vpop.f32.mrb[0].mxu0
    %2645 = vmatprep.mubr.f32.mxu0 0.0
    %2646 = vmatmul.mubr.f32.gmra.mrb[0].mxu0 %v2544
    %v2647 = vpop.f32.mrb[0].mxu0
    %v2648 = vadd.f32 0.0, %v2647
    %v2649 = vpop.f32.mrb[0].mxu0
    %2650 = vdwg.mxu0
    %v2651 = vld [vmem:[#allocation14] sm:$0xff]
    %v2652 = vld [vmem:[#allocation14 + $0x8] sm:$0xff]
    %v2653 = vld [vmem:[#allocation14 + $0x10] sm:$0xff]
    %v2654 = vld [vmem:[#allocation14 + $0x18] sm:$0xff]
    %v2655 = vlaneseq
    %v2656 = vand.u32 %v2655, 127
    %vm2657 = vcmp.ge.s32.totalorder %v2656, 64
    %vm2658 = vcmp.lt.s32.totalorder %v2656, 96
    %vm2659 = vmand %vm2657, %vm2658
    %v2661 = vsel %vm2521, 0.0, 0
    %2663 = vmatprep.subr.mxu0 0.0
    %2664 = vmatpush1.msra.mxu0 %v2651
    %2665 = vmatprep.subr.mxu0 0.0
    %2666 = vmatpush1.msra.mxu0 %v2652
    %2667 = vmatprep.subr.mxu0 0.0
    %2668 = vmatpush1.msra.mxu0 %v2653
    %2669 = vmatprep.subr.mxu0 0.0
    %2670 = vmatpush1.msra.mxu0 %v2654
    %2671 = vmatprep.subr.mxu0 0.0
    %2672 = vmatpush1.msra.mxu0 0.0
    %2673 = vmatprep.subr.mxu0 0.0
    %2674 = vmatpush1.msra.mxu0 0.0
    %2675 = vmatprep.subr.mxu0 0.0
    %2676 = vmatpush1.msra.mxu0 0.0
    %2677 = vmatprep.subr.mxu0 0.0
    %2678 = vmatpush1.msra.mxu0 0.0
    %2679 = vmatprep.subr.mxu0 0.0
    %2680 = vmatpush1.msra.mxu0 0.0
    %2681 = vmatprep.subr.mxu0 0.0
    %2682 = vmatpush1.msra.mxu0 0.0
    %2683 = vmatprep.subr.mxu0 0.0
    %2684 = vmatpush1.msra.mxu0 0.0
    %2685 = vmatprep.subr.mxu0 0.0
    %2686 = vmatpush1.msra.mxu0 0.0
    %2687 = vmatprep.subr.mxu0 0.0
    %2688 = vmatpush1.msra.mxu0 0.0
    %2689 = vmatprep.subr.mxu0 0.0
    %2690 = vmatpush1.msra.mxu0 0.0
    %2691 = vmatprep.subr.mxu0 0.0
    %2692 = vmatpush1.msra.mxu0 0.0
    %2693 = vmatprep.subr.mxu0 0.0
    %2694 = vmatpush1.msra.mxu0 0.0
    %2695 = vmatprep.subr.mxu0 0.0
    %2696 = vmatpush1.msra.mxu0 0.0
    %2697 = vmatprep.subr.mxu0 0.0
    %2698 = vmatpush1.msra.mxu0 0.0
    %2699 = vmatprep.subr.mxu0 0.0
    %2700 = vmatpush1.msra.mxu0 0.0
    %2701 = vmatprep.subr.mxu0 0.0
    %2702 = vmatpush1.msra.mxu0 0.0
    %2703 = vmatprep.subr.mxu0 0.0
    %2704 = vmatpush1.msra.mxu0 0.0
    %2705 = vmatprep.subr.mxu0 0.0
    %2706 = vmatpush1.msra.mxu0 0.0
    %2707 = vmatprep.subr.mxu0 0.0
    %2708 = vmatpush1.msra.mxu0 0.0
    %2709 = vmatprep.subr.mxu0 0.0
    %2710 = vmatpush1.msra.mxu0 0.0
    %2711 = vmatprep.subr.mxu0 0.0
    %2712 = vmatpush1.msra.mxu0 0.0
    %2713 = vmatprep.subr.mxu0 0.0
    %2714 = vmatpush1.msra.mxu0 0.0
    %2715 = vmatprep.subr.mxu0 0.0
    %2716 = vmatpush1.msra.mxu0 0.0
    %2717 = vmatprep.subr.mxu0 0.0
    %2718 = vmatpush1.msra.mxu0 0.0
    %2719 = vmatprep.subr.mxu0 0.0
    %2720 = vmatpush1.msra.mxu0 0.0
    %2721 = vmatprep.subr.mxu0 0.0
    %2722 = vmatpush1.msra.mxu0 0.0
    %2723 = vmatprep.subr.mxu0 0.0
    %2724 = vmatpush1.msra.mxu0 0.0
    %2725 = vmatprep.subr.mxu0 0.0
    %2726 = vmatpush1.msra.mxu0 0.0
    %2727 = vmatprep.mubr.f32.mxu0 0.0
    %2728 = vmatmul.mubr.f32.gmra.mrb[0].mxu0 %v2661
    %v2729 = vpop.f32.mrb[0].mxu0
    %v2730 = vadd.f32 0.0, %v2729
    %v2731 = vpop.f32.mrb[0].mxu0
    %2732 = vdwg.mxu0
    %v2733 = vadd.f32 %v2613, %v2730
    %v2734 = vmul.f32 %v2733, 0.5
    %v2735 = vsel %vm2659, %v2733, %v2734
    %v2736 = vtanh.pop %v2735
    %v2737 = vmul.f32 %v2736, 0.5
    %v2738 = vadd.f32 %v2737, 0.5
    %v2739 = vsel %vm2659, %v2736, %v2738
    %v2740 = vmul.f32 %v2739, 0.0
    %2742 = vrot.lane.b32.xlu0 %v2739, 64
    %v2743 = vpop.permute.xlu0 %2742
    %v2745 = vmul.f32 %v2739, %v2743
    %2747 = vrot.lane.b32.xlu0 %v2745, 32
    %v2748 = vpop.permute.xlu0 %2747
    %v2750 = vadd.f32 %v2740, %v2748
    %v2751 = vtanh.pop %v2750
    %2753 = vrot.lane.b32.xlu0 %v2751, 64
    %v2754 = vpop.permute.xlu0 %2753
    %v2756 = vmul.f32 %v2739, %v2754
    %v2757 = vmax.f32 %v2756, 0.0
    %v2758 = vmin.f32 %v2757, 6.0
    %2760 = vrot.lane.b32.xlu0 %v2756, 32
    %v2761 = vpop.permute.xlu0 %2760
    %v2762 = vsel %vm2521, %v2761, 0
    %2764 = vmatprep.subr.mxu0 0.0
    %2765 = vmatpush1.msra.mxu0 %v2651
    %2766 = vmatprep.subr.mxu0 0.0
    %2767 = vmatpush1.msra.mxu0 %v2652
    %2768 = vmatprep.subr.mxu0 0.0
    %2769 = vmatpush1.msra.mxu0 %v2653
    %2770 = vmatprep.subr.mxu0 0.0
    %2771 = vmatpush1.msra.mxu0 %v2654
    %2772 = vmatprep.subr.mxu0 0.0
    %2773 = vmatpush1.msra.mxu0 0.0
    %2774 = vmatprep.subr.mxu0 0.0
    %2775 = vmatpush1.msra.mxu0 0.0
    %2776 = vmatprep.subr.mxu0 0.0
    %2777 = vmatpush1.msra.mxu0 0.0
    %2778 = vmatprep.subr.mxu0 0.0
    %2779 = vmatpush1.msra.mxu0 0.0
    %2780 = vmatprep.subr.mxu0 0.0
    %2781 = vmatpush1.msra.mxu0 0.0
    %2782 = vmatprep.subr.mxu0 0.0
    %2783 = vmatpush1.msra.mxu0 0.0
    %2784 = vmatprep.subr.mxu0 0.0
    %2785 = vmatpush1.msra.mxu0 0.0
    %2786 = vmatprep.subr.mxu0 0.0
    %2787 = vmatpush1.msra.mxu0 0.0
    %2788 = vmatprep.subr.mxu0 0.0
    %2789 = vmatpush1.msra.mxu0 0.0
    %2790 = vmatprep.subr.mxu0 0.0
    %2791 = vmatpush1.msra.mxu0 0.0
    %2792 = vmatprep.subr.mxu0 0.0
    %2793 = vmatpush1.msra.mxu0 0.0
    %2794 = vmatprep.subr.mxu0 0.0
    %2795 = vmatpush1.msra.mxu0 0.0
    %2796 = vmatprep.subr.mxu0 0.0
    %2797 = vmatpush1.msra.mxu0 0.0
    %2798 = vmatprep.subr.mxu0 0.0
    %2799 = vmatpush1.msra.mxu0 0.0
    %2800 = vmatprep.subr.mxu0 0.0
    %2801 = vmatpush1.msra.mxu0 0.0
    %2802 = vmatprep.subr.mxu0 0.0
    %2803 = vmatpush1.msra.mxu0 0.0
    %2804 = vmatprep.subr.mxu0 0.0
    %2805 = vmatpush1.msra.mxu0 0.0
    %2806 = vmatprep.subr.mxu0 0.0
    %2807 = vmatpush1.msra.mxu0 0.0
    %2808 = vmatprep.subr.mxu0 0.0
    %2809 = vmatpush1.msra.mxu0 0.0
    %2810 = vmatprep.subr.mxu0 0.0
    %2811 = vmatpush1.msra.mxu0 0.0
    %2812 = vmatprep.subr.mxu0 0.0
    %2813 = vmatpush1.msra.mxu0 0.0
    %2814 = vmatprep.subr.mxu0 0.0
    %2815 = vmatpush1.msra.mxu0 0.0
    %2816 = vmatprep.subr.mxu0 0.0
    %2817 = vmatpush1.msra.mxu0 0.0
    %2818 = vmatprep.subr.mxu0 0.0
    %2819 = vmatpush1.msra.mxu0 0.0
    %2820 = vmatprep.subr.mxu0 0.0
    %2821 = vmatpush1.msra.mxu0 0.0
    %2822 = vmatprep.subr.mxu0 0.0
    %2823 = vmatpush1.msra.mxu0 0.0
    %2824 = vmatprep.subr.mxu0 0.0
    %2825 = vmatpush1.msra.mxu0 0.0
    %2826 = vmatprep.subr.mxu0 0.0
    %2827 = vmatpush1.msra.mxu0 0.0
    %2828 = vmatprep.mubr.f32.mxu0 0.0
    %2829 = vmatmul.mubr.f32.gmra.mrb[0].mxu0 %v2762
    %v2830 = vpop.f32.mrb[0].mxu0
    %v2831 = vadd.f32 0.0, %v2830
    %v2832 = vpop.f32.mrb[0].mxu0
    %2833 = vdwg.mxu0
    %v2834 = vadd.f32 %v2618, %v2831
    %v2835 = vmul.f32 %v2834, 0.5
    %v2836 = vsel %vm2659, %v2834, %v2835
    %v2837 = vtanh.pop %v2836
    %v2838 = vmul.f32 %v2837, 0.5
    %v2839 = vadd.f32 %v2838, 0.5
    %v2840 = vsel %vm2659, %v2837, %v2839
    %v2841 = vmul.f32 %v2840, %v2750
    %2843 = vrot.lane.b32.xlu0 %v2840, 64
    %v2844 = vpop.permute.xlu0 %2843
    %v2846 = vmul.f32 %v2840, %v2844
    %2848 = vrot.lane.b32.xlu0 %v2846, 32
    %v2849 = vpop.permute.xlu0 %2848
    %v2851 = vadd.f32 %v2841, %v2849
    %v2852 = vtanh.pop %v2851
    %2854 = vrot.lane.b32.xlu0 %v2852, 64
    %v2855 = vpop.permute.xlu0 %2854
    %v2857 = vmul.f32 %v2840, %v2855
    %v2858 = vmax.f32 %v2857, 0.0
    %v2859 = vmin.f32 %v2858, 6.0
    %2861 = vrot.lane.b32.xlu0 %v2857, 32
    %v2862 = vpop.permute.xlu0 %2861
    %v2863 = vsel %vm2521, %v2862, 0
    %2865 = vmatprep.subr.mxu0 0.0
    %2866 = vmatpush1.msra.mxu0 %v2651
    %2867 = vmatprep.subr.mxu0 0.0
    %2868 = vmatpush1.msra.mxu0 %v2652
    %2869 = vmatprep.subr.mxu0 0.0
    %2870 = vmatpush1.msra.mxu0 %v2653
    %2871 = vmatprep.subr.mxu0 0.0
    %2872 = vmatpush1.msra.mxu0 %v2654
    %2873 = vmatprep.subr.mxu0 0.0
    %2874 = vmatpush1.msra.mxu0 0.0
    %2875 = vmatprep.subr.mxu0 0.0
    %2876 = vmatpush1.msra.mxu0 0.0
    %2877 = vmatprep.subr.mxu0 0.0
    %2878 = vmatpush1.msra.mxu0 0.0
    %2879 = vmatprep.subr.mxu0 0.0
    %2880 = vmatpush1.msra.mxu0 0.0
    %2881 = vmatprep.subr.mxu0 0.0
    %2882 = vmatpush1.msra.mxu0 0.0
    %2883 = vmatprep.subr.mxu0 0.0
    %2884 = vmatpush1.msra.mxu0 0.0
    %2885 = vmatprep.subr.mxu0 0.0
    %2886 = vmatpush1.msra.mxu0 0.0
    %2887 = vmatprep.subr.mxu0 0.0
    %2888 = vmatpush1.msra.mxu0 0.0
    %2889 = vmatprep.subr.mxu0 0.0
    %2890 = vmatpush1.msra.mxu0 0.0
    %2891 = vmatprep.subr.mxu0 0.0
    %2892 = vmatpush1.msra.mxu0 0.0
    %2893 = vmatprep.subr.mxu0 0.0
    %2894 = vmatpush1.msra.mxu0 0.0
    %2895 = vmatprep.subr.mxu0 0.0
    %2896 = vmatpush1.msra.mxu0 0.0
    %2897 = vmatprep.subr.mxu0 0.0
    %2898 = vmatpush1.msra.mxu0 0.0
    %2899 = vmatprep.subr.mxu0 0.0
    %2900 = vmatpush1.msra.mxu0 0.0
    %2901 = vmatprep.subr.mxu0 0.0
    %2902 = vmatpush1.msra.mxu0 0.0
    %2903 = vmatprep.subr.mxu0 0.0
    %2904 = vmatpush1.msra.mxu0 0.0
    %2905 = vmatprep.subr.mxu0 0.0
    %2906 = vmatpush1.msra.mxu0 0.0
    %2907 = vmatprep.subr.mxu0 0.0
    %2908 = vmatpush1.msra.mxu0 0.0
    %2909 = vmatprep.subr.mxu0 0.0
    %2910 = vmatpush1.msra.mxu0 0.0
    %2911 = vmatprep.subr.mxu0 0.0
    %2912 = vmatpush1.msra.mxu0 0.0
    %2913 = vmatprep.subr.mxu0 0.0
    %2914 = vmatpush1.msra.mxu0 0.0
    %2915 = vmatprep.subr.mxu0 0.0
    %2916 = vmatpush1.msra.mxu0 0.0
    %2917 = vmatprep.subr.mxu0 0.0
    %2918 = vmatpush1.msra.mxu0 0.0
    %2919 = vmatprep.subr.mxu0 0.0
    %2920 = vmatpush1.msra.mxu0 0.0
    %2921 = vmatprep.subr.mxu0 0.0
    %2922 = vmatpush1.msra.mxu0 0.0
    %2923 = vmatprep.subr.mxu0 0.0
    %2924 = vmatpush1.msra.mxu0 0.0
    %2925 = vmatprep.subr.mxu0 0.0
    %2926 = vmatpush1.msra.mxu0 0.0
    %2927 = vmatprep.subr.mxu0 0.0
    %2928 = vmatpush1.msra.mxu0 0.0
    %2929 = vmatprep.mubr.f32.mxu0 0.0
    %2930 = vmatmul.mubr.f32.gmra.mrb[0].mxu0 %v2863
    %v2931 = vpop.f32.mrb[0].mxu0
    %v2932 = vadd.f32 0.0, %v2931
    %v2933 = vpop.f32.mrb[0].mxu0
    %2934 = vdwg.mxu0
    %v2935 = vadd.f32 %v2623, %v2932
    %v2936 = vmul.f32 %v2935, 0.5
    %v2937 = vsel %vm2659, %v2935, %v2936
    %v2938 = vtanh.pop %v2937
    %v2939 = vmul.f32 %v2938, 0.5
    %v2940 = vadd.f32 %v2939, 0.5
    %v2941 = vsel %vm2659, %v2938, %v2940
    %v2942 = vmul.f32 %v2941, %v2851
    %2944 = vrot.lane.b32.xlu0 %v2941, 64
    %v2945 = vpop.permute.xlu0 %2944
    %v2947 = vmul.f32 %v2941, %v2945
    %2949 = vrot.lane.b32.xlu0 %v2947, 32
    %v2950 = vpop.permute.xlu0 %2949
    %v2952 = vadd.f32 %v2942, %v2950
    %v2953 = vtanh.pop %v2952
    %2955 = vrot.lane.b32.xlu0 %v2953, 64
    %v2956 = vpop.permute.xlu0 %2955
    %v2958 = vmul.f32 %v2941, %v2956
    %v2959 = vmax.f32 %v2958, 0.0
    %v2960 = vmin.f32 %v2959, 6.0
    %2962 = vrot.lane.b32.xlu0 %v2958, 32
    %v2963 = vpop.permute.xlu0 %2962
    %v2964 = vsel %vm2521, %v2963, 0
    %2966 = vmatprep.subr.mxu0 0.0
    %2967 = vmatpush1.msra.mxu0 %v2651
    %2968 = vmatprep.subr.mxu0 0.0
    %2969 = vmatpush1.msra.mxu0 %v2652
    %2970 = vmatprep.subr.mxu0 0.0
    %2971 = vmatpush1.msra.mxu0 %v2653
    %2972 = vmatprep.subr.mxu0 0.0
    %2973 = vmatpush1.msra.mxu0 %v2654
    %2974 = vmatprep.subr.mxu0 0.0
    %2975 = vmatpush1.msra.mxu0 0.0
    %2976 = vmatprep.subr.mxu0 0.0
    %2977 = vmatpush1.msra.mxu0 0.0
    %2978 = vmatprep.subr.mxu0 0.0
    %2979 = vmatpush1.msra.mxu0 0.0
    %2980 = vmatprep.subr.mxu0 0.0
    %2981 = vmatpush1.msra.mxu0 0.0
    %2982 = vmatprep.subr.mxu0 0.0
    %2983 = vmatpush1.msra.mxu0 0.0
    %2984 = vmatprep.subr.mxu0 0.0
    %2985 = vmatpush1.msra.mxu0 0.0
    %2986 = vmatprep.subr.mxu0 0.0
    %2987 = vmatpush1.msra.mxu0 0.0
    %2988 = vmatprep.subr.mxu0 0.0
    %2989 = vmatpush1.msra.mxu0 0.0
    %2990 = vmatprep.subr.mxu0 0.0
    %2991 = vmatpush1.msra.mxu0 0.0
    %2992 = vmatprep.subr.mxu0 0.0
    %2993 = vmatpush1.msra.mxu0 0.0
    %2994 = vmatprep.subr.mxu0 0.0
    %2995 = vmatpush1.msra.mxu0 0.0
    %2996 = vmatprep.subr.mxu0 0.0
    %2997 = vmatpush1.msra.mxu0 0.0
    %2998 = vmatprep.subr.mxu0 0.0
    %2999 = vmatpush1.msra.mxu0 0.0
    %3000 = vmatprep.subr.mxu0 0.0
    %3001 = vmatpush1.msra.mxu0 0.0
    %3002 = vmatprep.subr.mxu0 0.0
    %3003 = vmatpush1.msra.mxu0 0.0
    %3004 = vmatprep.subr.mxu0 0.0
    %3005 = vmatpush1.msra.mxu0 0.0
    %3006 = vmatprep.subr.mxu0 0.0
    %3007 = vmatpush1.msra.mxu0 0.0
    %3008 = vmatprep.subr.mxu0 0.0
    %3009 = vmatpush1.msra.mxu0 0.0
    %3010 = vmatprep.subr.mxu0 0.0
    %3011 = vmatpush1.msra.mxu0 0.0
    %3012 = vmatprep.subr.mxu0 0.0
    %3013 = vmatpush1.msra.mxu0 0.0
    %3014 = vmatprep.subr.mxu0 0.0
    %3015 = vmatpush1.msra.mxu0 0.0
    %3016 = vmatprep.subr.mxu0 0.0
    %3017 = vmatpush1.msra.mxu0 0.0
    %3018 = vmatprep.subr.mxu0 0.0
    %3019 = vmatpush1.msra.mxu0 0.0
    %3020 = vmatprep.subr.mxu0 0.0
    %3021 = vmatpush1.msra.mxu0 0.0
    %3022 = vmatprep.subr.mxu0 0.0
    %3023 = vmatpush1.msra.mxu0 0.0
    %3024 = vmatprep.subr.mxu0 0.0
    %3025 = vmatpush1.msra.mxu0 0.0
    %3026 = vmatprep.subr.mxu0 0.0
    %3027 = vmatpush1.msra.mxu0 0.0
    %3028 = vmatprep.subr.mxu0 0.0
    %3029 = vmatpush1.msra.mxu0 0.0
    %3030 = vmatprep.mubr.f32.mxu0 0.0
    %3031 = vmatmul.mubr.f32.gmra.mrb[0].mxu0 %v2964
    %v3032 = vpop.f32.mrb[0].mxu0
    %v3033 = vadd.f32 0.0, %v3032
    %v3034 = vpop.f32.mrb[0].mxu0
    %3035 = vdwg.mxu0
    %v3036 = vadd.f32 %v2628, %v3033
    %v3037 = vmul.f32 %v3036, 0.5
    %v3038 = vsel %vm2659, %v3036, %v3037
    %v3039 = vtanh.pop %v3038
    %v3040 = vmul.f32 %v3039, 0.5
    %v3041 = vadd.f32 %v3040, 0.5
    %v3042 = vsel %vm2659, %v3039, %v3041
    %v3043 = vmul.f32 %v3042, %v2952
    %3045 = vrot.lane.b32.xlu0 %v3042, 64
    %v3046 = vpop.permute.xlu0 %3045
    %v3048 = vmul.f32 %v3042, %v3046
    %3050 = vrot.lane.b32.xlu0 %v3048, 32
    %v3051 = vpop.permute.xlu0 %3050
    %v3053 = vadd.f32 %v3043, %v3051
    %v3054 = vtanh.pop %v3053
    %3056 = vrot.lane.b32.xlu0 %v3054, 64
    %v3057 = vpop.permute.xlu0 %3056
    %v3059 = vmul.f32 %v3042, %v3057
    %v3060 = vmax.f32 %v3059, 0.0
    %v3061 = vmin.f32 %v3060, 6.0
    %3063 = vrot.lane.b32.xlu0 %v3059, 32
    %v3064 = vpop.permute.xlu0 %3063
    %v3065 = vsel %vm2521, %v3064, 0
    %3067 = vmatprep.subr.mxu0 0.0
    %3068 = vmatpush1.msra.mxu0 %v2651
    %3069 = vmatprep.subr.mxu0 0.0
    %3070 = vmatpush1.msra.mxu0 %v2652
    %3071 = vmatprep.subr.mxu0 0.0
    %3072 = vmatpush1.msra.mxu0 %v2653
    %3073 = vmatprep.subr.mxu0 0.0
    %3074 = vmatpush1.msra.mxu0 %v2654
    %3075 = vmatprep.subr.mxu0 0.0
    %3076 = vmatpush1.msra.mxu0 0.0
    %3077 = vmatprep.subr.mxu0 0.0
    %3078 = vmatpush1.msra.mxu0 0.0
    %3079 = vmatprep.subr.mxu0 0.0
    %3080 = vmatpush1.msra.mxu0 0.0
    %3081 = vmatprep.subr.mxu0 0.0
    %3082 = vmatpush1.msra.mxu0 0.0
    %3083 = vmatprep.subr.mxu0 0.0
    %3084 = vmatpush1.msra.mxu0 0.0
    %3085 = vmatprep.subr.mxu0 0.0
    %3086 = vmatpush1.msra.mxu0 0.0
    %3087 = vmatprep.subr.mxu0 0.0
    %3088 = vmatpush1.msra.mxu0 0.0
    %3089 = vmatprep.subr.mxu0 0.0
    %3090 = vmatpush1.msra.mxu0 0.0
    %3091 = vmatprep.subr.mxu0 0.0
    %3092 = vmatpush1.msra.mxu0 0.0
    %3093 = vmatprep.subr.mxu0 0.0
    %3094 = vmatpush1.msra.mxu0 0.0
    %3095 = vmatprep.subr.mxu0 0.0
    %3096 = vmatpush1.msra.mxu0 0.0
    %3097 = vmatprep.subr.mxu0 0.0
    %3098 = vmatpush1.msra.mxu0 0.0
    %3099 = vmatprep.subr.mxu0 0.0
    %3100 = vmatpush1.msra.mxu0 0.0
    %3101 = vmatprep.subr.mxu0 0.0
    %3102 = vmatpush1.msra.mxu0 0.0
    %3103 = vmatprep.subr.mxu0 0.0
    %3104 = vmatpush1.msra.mxu0 0.0
    %3105 = vmatprep.subr.mxu0 0.0
    %3106 = vmatpush1.msra.mxu0 0.0
    %3107 = vmatprep.subr.mxu0 0.0
    %3108 = vmatpush1.msra.mxu0 0.0
    %3109 = vmatprep.subr.mxu0 0.0
    %3110 = vmatpush1.msra.mxu0 0.0
    %3111 = vmatprep.subr.mxu0 0.0
    %3112 = vmatpush1.msra.mxu0 0.0
    %3113 = vmatprep.subr.mxu0 0.0
    %3114 = vmatpush1.msra.mxu0 0.0
    %3115 = vmatprep.subr.mxu0 0.0
    %3116 = vmatpush1.msra.mxu0 0.0
    %3117 = vmatprep.subr.mxu0 0.0
    %3118 = vmatpush1.msra.mxu0 0.0
    %3119 = vmatprep.subr.mxu0 0.0
    %3120 = vmatpush1.msra.mxu0 0.0
    %3121 = vmatprep.subr.mxu0 0.0
    %3122 = vmatpush1.msra.mxu0 0.0
    %3123 = vmatprep.subr.mxu0 0.0
    %3124 = vmatpush1.msra.mxu0 0.0
    %3125 = vmatprep.subr.mxu0 0.0
    %3126 = vmatpush1.msra.mxu0 0.0
    %3127 = vmatprep.subr.mxu0 0.0
    %3128 = vmatpush1.msra.mxu0 0.0
    %3129 = vmatprep.subr.mxu0 0.0
    %3130 = vmatpush1.msra.mxu0 0.0
    %3131 = vmatprep.mubr.f32.mxu0 0.0
    %3132 = vmatmul.mubr.f32.gmra.mrb[0].mxu0 %v3065
    %v3133 = vpop.f32.mrb[0].mxu0
    %v3134 = vadd.f32 0.0, %v3133
    %v3135 = vpop.f32.mrb[0].mxu0
    %3136 = vdwg.mxu0
    %v3137 = vadd.f32 %v2633, %v3134
    %v3138 = vmul.f32 %v3137, 0.5
    %v3139 = vsel %vm2659, %v3137, %v3138
    %v3140 = vtanh.pop %v3139
    %v3141 = vmul.f32 %v3140, 0.5
    %v3142 = vadd.f32 %v3141, 0.5
    %v3143 = vsel %vm2659, %v3140, %v3142
    %v3144 = vmul.f32 %v3143, %v3053
    %3146 = vrot.lane.b32.xlu0 %v3143, 64
    %v3147 = vpop.permute.xlu0 %3146
    %v3149 = vmul.f32 %v3143, %v3147
    %3151 = vrot.lane.b32.xlu0 %v3149, 32
    %v3152 = vpop.permute.xlu0 %3151
    %v3154 = vadd.f32 %v3144, %v3152
    %v3155 = vtanh.pop %v3154
    %3157 = vrot.lane.b32.xlu0 %v3155, 64
    %v3158 = vpop.permute.xlu0 %3157
    %v3160 = vmul.f32 %v3143, %v3158
    %v3161 = vmax.f32 %v3160, 0.0
    %v3162 = vmin.f32 %v3161, 6.0
    %3164 = vrot.lane.b32.xlu0 %v3160, 32
    %v3165 = vpop.permute.xlu0 %3164
    %v3166 = vsel %vm2521, %v3165, 0
    %3168 = vmatprep.subr.mxu0 0.0
    %3169 = vmatpush1.msra.mxu0 %v2651
    %3170 = vmatprep.subr.mxu0 0.0
    %3171 = vmatpush1.msra.mxu0 %v2652
    %3172 = vmatprep.subr.mxu0 0.0
    %3173 = vmatpush1.msra.mxu0 %v2653
    %3174 = vmatprep.subr.mxu0 0.0
    %3175 = vmatpush1.msra.mxu0 %v2654
    %3176 = vmatprep.subr.mxu0 0.0
    %3177 = vmatpush1.msra.mxu0 0.0
    %3178 = vmatprep.subr.mxu0 0.0
    %3179 = vmatpush1.msra.mxu0 0.0
    %3180 = vmatprep.subr.mxu0 0.0
    %3181 = vmatpush1.msra.mxu0 0.0
    %3182 = vmatprep.subr.mxu0 0.0
    %3183 = vmatpush1.msra.mxu0 0.0
    %3184 = vmatprep.subr.mxu0 0.0
    %3185 = vmatpush1.msra.mxu0 0.0
    %3186 = vmatprep.subr.mxu0 0.0
    %3187 = vmatpush1.msra.mxu0 0.0
    %3188 = vmatprep.subr.mxu0 0.0
    %3189 = vmatpush1.msra.mxu0 0.0
    %3190 = vmatprep.subr.mxu0 0.0
    %3191 = vmatpush1.msra.mxu0 0.0
    %3192 = vmatprep.subr.mxu0 0.0
    %3193 = vmatpush1.msra.mxu0 0.0
    %3194 = vmatprep.subr.mxu0 0.0
    %3195 = vmatpush1.msra.mxu0 0.0
    %3196 = vmatprep.subr.mxu0 0.0
    %3197 = vmatpush1.msra.mxu0 0.0
    %3198 = vmatprep.subr.mxu0 0.0
    %3199 = vmatpush1.msra.mxu0 0.0
    %3200 = vmatprep.subr.mxu0 0.0
    %3201 = vmatpush1.msra.mxu0 0.0
    %3202 = vmatprep.subr.mxu0 0.0
    %3203 = vmatpush1.msra.mxu0 0.0
    %3204 = vmatprep.subr.mxu0 0.0
    %3205 = vmatpush1.msra.mxu0 0.0
    %3206 = vmatprep.subr.mxu0 0.0
    %3207 = vmatpush1.msra.mxu0 0.0
    %3208 = vmatprep.subr.mxu0 0.0
    %3209 = vmatpush1.msra.mxu0 0.0
    %3210 = vmatprep.subr.mxu0 0.0
    %3211 = vmatpush1.msra.mxu0 0.0
    %3212 = vmatprep.subr.mxu0 0.0
    %3213 = vmatpush1.msra.mxu0 0.0
    %3214 = vmatprep.subr.mxu0 0.0
    %3215 = vmatpush1.msra.mxu0 0.0
    %3216 = vmatprep.subr.mxu0 0.0
    %3217 = vmatpush1.msra.mxu0 0.0
    %3218 = vmatprep.subr.mxu0 0.0
    %3219 = vmatpush1.msra.mxu0 0.0
    %3220 = vmatprep.subr.mxu0 0.0
    %3221 = vmatpush1.msra.mxu0 0.0
    %3222 = vmatprep.subr.mxu0 0.0
    %3223 = vmatpush1.msra.mxu0 0.0
    %3224 = vmatprep.subr.mxu0 0.0
    %3225 = vmatpush1.msra.mxu0 0.0
    %3226 = vmatprep.subr.mxu0 0.0
    %3227 = vmatpush1.msra.mxu0 0.0
    %3228 = vmatprep.subr.mxu0 0.0
    %3229 = vmatpush1.msra.mxu0 0.0
    %3230 = vmatprep.subr.mxu0 0.0
    %3231 = vmatpush1.msra.mxu0 0.0
    %3232 = vmatprep.mubr.f32.mxu0 0.0
    %3233 = vmatmul.mubr.f32.gmra.mrb[0].mxu0 %v3166
    %v3234 = vpop.f32.mrb[0].mxu0
    %v3235 = vadd.f32 0.0, %v3234
    %v3236 = vpop.f32.mrb[0].mxu0
    %3237 = vdwg.mxu0
    %v3238 = vadd.f32 %v2638, %v3235
    %v3239 = vmul.f32 %v3238, 0.5
    %v3240 = vsel %vm2659, %v3238, %v3239
    %v3241 = vtanh.pop %v3240
    %v3242 = vmul.f32 %v3241, 0.5
    %v3243 = vadd.f32 %v3242, 0.5
    %v3244 = vsel %vm2659, %v3241, %v3243
    %v3245 = vmul.f32 %v3244, %v3154
    %3247 = vrot.lane.b32.xlu0 %v3244, 64
    %v3248 = vpop.permute.xlu0 %3247
    %v3250 = vmul.f32 %v3244, %v3248
    %3252 = vrot.lane.b32.xlu0 %v3250, 32
    %v3253 = vpop.permute.xlu0 %3252
    %v3255 = vadd.f32 %v3245, %v3253
    %v3256 = vtanh.pop %v3255
    %3258 = vrot.lane.b32.xlu0 %v3256, 64
    %v3259 = vpop.permute.xlu0 %3258
    %v3261 = vmul.f32 %v3244, %v3259
    %v3262 = vmax.f32 %v3261, 0.0
    %v3263 = vmin.f32 %v3262, 6.0
    %3265 = vrot.lane.b32.xlu0 %v3261, 32
    %v3266 = vpop.permute.xlu0 %3265
    %v3267 = vsel %vm2521, %v3266, 0
    %3269 = vmatprep.subr.mxu0 0.0
    %3270 = vmatpush1.msra.mxu0 %v2651
    %3271 = vmatprep.subr.mxu0 0.0
    %3272 = vmatpush1.msra.mxu0 %v2652
    %3273 = vmatprep.subr.mxu0 0.0
    %3274 = vmatpush1.msra.mxu0 %v2653
    %3275 = vmatprep.subr.mxu0 0.0
    %3276 = vmatpush1.msra.mxu0 %v2654
    %3277 = vmatprep.subr.mxu0 0.0
    %3278 = vmatpush1.msra.mxu0 0.0
    %3279 = vmatprep.subr.mxu0 0.0
    %3280 = vmatpush1.msra.mxu0 0.0
    %3281 = vmatprep.subr.mxu0 0.0
    %3282 = vmatpush1.msra.mxu0 0.0
    %3283 = vmatprep.subr.mxu0 0.0
    %3284 = vmatpush1.msra.mxu0 0.0
    %3285 = vmatprep.subr.mxu0 0.0
    %3286 = vmatpush1.msra.mxu0 0.0
    %3287 = vmatprep.subr.mxu0 0.0
    %3288 = vmatpush1.msra.mxu0 0.0
    %3289 = vmatprep.subr.mxu0 0.0
    %3290 = vmatpush1.msra.mxu0 0.0
    %3291 = vmatprep.subr.mxu0 0.0
    %3292 = vmatpush1.msra.mxu0 0.0
    %3293 = vmatprep.subr.mxu0 0.0
    %3294 = vmatpush1.msra.mxu0 0.0
    %3295 = vmatprep.subr.mxu0 0.0
    %3296 = vmatpush1.msra.mxu0 0.0
    %3297 = vmatprep.subr.mxu0 0.0
    %3298 = vmatpush1.msra.mxu0 0.0
    %3299 = vmatprep.subr.mxu0 0.0
    %3300 = vmatpush1.msra.mxu0 0.0
    %3301 = vmatprep.subr.mxu0 0.0
    %3302 = vmatpush1.msra.mxu0 0.0
    %3303 = vmatprep.subr.mxu0 0.0
    %3304 = vmatpush1.msra.mxu0 0.0
    %3305 = vmatprep.subr.mxu0 0.0
    %3306 = vmatpush1.msra.mxu0 0.0
    %3307 = vmatprep.subr.mxu0 0.0
    %3308 = vmatpush1.msra.mxu0 0.0
    %3309 = vmatprep.subr.mxu0 0.0
    %3310 = vmatpush1.msra.mxu0 0.0
    %3311 = vmatprep.subr.mxu0 0.0
    %3312 = vmatpush1.msra.mxu0 0.0
    %3313 = vmatprep.subr.mxu0 0.0
    %3314 = vmatpush1.msra.mxu0 0.0
    %3315 = vmatprep.subr.mxu0 0.0
    %3316 = vmatpush1.msra.mxu0 0.0
    %3317 = vmatprep.subr.mxu0 0.0
    %3318 = vmatpush1.msra.mxu0 0.0
    %3319 = vmatprep.subr.mxu0 0.0
    %3320 = vmatpush1.msra.mxu0 0.0
    %3321 = vmatprep.subr.mxu0 0.0
    %3322 = vmatpush1.msra.mxu0 0.0
    %3323 = vmatprep.subr.mxu0 0.0
    %3324 = vmatpush1.msra.mxu0 0.0
    %3325 = vmatprep.subr.mxu0 0.0
    %3326 = vmatpush1.msra.mxu0 0.0
    %3327 = vmatprep.subr.mxu0 0.0
    %3328 = vmatpush1.msra.mxu0 0.0
    %3329 = vmatprep.subr.mxu0 0.0
    %3330 = vmatpush1.msra.mxu0 0.0
    %3331 = vmatprep.subr.mxu0 0.0
    %3332 = vmatpush1.msra.mxu0 0.0
    %3333 = vmatprep.mubr.f32.mxu0 0.0
    %3334 = vmatmul.mubr.f32.gmra.mrb[0].mxu0 %v3267
    %v3335 = vpop.f32.mrb[0].mxu0
    %v3336 = vadd.f32 0.0, %v3335
    %v3337 = vpop.f32.mrb[0].mxu0
    %3338 = vdwg.mxu0
    %v3339 = vadd.f32 %v2643, %v3336
    %v3340 = vmul.f32 %v3339, 0.5
    %v3341 = vsel %vm2659, %v3339, %v3340
    %v3342 = vtanh.pop %v3341
    %v3343 = vmul.f32 %v3342, 0.5
    %v3344 = vadd.f32 %v3343, 0.5
    %v3345 = vsel %vm2659, %v3342, %v3344
    %v3346 = vmul.f32 %v3345, %v3255
    %3348 = vrot.lane.b32.xlu0 %v3345, 64
    %v3349 = vpop.permute.xlu0 %3348
    %v3351 = vmul.f32 %v3345, %v3349
    %3353 = vrot.lane.b32.xlu0 %v3351, 32
    %v3354 = vpop.permute.xlu0 %3353
    %v3356 = vadd.f32 %v3346, %v3354
    %v3357 = vtanh.pop %v3356
    %3359 = vrot.lane.b32.xlu0 %v3357, 64
    %v3360 = vpop.permute.xlu0 %3359
    %v3362 = vmul.f32 %v3345, %v3360
    %v3363 = vmax.f32 %v3362, 0.0
    %v3364 = vmin.f32 %v3363, 6.0
    %3366 = vrot.lane.b32.xlu0 %v3362, 32
    %v3367 = vpop.permute.xlu0 %3366
    %v3368 = vsel %vm2521, %v3367, 0
    %3370 = vmatprep.subr.mxu0 0.0
    %3371 = vmatpush1.msra.mxu0 %v2651
    %3372 = vmatprep.subr.mxu0 0.0
    %3373 = vmatpush1.msra.mxu0 %v2652
    %3374 = vmatprep.subr.mxu0 0.0
    %3375 = vmatpush1.msra.mxu0 %v2653
    %3376 = vmatprep.subr.mxu0 0.0
    %3377 = vmatpush1.msra.mxu0 %v2654
    %3378 = vmatprep.subr.mxu0 0.0
    %3379 = vmatpush1.msra.mxu0 0.0
    %3380 = vmatprep.subr.mxu0 0.0
    %3381 = vmatpush1.msra.mxu0 0.0
    %3382 = vmatprep.subr.mxu0 0.0
    %3383 = vmatpush1.msra.mxu0 0.0
    %3384 = vmatprep.subr.mxu0 0.0
    %3385 = vmatpush1.msra.mxu0 0.0
    %3386 = vmatprep.subr.mxu0 0.0
    %3387 = vmatpush1.msra.mxu0 0.0
    %3388 = vmatprep.subr.mxu0 0.0
    %3389 = vmatpush1.msra.mxu0 0.0
    %3390 = vmatprep.subr.mxu0 0.0
    %3391 = vmatpush1.msra.mxu0 0.0
    %3392 = vmatprep.subr.mxu0 0.0
    %3393 = vmatpush1.msra.mxu0 0.0
    %3394 = vmatprep.subr.mxu0 0.0
    %3395 = vmatpush1.msra.mxu0 0.0
    %3396 = vmatprep.subr.mxu0 0.0
    %3397 = vmatpush1.msra.mxu0 0.0
    %3398 = vmatprep.subr.mxu0 0.0
    %3399 = vmatpush1.msra.mxu0 0.0
    %3400 = vmatprep.subr.mxu0 0.0
    %3401 = vmatpush1.msra.mxu0 0.0
    %3402 = vmatprep.subr.mxu0 0.0
    %3403 = vmatpush1.msra.mxu0 0.0
    %3404 = vmatprep.subr.mxu0 0.0
    %3405 = vmatpush1.msra.mxu0 0.0
    %3406 = vmatprep.subr.mxu0 0.0
    %3407 = vmatpush1.msra.mxu0 0.0
    %3408 = vmatprep.subr.mxu0 0.0
    %3409 = vmatpush1.msra.mxu0 0.0
    %3410 = vmatprep.subr.mxu0 0.0
    %3411 = vmatpush1.msra.mxu0 0.0
    %3412 = vmatprep.subr.mxu0 0.0
    %3413 = vmatpush1.msra.mxu0 0.0
    %3414 = vmatprep.subr.mxu0 0.0
    %3415 = vmatpush1.msra.mxu0 0.0
    %3416 = vmatprep.subr.mxu0 0.0
    %3417 = vmatpush1.msra.mxu0 0.0
    %3418 = vmatprep.subr.mxu0 0.0
    %3419 = vmatpush1.msra.mxu0 0.0
    %3420 = vmatprep.subr.mxu0 0.0
    %3421 = vmatpush1.msra.mxu0 0.0
    %3422 = vmatprep.subr.mxu0 0.0
    %3423 = vmatpush1.msra.mxu0 0.0
    %3424 = vmatprep.subr.mxu0 0.0
    %3425 = vmatpush1.msra.mxu0 0.0
    %3426 = vmatprep.subr.mxu0 0.0
    %3427 = vmatpush1.msra.mxu0 0.0
    %3428 = vmatprep.subr.mxu0 0.0
    %3429 = vmatpush1.msra.mxu0 0.0
    %3430 = vmatprep.subr.mxu0 0.0
    %3431 = vmatpush1.msra.mxu0 0.0
    %3432 = vmatprep.subr.mxu0 0.0
    %3433 = vmatpush1.msra.mxu0 0.0
    %3434 = vmatprep.mubr.f32.mxu0 0.0
    %3435 = vmatmul.mubr.f32.gmra.mrb[0].mxu0 %v3368
    %v3436 = vpop.f32.mrb[0].mxu0
    %v3437 = vadd.f32 0.0, %v3436
    %v3438 = vpop.f32.mrb[0].mxu0
    %3439 = vdwg.mxu0
    %v3440 = vadd.f32 %v2648, %v3437
    %v3441 = vmul.f32 %v3440, 0.5
    %v3442 = vsel %vm2659, %v3440, %v3441
    %v3443 = vtanh.pop %v3442
    %v3444 = vmul.f32 %v3443, 0.5
    %v3445 = vadd.f32 %v3444, 0.5
    %v3446 = vsel %vm2659, %v3443, %v3445
    %v3447 = vmul.f32 %v3446, %v3356
    %3449 = vrot.lane.b32.xlu0 %v3446, 64
    %v3450 = vpop.permute.xlu0 %3449
    %v3452 = vmul.f32 %v3446, %v3450
    %3454 = vrot.lane.b32.xlu0 %v3452, 32
    %v3455 = vpop.permute.xlu0 %3454
    %v3457 = vadd.f32 %v3447, %v3455
    %v3458 = vtanh.pop %v3457
    %3460 = vrot.lane.b32.xlu0 %v3458, 64
    %v3461 = vpop.permute.xlu0 %3460
    %v3463 = vmul.f32 %v3446, %v3461
    %v3464 = vmax.f32 %v3463, 0.0
    %v3465 = vmin.f32 %v3464, 6.0
    %v3466 = vld [vmem:[#allocation16] sm:$0xff]
    %v3467 = vld [vmem:[#allocation16 + $0x8] sm:$0xff]
    %v3468 = vld [vmem:[#allocation16 + $0x10] sm:$0xff]
    %v3469 = vld [vmem:[#allocation16 + $0x18] sm:$0xff]
    %v3470 = vld [vmem:[#allocation17] sm:$0x1]
    %v3472 = vlaneseq
    %v3473 = vshrl.u32 %v3472, 7
    %v3474 = vsub.s32 0, %v3473
    %v3475 = vrot.slane %v3470, %v3474
    %3485 = vrot.lane.b32.xlu0 %v2758, 32
    %v3486 = vpop.permute.xlu0 %3485
    %3487 = vrot.lane.b32.xlu0 %v2859, 32
    %v3488 = vpop.permute.xlu0 %3487
    %3489 = vrot.lane.b32.xlu0 %v2960, 32
    %v3490 = vpop.permute.xlu0 %3489
    %3491 = vrot.lane.b32.xlu0 %v3061, 32
    %v3492 = vpop.permute.xlu0 %3491
    %3493 = vrot.lane.b32.xlu0 %v3162, 32
    %v3494 = vpop.permute.xlu0 %3493
    %3495 = vrot.lane.b32.xlu0 %v3263, 32
    %v3496 = vpop.permute.xlu0 %3495
    %3497 = vrot.lane.b32.xlu0 %v3364, 32
    %v3498 = vpop.permute.xlu0 %3497
    %3499 = vrot.lane.b32.xlu0 %v3465, 32
    %v3500 = vpop.permute.xlu0 %3499
    %v3501 = vsel %vm2521, %v3486, 0
    %v3503 = vsel %vm2521, %v3488, 0
    %v3505 = vsel %vm2521, %v3490, 0
    %v3507 = vsel %vm2521, %v3492, 0
    %v3509 = vsel %vm2521, %v3494, 0
    %v3511 = vsel %vm2521, %v3496, 0
    %v3513 = vsel %vm2521, %v3498, 0
    %v3515 = vsel %vm2521, %v3500, 0
    %3517 = vmatprep.subr.mxu0 0.0
    %3518 = vmatpush1.msra.mxu0 %v3466
    %3519 = vmatprep.subr.mxu0 0.0
    %3520 = vmatpush1.msra.mxu0 %v3467
    %3521 = vmatprep.subr.mxu0 0.0
    %3522 = vmatpush1.msra.mxu0 %v3468
    %3523 = vmatprep.subr.mxu0 0.0
    %3524 = vmatpush1.msra.mxu0 %v3469
    %3525 = vmatprep.subr.mxu0 0.0
    %3526 = vmatpush1.msra.mxu0 0.0
    %3527 = vmatprep.subr.mxu0 0.0
    %3528 = vmatpush1.msra.mxu0 0.0
    %3529 = vmatprep.subr.mxu0 0.0
    %3530 = vmatpush1.msra.mxu0 0.0
    %3531 = vmatprep.subr.mxu0 0.0
    %3532 = vmatpush1.msra.mxu0 0.0
    %3533 = vmatprep.subr.mxu0 0.0
    %3534 = vmatpush1.msra.mxu0 0.0
    %3535 = vmatprep.subr.mxu0 0.0
    %3536 = vmatpush1.msra.mxu0 0.0
    %3537 = vmatprep.subr.mxu0 0.0
    %3538 = vmatpush1.msra.mxu0 0.0
    %3539 = vmatprep.subr.mxu0 0.0
    %3540 = vmatpush1.msra.mxu0 0.0
    %3541 = vmatprep.subr.mxu0 0.0
    %3542 = vmatpush1.msra.mxu0 0.0
    %3543 = vmatprep.subr.mxu0 0.0
    %3544 = vmatpush1.msra.mxu0 0.0
    %3545 = vmatprep.subr.mxu0 0.0
    %3546 = vmatpush1.msra.mxu0 0.0
    %3547 = vmatprep.subr.mxu0 0.0
    %3548 = vmatpush1.msra.mxu0 0.0
    %3549 = vmatprep.subr.mxu0 0.0
    %3550 = vmatpush1.msra.mxu0 0.0
    %3551 = vmatprep.subr.mxu0 0.0
    %3552 = vmatpush1.msra.mxu0 0.0
    %3553 = vmatprep.subr.mxu0 0.0
    %3554 = vmatpush1.msra.mxu0 0.0
    %3555 = vmatprep.subr.mxu0 0.0
    %3556 = vmatpush1.msra.mxu0 0.0
    %3557 = vmatprep.subr.mxu0 0.0
    %3558 = vmatpush1.msra.mxu0 0.0
    %3559 = vmatprep.subr.mxu0 0.0
    %3560 = vmatpush1.msra.mxu0 0.0
    %3561 = vmatprep.subr.mxu0 0.0
    %3562 = vmatpush1.msra.mxu0 0.0
    %3563 = vmatprep.subr.mxu0 0.0
    %3564 = vmatpush1.msra.mxu0 0.0
    %3565 = vmatprep.subr.mxu0 0.0
    %3566 = vmatpush1.msra.mxu0 0.0
    %3567 = vmatprep.subr.mxu0 0.0
    %3568 = vmatpush1.msra.mxu0 0.0
    %3569 = vmatprep.subr.mxu0 0.0
    %3570 = vmatpush1.msra.mxu0 0.0
    %3571 = vmatprep.subr.mxu0 0.0
    %3572 = vmatpush1.msra.mxu0 0.0
    %3573 = vmatprep.subr.mxu0 0.0
    %3574 = vmatpush1.msra.mxu0 0.0
    %3575 = vmatprep.subr.mxu0 0.0
    %3576 = vmatpush1.msra.mxu0 0.0
    %3577 = vmatprep.subr.mxu0 0.0
    %3578 = vmatpush1.msra.mxu0 0.0
    %3579 = vmatprep.subr.mxu0 0.0
    %3580 = vmatpush1.msra.mxu0 0.0
    %3581 = vmatprep.mubr.f32.mxu0 0.0
    %3582 = vmatmul.mubr.f32.gmra.mrb[0].mxu0 %v3501
    %v3583 = vpop.f32.mrb[0].mxu0
    %v3584 = vadd.f32 %v3475, %v3583
    %v3585 = vpop.f32.mrb[0].mxu0
    %3586 = vmatprep.mubr.f32.mxu0 0.0
    %3587 = vmatmul.mubr.f32.gmra.mrb[0].mxu0 %v3503
    %v3588 = vpop.f32.mrb[0].mxu0
    %v3589 = vadd.f32 %v3475, %v3588
    %v3590 = vpop.f32.mrb[0].mxu0
    %3591 = vmatprep.mubr.f32.mxu0 0.0
    %3592 = vmatmul.mubr.f32.gmra.mrb[0].mxu0 %v3505
    %v3593 = vpop.f32.mrb[0].mxu0
    %v3594 = vadd.f32 %v3475, %v3593
    %v3595 = vpop.f32.mrb[0].mxu0
    %3596 = vmatprep.mubr.f32.mxu0 0.0
    %3597 = vmatmul.mubr.f32.gmra.mrb[0].mxu0 %v3507
    %v3598 = vpop.f32.mrb[0].mxu0
    %v3599 = vadd.f32 %v3475, %v3598
    %v3600 = vpop.f32.mrb[0].mxu0
    %3601 = vmatprep.mubr.f32.mxu0 0.0
    %3602 = vmatmul.mubr.f32.gmra.mrb[0].mxu0 %v3509
    %v3603 = vpop.f32.mrb[0].mxu0
    %v3604 = vadd.f32 %v3475, %v3603
    %v3605 = vpop.f32.mrb[0].mxu0
    %3606 = vmatprep.mubr.f32.mxu0 0.0
    %3607 = vmatmul.mubr.f32.gmra.mrb[0].mxu0 %v3511
    %v3608 = vpop.f32.mrb[0].mxu0
    %v3609 = vadd.f32 %v3475, %v3608
    %v3610 = vpop.f32.mrb[0].mxu0
    %3611 = vmatprep.mubr.f32.mxu0 0.0
    %3612 = vmatmul.mubr.f32.gmra.mrb[0].mxu0 %v3513
    %v3613 = vpop.f32.mrb[0].mxu0
    %v3614 = vadd.f32 %v3475, %v3613
    %v3615 = vpop.f32.mrb[0].mxu0
    %3616 = vmatprep.mubr.f32.mxu0 0.0
    %3617 = vmatmul.mubr.f32.gmra.mrb[0].mxu0 %v3515
    %v3618 = vpop.f32.mrb[0].mxu0
    %v3619 = vadd.f32 %v3475, %v3618
    %v3620 = vpop.f32.mrb[0].mxu0
    %3621 = vdwg.mxu0
    %vm3622 = vcmp.gt.f32.partialorder %v3584, 0.0
    %vm3623 = vcmp.gt.f32.partialorder %v3589, 0.0
    %vm3624 = vcmp.gt.f32.partialorder %v3594, 0.0
    %vm3625 = vcmp.gt.f32.partialorder %v3599, 0.0
    %vm3626 = vcmp.gt.f32.partialorder %v3604, 0.0
    %vm3627 = vcmp.gt.f32.partialorder %v3609, 0.0
    %vm3628 = vcmp.gt.f32.partialorder %v3614, 0.0
    %vm3629 = vcmp.gt.f32.partialorder %v3619, 0.0
    %v3630 = vmin.f32 %v3584, 0.0
    %v3631 = vmin.f32 %v3589, 0.0
    %v3632 = vmin.f32 %v3594, 0.0
    %v3633 = vmin.f32 %v3599, 0.0
    %v3634 = vmin.f32 %v3604, 0.0
    %v3635 = vmin.f32 %v3609, 0.0
    %v3636 = vmin.f32 %v3614, 0.0
    %v3637 = vmin.f32 %v3619, 0.0
    %v3638 = vmul.f32 %v3630, 1.442695
    %v3639 = vpow.pop %v3638
    %v3640 = vmul.f32 %v3631, 1.442695
    %v3641 = vpow.pop %v3640
    %v3642 = vmul.f32 %v3632, 1.442695
    %v3643 = vpow.pop %v3642
    %v3644 = vmul.f32 %v3633, 1.442695
    %v3645 = vpow.pop %v3644
    %v3646 = vmul.f32 %v3634, 1.442695
    %v3647 = vpow.pop %v3646
    %v3648 = vmul.f32 %v3635, 1.442695
    %v3649 = vpow.pop %v3648
    %v3650 = vmul.f32 %v3636, 1.442695
    %v3651 = vpow.pop %v3650
    %v3652 = vmul.f32 %v3637, 1.442695
    %v3653 = vpow.pop %v3652
    %v3654 = vsub.f32 %v3639, 1.0
    %v3655 = vsub.f32 %v3641, 1.0
    %v3656 = vsub.f32 %v3643, 1.0
    %v3657 = vsub.f32 %v3645, 1.0
    %v3658 = vsub.f32 %v3647, 1.0
    %v3659 = vsub.f32 %v3649, 1.0
    %v3660 = vsub.f32 %v3651, 1.0
    %v3661 = vsub.f32 %v3653, 1.0
    %v3662 = vmul.f32 %v3654, 1.6732632
    %v3663 = vmul.f32 %v3655, 1.6732632
    %v3664 = vmul.f32 %v3656, 1.6732632
    %v3665 = vmul.f32 %v3657, 1.6732632
    %v3666 = vmul.f32 %v3658, 1.6732632
    %v3667 = vmul.f32 %v3659, 1.6732632
    %v3668 = vmul.f32 %v3660, 1.6732632
    %v3669 = vmul.f32 %v3661, 1.6732632
    %v3670 = vsel %vm3622, %v3584, %v3662
    %v3671 = vsel %vm3623, %v3589, %v3663
    %v3672 = vsel %vm3624, %v3594, %v3664
    %v3673 = vsel %vm3625, %v3599, %v3665
    %v3674 = vsel %vm3626, %v3604, %v3666
    %v3675 = vsel %vm3627, %v3609, %v3667
    %v3676 = vsel %vm3628, %v3614, %v3668
    %v3677 = vsel %vm3629, %v3619, %v3669
    %v3678 = vmul.f32 %v3670, 1.050701
    %v3679 = vmul.f32 %v3671, 1.050701
    %v3680 = vmul.f32 %v3672, 1.050701
    %v3681 = vmul.f32 %v3673, 1.050701
    %v3682 = vmul.f32 %v3674, 1.050701
    %v3683 = vmul.f32 %v3675, 1.050701
    %v3684 = vmul.f32 %v3676, 1.050701
    %v3685 = vmul.f32 %v3677, 1.050701
    %v3686 = vld [vmem:[#allocation19] sm:$0x1]
    %v3688 = vlaneseq
    %v3689 = vshrl.u32 %v3688, 7
    %v3690 = vsub.s32 0, %v3689
    %v3691 = vrot.slane %v3686, %v3690
    %v3693 = vadd.f32 %v3678, %v3691
    %v3694 = vadd.f32 %v3679, %v3691
    %v3695 = vadd.f32 %v3680, %v3691
    %v3696 = vadd.f32 %v3681, %v3691
    %v3697 = vadd.f32 %v3682, %v3691
    %v3698 = vadd.f32 %v3683, %v3691
    %v3699 = vadd.f32 %v3684, %v3691
    %v3700 = vadd.f32 %v3685, %v3691
    %vm3701 = vcmp.lt.s32.totalorder %v2656, 8
    %v3702 = vsel %vm3701, %v3693, %v3584
    %v3703 = vsel %vm3701, %v3694, %v3589
    %v3704 = vsel %vm3701, %v3695, %v3594
    %v3705 = vsel %vm3701, %v3696, %v3599
    %v3706 = vsel %vm3701, %v3697, %v3604
    %v3707 = vsel %vm3701, %v3698, %v3609
    %v3708 = vsel %vm3701, %v3699, %v3614
    %v3709 = vsel %vm3701, %v3700, %v3619
    %3710 = vst [vmem:[#allocation20] sm:$0xff] %v3702
    %3711 = vst [vmem:[#allocation20 + $0x8] sm:$0xff] %v3703
    %3712 = vst [vmem:[#allocation20 + $0x10] sm:$0xff] %v3704
    %3713 = vst [vmem:[#allocation20 + $0x18] sm:$0xff] %v3705
    %3714 = vst [vmem:[#allocation20 + $0x20] sm:$0xff] %v3706
    %3715 = vst [vmem:[#allocation20 + $0x28] sm:$0xff] %v3707
    %3716 = vst [vmem:[#allocation20 + $0x30] sm:$0xff] %v3708
    %3717 = vst [vmem:[#allocation20 + $0x38] sm:$0xff] %v3709
    // Predicated region
    $region94: #{tpu_custom_call.1} parent=1 // pred_check
      _
    $region95: #{tpu_custom_call.1} parent=1 // pred_check_branch
      %3719 = sbr.rel (0) target = $region97
    $region96: #{tpu_custom_call.1} parent=1 // pred_region
      %s3721 = ssub.s32 1024, 1024
      %3722 = vsyncadd [#allocation4], %s3721
      %s3723 = sshll.u32 [#allocation20], 4
      %s3724 = int_to_ptr.vmem [resolvable:$true] %s3723
      %3729 = dma.vmem_to_hbm [thread:$0]  %s3724, 1024, %s12, [#allocation4], 128, 128, 8
    $region97: #{tpu_custom_call.1} parent=1 // pred_fallthru
      _
    // Predicated region
    $region98: #{tpu_custom_call.1} parent=1 // pred_check
      _
    $region99: #{tpu_custom_call.1} parent=1 // pred_check_branch
      %3731 = sbr.rel (0) target = $region101
    $region100: #{tpu_custom_call.1} parent=1 // pred_region
      %3732 = dma.done [#allocation4], 1024
    $region101: #{tpu_custom_call.1} parent=1 // pred_fallthru
      _
    %3733 = vsyncpa [#allocation3], 1
    %3734 = vsyncpa [#allocation6], 1
    %3735 = vsyncpa [#allocation9], 1
    %3736 = vsyncpa [#allocation12], 1
    %3737 = vsyncpa [#allocation15], 1
    %3738 = vsyncpa [#allocation18], 1
    %3739 = vsyncpa [#allocation4], 1

</llo_original>
